<compile_context>
chip_gen: v7x
topology: tpu7x:2x2x1
jax: 0.10.0
libtpu: 0.0.40
codegen_flags: <defaults>
</compile_context>

<pallas_src>
import functools

import jax
import jax.numpy as jnp
from jax import lax
from jax.experimental import pallas as pl
from jax.experimental.pallas import tpu as pltpu


# ----------------------------- small helpers --------------------------------

def _round_up(x: int, m: int) -> int:
    return ((x + m - 1) // m) * m


def _cdiv(a: int, b: int) -> int:
    return (a + b - 1) // b


def _pad_gate_cols(w, H: int, Hp: int):
    """Pad each of the 4 gate blocks along the last axis from H to Hp."""
    lead = w.shape[:-1]
    w4 = w.reshape(lead + (4, H))
    w4 = jnp.pad(w4, [(0, 0)] * len(lead) + [(0, 0), (0, Hp - H)])
    return w4.reshape(lead + (4 * Hp,))


def _compiler_params(buffer_bytes: int, dimension_semantics):
    """Raise the scoped-VMEM limit only when the explicit buffers need it.

    v5e scoped default is 16 MiB (of 128 MiB physical); v6e/v7x default 32 MiB.
    Cap at 64 MiB so we never exceed v7x's physical per-core VMEM.
    """
    need = 2 * buffer_bytes + (4 << 20)          # 2x margin + internal scratch
    if need > (16 << 20):
        return pltpu.CompilerParams(
            dimension_semantics=dimension_semantics,
            vmem_limit_bytes=int(min(max(need, 32 << 20), 64 << 20)))
    return pltpu.CompilerParams(dimension_semantics=dimension_semantics)


# ------------------------------- kernels -------------------------------------

def input_proj_kernel(x_ref, w_ref, b_ref, gx_ref):
    """gates_x = x @ [W_ih_f | W_ih_b] + (b_ih + b_hh); one row chunk per step.

    f32 MXU accumulation, bf16 store (gx is the dominant HBM intermediate).
    """
    acc = jnp.dot(x_ref[...], w_ref[...], preferred_element_type=jnp.float32)
    gx_ref[...] = (acc + b_ref[...]).astype(gx_ref.dtype)


def birnn_recurrence_kernel(gxf_ref, gxb_ref, whhf_ref, whhb_ref, out_ref,
                            hf_ref, cf_ref, hb_ref, cb_ref,
                            *, seq_len, tc, nc):
    """Fused forward+backward LSTM recurrence over one time chunk.

    gxf_ref: (tc, Bb, 4*Hp) bf16 precomputed input gates, forward chunk i.
    gxb_ref: (tc, Bb, 4*Hp) bf16 precomputed input gates, backward chunk
             nc-1-i (reverse time order via its index_map).
    Padded timesteps (global index >= seq_len) are masked (state carried
    through unchanged), NOT fed as zero-gate steps.
    """
    i = pl.program_id(1)                 # time-chunk index (axis 1 of the grid)
    Hp = hf_ref.shape[-1]
    needs_mask = (nc * tc) != seq_len    # static

    @pl.when(i == 0)
    def _init():
        hf_ref[...] = jnp.zeros_like(hf_ref)
        cf_ref[...] = jnp.zeros_like(cf_ref)
        hb_ref[...] = jnp.zeros_like(hb_ref)
        cb_ref[...] = jnp.zeros_like(cb_ref)

    w_f = whhf_ref[...]
    w_b = whhb_ref[...]

    def cell(gates, c):
        # PyTorch gate order [i, f, g, o]; slices are 128-lane aligned.
        i_g = jax.nn.sigmoid(gates[:, 0 * Hp:1 * Hp])
        f_g = jax.nn.sigmoid(gates[:, 1 * Hp:2 * Hp])
        g_g = jnp.tanh(gates[:, 2 * Hp:3 * Hp])
        o_g = jax.nn.sigmoid(gates[:, 3 * Hp:4 * Hp])
        c_new = f_g * c + i_g * g_g
        h_new = o_g * jnp.tanh(c_new)
        return h_new, c_new

    def body(t, carry):
        h_f, c_f, h_b, c_b = carry
        # Two independent recurrent matmuls per iteration (fwd at local t,
        # bwd at local tc-1-t): their MXU/EUP/VPU work overlaps.
        g_f = gxf_ref[t].astype(jnp.float32) + jnp.dot(
            h_f.astype(w_f.dtype), w_f, preferred_element_type=jnp.float32)
        g_b = gxb_ref[tc - 1 - t].astype(jnp.float32) + jnp.dot(
            h_b.astype(w_b.dtype), w_b, preferred_element_type=jnp.float32)
        h_f_new, c_f_new = cell(g_f, c_f)
        h_b_new, c_b_new = cell(g_b, c_b)
        if needs_mask:
            valid_f = (i * tc + t) < seq_len
            valid_b = ((nc - 1 - i) * tc + (tc - 1 - t)) < seq_len
            h_f_new = jnp.where(valid_f, h_f_new, h_f)
            c_f_new = jnp.where(valid_f, c_f_new, c_f)
            h_b_new = jnp.where(valid_b, h_b_new, h_b)
            c_b_new = jnp.where(valid_b, c_b_new, c_b)
        return h_f_new, c_f_new, h_b_new, c_b_new

    h_f, c_f, h_b, c_b = lax.fori_loop(
        0, tc, body,
        (hf_ref[...], cf_ref[...], hb_ref[...], cb_ref[...]),
        unroll=True)

    hf_ref[...] = h_f
    cf_ref[...] = c_f
    hb_ref[...] = h_b
    cb_ref[...] = c_b

    # Only the final chunk's hidden states matter -> single lane-dense store.
    @pl.when(i == nc - 1)
    def _store():
        out_ref[:, :Hp] = h_f
        out_ref[:, Hp:] = h_b


# ------------------------------- wrapper --------------------------------------

@functools.partial(jax.jit, static_argnames=("hidden_dim",))
def bi_rnn_encode(input_w, params, *, hidden_dim):
    """Mirrors BiRNNEncoder.forward (eval mode). Returns (B, hidden_dim) f32."""
    H = hidden_dim // 2
    Hp = _round_up(H, 128)               # lane-aligned hidden width per gate
    B, T = input_w.shape
    Bp = _round_up(B, 8)                 # sublane-aligned batch
    E = params["embedding"].shape[1]

    # ---- weight prep: per-gate lane padding, fwd/bwd fusion, bf16 operands ----
    w_ih = jnp.concatenate(
        [_pad_gate_cols(params["w_ih_f"], H, Hp),
         _pad_gate_cols(params["w_ih_b"], H, Hp)], axis=-1,
    ).astype(jnp.bfloat16)                                    # (E, 8*Hp)
    b = jnp.concatenate(
        [_pad_gate_cols(params["b_f"], H, Hp),
         _pad_gate_cols(params["b_b"], H, Hp)], axis=-1,
    ).astype(jnp.float32)                                     # (1, 8*Hp)

    def pad_hh(w):
        w = jnp.pad(w, ((0, Hp - H), (0, 0)))                 # zero rows -> padded h lanes inert
        return _pad_gate_cols(w, H, Hp).astype(jnp.bfloat16)  # (Hp, 4*Hp)

    w_hh_f = pad_hh(params["w_hh_f"])
    w_hh_b = pad_hh(params["w_hh_b"])

    # ---- tiling: fixed time-chunk + kernel-1 row blocks (no divisor cliffs) ----
    tc = 8                                       # recurrence timesteps per chunk
    rt_target = max(1, 512 // Bp)                # timesteps per proj block (~512 rows)
    if rt_target >= tc:
        k = min(_cdiv(rt_target, tc), max(1, _cdiv(T, tc)))   # cap padding at ~1 block
        rt = tc * k
    else:
        rt = 1 << (rt_target.bit_length() - 1)   # power of two <= rt_target (divides tc)
    Tp = _round_up(T, max(tc, rt))               # padded time (masked in kernel 2)
    nc = Tp // tc

    # ---- embedding lookup: gather first, THEN cast (no full-table bf16 copy) ----
    ids_tm = jnp.pad(jnp.transpose(input_w, (1, 0)), ((0, 0), (0, Bp - B)))  # (T, Bp)
    emb = params["embedding"][ids_tm].astype(jnp.bfloat16)                   # (T, Bp, E)
    # TODO(synk): training-mode dropout not implemented; eval-mode dropout is identity.
    x = jnp.pad(emb, ((0, Tp - T), (0, 0), (0, 0))).reshape(Tp * Bp, E)

    # ---- kernel 1: hoisted input projection (one big MXU matmul, bias folded) ----
    rb = rt * Bp                                 # rows per block (divides Tp*Bp exactly)
    rows = Tp * Bp
    k1_bytes = (2 * rb * E * 2                   # x blocks (bf16, double-buffered)
                + 2 * E * 8 * Hp * 2             # resident weight (bf16, 2 bufs)
                + 2 * 8 * 8 * Hp * 4             # bias (sublane-padded)
                + 2 * rb * 8 * Hp * 2)           # gx out blocks (bf16)
    gx = pl.pallas_call(
        input_proj_kernel,
        out_shape=jax.ShapeDtypeStruct((rows, 8 * Hp), jnp.bfloat16),
        grid_spec=pltpu.PrefetchScalarGridSpec(
            num_scalar_prefetch=0,
            grid=(rows // rb,),
            in_specs=[
                pl.BlockSpec((rb, E), lambda i: (i, 0)),
                pl.BlockSpec((E, 8 * Hp), lambda i: (0, 0)),
                pl.BlockSpec((1, 8 * Hp), lambda i: (0, 0)),
            ],
            out_specs=pl.BlockSpec((rb, 8 * Hp), lambda i: (i, 0)),
        ),
        compiler_params=_compiler_params(k1_bytes, ("parallel",)),
    )(x, w_ih, b)
    gx = gx.reshape(Tp, Bp, 8 * Hp)

    # ---- kernel 2: fused fwd/bwd recurrence over (batch blocks, time chunks) ----
    # Leading 'parallel' batch axis lets v7x's second TensorCore participate.
    nb = 2 if (Bp >= 16 and (Bp // 2) % 8 == 0) else 1
    Bb = Bp // nb

    k2_bytes = (2 * 2 * tc * Bb * 4 * Hp * 2     # fwd+bwd gate blocks, 2 bufs, bf16
                + 2 * 2 * Hp * 4 * Hp * 2        # W_hh fwd+bwd (bf16, 2 bufs)
                + 2 * Bb * 2 * Hp * 4            # output block
                + 4 * Bb * Hp * 4)               # h/c scratch
    kernel2 = functools.partial(birnn_recurrence_kernel, seq_len=T, tc=tc, nc=nc)
    out = pl.pallas_call(
        kernel2,
        out_shape=jax.ShapeDtypeStruct((Bp, 2 * Hp), jnp.float32),
        grid_spec=pltpu.PrefetchScalarGridSpec(
            num_scalar_prefetch=0,
            grid=(nb, nc),
            in_specs=[
                # forward gates: time chunk i, batch block bidx, columns [0, 4*Hp)
                pl.BlockSpec((tc, Bb, 4 * Hp), lambda bidx, i: (i, bidx, 0)),
                # backward gates: time chunk nc-1-i, columns [4*Hp, 8*Hp)
                pl.BlockSpec((tc, Bb, 4 * Hp), lambda bidx, i: (nc - 1 - i, bidx, 1)),
                pl.BlockSpec((Hp, 4 * Hp), lambda bidx, i: (0, 0)),
                pl.BlockSpec((Hp, 4 * Hp), lambda bidx, i: (0, 0)),
            ],
            out_specs=pl.BlockSpec((Bb, 2 * Hp), lambda bidx, i: (bidx, 0)),
            scratch_shapes=[pltpu.VMEM((Bb, Hp), jnp.float32)] * 4,
        ),
        compiler_params=_compiler_params(k2_bytes, ("parallel", "arbitrary")),
    )(gx, gx, w_hh_f, w_hh_b)

    # utterance_representation = cat(h_n_fwd, h_n_bwd); drop batch/lane padding.
    return jnp.concatenate([out[:B, :H], out[:B, Hp:Hp + H]], axis=-1)


# ------------------------------- params ---------------------------------------

def init_params(key, vocab_size, embedding_dim, hidden_dim):
    """Deterministic init matching nn.LSTM(embedding_dim, hidden_dim//2,
    bidirectional=True). Weights stored transposed (in_features, 4H), with the
    two biases folded into one (1, 4H), PyTorch gate order [i, f, g, o]."""
    H = hidden_dim // 2
    keys = jax.random.split(key, 9)
    scale = 0.1

    def rnd(k, shape):
        return jax.random.normal(k, shape, dtype=jnp.float32) * scale

    return {
        "embedding": rnd(keys[0], (vocab_size, embedding_dim)),
        # forward direction
        "w_ih_f": rnd(keys[1], (embedding_dim, 4 * H)),
        "w_hh_f": rnd(keys[2], (H, 4 * H)),
        "b_f": rnd(keys[3], (1, 4 * H)) + rnd(keys[4], (1, 4 * H)),
        # backward direction
        "w_ih_b": rnd(keys[5], (embedding_dim, 4 * H)),
        "w_hh_b": rnd(keys[6], (H, 4 * H)),
        "b_b": rnd(keys[7], (1, 4 * H)) + rnd(keys[8], (1, 4 * H)),
    }


if __name__ == "__main__":
    batch = 2
    seq_len = 8
    vocab_size = 20
    embedding_dim = 16
    hidden_dim = 32          # per-direction hidden size = 16

    key = jax.random.PRNGKey(0)
    k_param, k_tok = jax.random.split(key)

    params = init_params(k_param, vocab_size, embedding_dim, hidden_dim)
    input_w = jax.random.randint(k_tok, (batch, seq_len), 0, vocab_size,
                                 dtype=jnp.int32)

    utterance_repr = bi_rnn_encode(input_w, params, hidden_dim=hidden_dim)
    jax.block_until_ready(utterance_repr)

    assert utterance_repr.shape == (batch, hidden_dim)
    assert utterance_repr.dtype == jnp.float32
    print("KERNEL_OK")
</pallas_src>

<mosaic_0001>
module attributes {stable_mosaic.version = 11 : i64} {
  func.func @input_proj_kernel(%arg0: i32, %arg1: memref<64x16xbf16, #tpu.memory_space<vmem>>, %arg2: memref<16x1024xbf16, #tpu.memory_space<vmem>>, %arg3: memref<1x1024xf32, #tpu.memory_space<vmem>>, %arg4: memref<64x1024xbf16, #tpu.memory_space<vmem>>) attributes {dimension_semantics = [#tpu.dimension_semantics<parallel>], iteration_bounds = array<i64: 1>, scalar_prefetch = 0 : i64, scratch_operands = 0 : i64, tpu.core_type = #tpu.core_type<tc>, window_params = [{transform_indices = @transform_0, window_bounds = array<i64: 64, 16>}, {pipeline_mode = #tpu.pipeline_mode<synchronous>, transform_indices = @transform_1, window_bounds = array<i64: 16, 1024>}, {pipeline_mode = #tpu.pipeline_mode<synchronous>, transform_indices = @transform_2, window_bounds = array<i64: 1, 1024>}, {transform_indices = @transform_3, window_bounds = array<i64: 64, 1024>}]} {
    %c0 = arith.constant 0 : index
    %c0_0 = arith.constant 0 : index
    %0 = vector.load %arg1[%c0, %c0_0] : memref<64x16xbf16, #tpu.memory_space<vmem>>, vector<64x16xbf16>
    %c0_1 = arith.constant 0 : index
    %c0_2 = arith.constant 0 : index
    %1 = vector.load %arg2[%c0_1, %c0_2] : memref<16x1024xbf16, #tpu.memory_space<vmem>>, vector<16x1024xbf16>
    %cst = arith.constant dense<0.000000e+00> : vector<64x1024xf32>
    %2 = tpu.matmul %0, %1, %cst {dimension_numbers = #tpu.dot_dimension_numbers<[1], [0], [0], [1], [0, 0, 1, 1], [], []>} : vector<64x16xbf16>, vector<16x1024xbf16>, vector<64x1024xf32> -> vector<64x1024xf32>
    %c0_3 = arith.constant 0 : index
    %c0_4 = arith.constant 0 : index
    %3 = vector.load %arg3[%c0_3, %c0_4] : memref<1x1024xf32, #tpu.memory_space<vmem>>, vector<1x1024xf32>
    %4 = vector.broadcast %3 : vector<1x1024xf32> to vector<64x1024xf32>
    %5 = arith.addf %2, %4 : vector<64x1024xf32>
    %6 = arith.truncf %5 : vector<64x1024xf32> to vector<64x1024xbf16>
    %c0_5 = arith.constant 0 : index
    %c0_6 = arith.constant 0 : index
    %7 = vector.load %arg4[%c0_5, %c0_6] : memref<64x1024xbf16, #tpu.memory_space<vmem>>, vector<64x1024xbf16>
    tpu.vector_store %arg4[%c0_5, %c0_6], %6 {strides = array<i32>} : memref<64x1024xbf16, #tpu.memory_space<vmem>>, vector<64x1024xbf16>,
    return
  }
  func.func @transform_0(%arg0: i32) -> (i32, i32) {
    %c0_i32 = arith.constant 0 : i32
    %c0_i32_0 = arith.constant 0 : i32
    return %arg0, %c0_i32 : i32, i32
  }
  func.func @transform_1(%arg0: i32) -> (i32, i32) {
    %c0_i32 = arith.constant 0 : i32
    %c0_i32_0 = arith.constant 0 : i32
    %c0_i32_1 = arith.constant 0 : i32
    return %c0_i32, %c0_i32_0 : i32, i32
  }
  func.func @transform_2(%arg0: i32) -> (i32, i32) {
    %c0_i32 = arith.constant 0 : i32
    %c0_i32_0 = arith.constant 0 : i32
    %c0_i32_1 = arith.constant 0 : i32
    return %c0_i32, %c0_i32_0 : i32, i32
  }
  func.func @transform_3(%arg0: i32) -> (i32, i32) {
    %c0_i32 = arith.constant 0 : i32
    %c0_i32_0 = arith.constant 0 : i32
    return %arg0, %c0_i32 : i32, i32
  }
}

module attributes {stable_mosaic.version = 11 : i64} {
  func.func @birnn_recurrence_kernel(%arg0: i32, %arg1: i32, %arg2: memref<8x8x512xbf16, #tpu.memory_space<vmem>>, %arg3: memref<8x8x512xbf16, #tpu.memory_space<vmem>>, %arg4: memref<128x512xbf16, #tpu.memory_space<vmem>>, %arg5: memref<128x512xbf16, #tpu.memory_space<vmem>>, %arg6: memref<8x256xf32, #tpu.memory_space<vmem>>, %arg7: memref<8x128xf32, #tpu.memory_space<vmem>>, %arg8: memref<8x128xf32, #tpu.memory_space<vmem>>, %arg9: memref<8x128xf32, #tpu.memory_space<vmem>>, %arg10: memref<8x128xf32, #tpu.memory_space<vmem>>) attributes {dimension_semantics = [#tpu.dimension_semantics<parallel>, #tpu.dimension_semantics<arbitrary>], iteration_bounds = array<i64: 1, 1>, scalar_prefetch = 0 : i64, scratch_operands = 4 : i64, tpu.core_type = #tpu.core_type<tc>, window_params = [{transform_indices = @transform_0, window_bounds = array<i64: 8, 8, 512>}, {transform_indices = @transform_1, window_bounds = array<i64: 8, 8, 512>}, {pipeline_mode = #tpu.pipeline_mode<synchronous>, transform_indices = @transform_2, window_bounds = array<i64: 128, 512>}, {pipeline_mode = #tpu.pipeline_mode<synchronous>, transform_indices = @transform_3, window_bounds = array<i64: 128, 512>}, {transform_indices = @transform_4, window_bounds = array<i64: 8, 256>}]} {
    %c0_i32 = arith.constant 0 : i32
    %0 = arith.cmpi eq, %arg1, %c0_i32 : i32
    %1 = arith.extui %0 : i1 to i32
    %c0_i32_0 = arith.constant 0 : i32
    %2 = arith.cmpi ne, %1, %c0_i32_0 : i32
    scf.if %2 {
      %cst_126 = arith.constant 0.000000e+00 : f32
      %536 = vector.broadcast %cst_126 : f32 to vector<8x128xf32>
      %c0_127 = arith.constant 0 : index
      %c0_128 = arith.constant 0 : index
      %537 = vector.load %arg7[%c0_127, %c0_128] : memref<8x128xf32, #tpu.memory_space<vmem>>, vector<8x128xf32>
      tpu.vector_store %arg7[%c0_127, %c0_128], %536 {strides = array<i32>} : memref<8x128xf32, #tpu.memory_space<vmem>>, vector<8x128xf32>,
      %cst_129 = arith.constant 0.000000e+00 : f32
      %538 = vector.broadcast %cst_129 : f32 to vector<8x128xf32>
      %c0_130 = arith.constant 0 : index
      %c0_131 = arith.constant 0 : index
      %539 = vector.load %arg8[%c0_130, %c0_131] : memref<8x128xf32, #tpu.memory_space<vmem>>, vector<8x128xf32>
      tpu.vector_store %arg8[%c0_130, %c0_131], %538 {strides = array<i32>} : memref<8x128xf32, #tpu.memory_space<vmem>>, vector<8x128xf32>,
      %cst_132 = arith.constant 0.000000e+00 : f32
      %540 = vector.broadcast %cst_132 : f32 to vector<8x128xf32>
      %c0_133 = arith.constant 0 : index
      %c0_134 = arith.constant 0 : index
      %541 = vector.load %arg9[%c0_133, %c0_134] : memref<8x128xf32, #tpu.memory_space<vmem>>, vector<8x128xf32>
      tpu.vector_store %arg9[%c0_133, %c0_134], %540 {strides = array<i32>} : memref<8x128xf32, #tpu.memory_space<vmem>>, vector<8x128xf32>,
      %cst_135 = arith.constant 0.000000e+00 : f32
      %542 = vector.broadcast %cst_135 : f32 to vector<8x128xf32>
      %c0_136 = arith.constant 0 : index
      %c0_137 = arith.constant 0 : index
      %543 = vector.load %arg10[%c0_136, %c0_137] : memref<8x128xf32, #tpu.memory_space<vmem>>, vector<8x128xf32>
      tpu.vector_store %arg10[%c0_136, %c0_137], %542 {strides = array<i32>} : memref<8x128xf32, #tpu.memory_space<vmem>>, vector<8x128xf32>,
    } else {
    }
    %c0 = arith.constant 0 : index
    %c0_1 = arith.constant 0 : index
    %3 = vector.load %arg4[%c0, %c0_1] : memref<128x512xbf16, #tpu.memory_space<vmem>>, vector<128x512xbf16>
    %c0_2 = arith.constant 0 : index
    %c0_3 = arith.constant 0 : index
    %4 = vector.load %arg5[%c0_2, %c0_3] : memref<128x512xbf16, #tpu.memory_space<vmem>>, vector<128x512xbf16>
    %c0_4 = arith.constant 0 : index
    %c0_5 = arith.constant 0 : index
    %5 = vector.load %arg7[%c0_4, %c0_5] : memref<8x128xf32, #tpu.memory_space<vmem>>, vector<8x128xf32>
    %c0_6 = arith.constant 0 : index
    %c0_7 = arith.constant 0 : index
    %6 = vector.load %arg8[%c0_6, %c0_7] : memref<8x128xf32, #tpu.memory_space<vmem>>, vector<8x128xf32>
    %c0_8 = arith.constant 0 : index
    %c0_9 = arith.constant 0 : index
    %7 = vector.load %arg9[%c0_8, %c0_9] : memref<8x128xf32, #tpu.memory_space<vmem>>, vector<8x128xf32>
    %c0_10 = arith.constant 0 : index
    %c0_11 = arith.constant 0 : index
    %8 = vector.load %arg10[%c0_10, %c0_11] : memref<8x128xf32, #tpu.memory_space<vmem>>, vector<8x128xf32>
    %c0_i32_12 = arith.constant 0 : i32
    %9 = arith.index_cast %c0_i32_12 : i32 to index
    %c0_13 = arith.constant 0 : index
    %c0_14 = arith.constant 0 : index
    %10 = vector.load %arg2[%9, %c0_13, %c0_14] : memref<8x8x512xbf16, #tpu.memory_space<vmem>>, vector<1x8x512xbf16>
    %11 = vector.shape_cast %10 : vector<1x8x512xbf16> to vector<8x512xbf16>
    %12 = arith.extf %11 : vector<8x512xbf16> to vector<8x512xf32>
    %13 = arith.truncf %5 : vector<8x128xf32> to vector<8x128xbf16>
    %cst = arith.constant dense<0.000000e+00> : vector<8x512xf32>
    %14 = tpu.matmul %13, %3, %cst {dimension_numbers = #tpu.dot_dimension_numbers<[1], [0], [0], [1], [0, 0, 1, 1], [], []>} : vector<8x128xbf16>, vector<128x512xbf16>, vector<8x512xf32> -> vector<8x512xf32>
    %15 = arith.addf %12, %14 : vector<8x512xf32>
    %c7_i32 = arith.constant 7 : i32
    %16 = arith.subi %c7_i32, %c0_i32_12 : i32
    %17 = arith.index_cast %16 : i32 to index
    %c0_15 = arith.constant 0 : index
    %c0_16 = arith.constant 0 : index
    %18 = vector.load %arg3[%17, %c0_15, %c0_16] : memref<8x8x512xbf16, #tpu.memory_space<vmem>>, vector<1x8x512xbf16>
    %19 = vector.shape_cast %18 : vector<1x8x512xbf16> to vector<8x512xbf16>
    %20 = arith.extf %19 : vector<8x512xbf16> to vector<8x512xf32>
    %21 = arith.truncf %7 : vector<8x128xf32> to vector<8x128xbf16>
    %cst_17 = arith.constant dense<0.000000e+00> : vector<8x512xf32>
    %22 = tpu.matmul %21, %4, %cst_17 {dimension_numbers = #tpu.dot_dimension_numbers<[1], [0], [0], [1], [0, 0, 1, 1], [], []>} : vector<8x128xbf16>, vector<128x512xbf16>, vector<8x512xf32> -> vector<8x512xf32>
    %23 = arith.addf %20, %22 : vector<8x512xf32>
    %24 = vector.extract_strided_slice %15 {offsets = [0, 0], sizes = [8, 128], strides = [1, 1]} : vector<8x512xf32> to vector<8x128xf32>
    %25 = arith.negf %24 : vector<8x128xf32>
    %26 = math.exp %25 : vector<8x128xf32>
    %cst_18 = arith.constant 1.000000e+00 : f32
    %27 = vector.broadcast %cst_18 : f32 to vector<8x128xf32>
    %28 = arith.addf %27, %26 : vector<8x128xf32>
    %29 = arith.divf %27, %28 : vector<8x128xf32>
    %30 = vector.extract_strided_slice %15 {offsets = [0, 128], sizes = [8, 128], strides = [1, 1]} : vector<8x512xf32> to vector<8x128xf32>
    %31 = arith.negf %30 : vector<8x128xf32>
    %32 = math.exp %31 : vector<8x128xf32>
    %cst_19 = arith.constant 1.000000e+00 : f32
    %33 = vector.broadcast %cst_19 : f32 to vector<8x128xf32>
    %34 = arith.addf %33, %32 : vector<8x128xf32>
    %35 = arith.divf %33, %34 : vector<8x128xf32>
    %36 = vector.extract_strided_slice %15 {offsets = [0, 256], sizes = [8, 128], strides = [1, 1]} : vector<8x512xf32> to vector<8x128xf32>
    %37 = math.tanh %36 : vector<8x128xf32>
    %38 = vector.extract_strided_slice %15 {offsets = [0, 384], sizes = [8, 128], strides = [1, 1]} : vector<8x512xf32> to vector<8x128xf32>
    %39 = arith.negf %38 : vector<8x128xf32>
    %40 = math.exp %39 : vector<8x128xf32>
    %cst_20 = arith.constant 1.000000e+00 : f32
    %41 = vector.broadcast %cst_20 : f32 to vector<8x128xf32>
    %42 = arith.addf %41, %40 : vector<8x128xf32>
    %43 = arith.divf %41, %42 : vector<8x128xf32>
    %44 = arith.mulf %35, %6 : vector<8x128xf32>
    %45 = arith.mulf %29, %37 : vector<8x128xf32>
    %46 = arith.addf %44, %45 : vector<8x128xf32>
    %47 = math.tanh %46 : vector<8x128xf32>
    %48 = arith.mulf %43, %47 : vector<8x128xf32>
    %49 = vector.extract_strided_slice %23 {offsets = [0, 0], sizes = [8, 128], strides = [1, 1]} : vector<8x512xf32> to vector<8x128xf32>
    %50 = arith.negf %49 : vector<8x128xf32>
    %51 = math.exp %50 : vector<8x128xf32>
    %cst_21 = arith.constant 1.000000e+00 : f32
    %52 = vector.broadcast %cst_21 : f32 to vector<8x128xf32>
    %53 = arith.addf %52, %51 : vector<8x128xf32>
    %54 = arith.divf %52, %53 : vector<8x128xf32>
    %55 = vector.extract_strided_slice %23 {offsets = [0, 128], sizes = [8, 128], strides = [1, 1]} : vector<8x512xf32> to vector<8x128xf32>
    %56 = arith.negf %55 : vector<8x128xf32>
    %57 = math.exp %56 : vector<8x128xf32>
    %cst_22 = arith.constant 1.000000e+00 : f32
    %58 = vector.broadcast %cst_22 : f32 to vector<8x128xf32>
    %59 = arith.addf %58, %57 : vector<8x128xf32>
    %60 = arith.divf %58, %59 : vector<8x128xf32>
    %61 = vector.extract_strided_slice %23 {offsets = [0, 256], sizes = [8, 128], strides = [1, 1]} : vector<8x512xf32> to vector<8x128xf32>
    %62 = math.tanh %61 : vector<8x128xf32>
    %63 = vector.extract_strided_slice %23 {offsets = [0, 384], sizes = [8, 128], strides = [1, 1]} : vector<8x512xf32> to vector<8x128xf32>
    %64 = arith.negf %63 : vector<8x128xf32>
    %65 = math.exp %64 : vector<8x128xf32>
    %cst_23 = arith.constant 1.000000e+00 : f32
    %66 = vector.broadcast %cst_23 : f32 to vector<8x128xf32>
    %67 = arith.addf %66, %65 : vector<8x128xf32>
    %68 = arith.divf %66, %67 : vector<8x128xf32>
    %69 = arith.mulf %60, %8 : vector<8x128xf32>
    %70 = arith.mulf %54, %62 : vector<8x128xf32>
    %71 = arith.addf %69, %70 : vector<8x128xf32>
    %72 = math.tanh %71 : vector<8x128xf32>
    %73 = arith.mulf %68, %72 : vector<8x128xf32>
    %c1_i32 = arith.constant 1 : i32
    %74 = arith.index_cast %c1_i32 : i32 to index
    %c0_24 = arith.constant 0 : index
    %c0_25 = arith.constant 0 : index
    %75 = vector.load %arg2[%74, %c0_24, %c0_25] : memref<8x8x512xbf16, #tpu.memory_space<vmem>>, vector<1x8x512xbf16>
    %76 = vector.shape_cast %75 : vector<1x8x512xbf16> to vector<8x512xbf16>
    %77 = arith.extf %76 : vector<8x512xbf16> to vector<8x512xf32>
    %78 = arith.truncf %48 : vector<8x128xf32> to vector<8x128xbf16>
    %cst_26 = arith.constant dense<0.000000e+00> : vector<8x512xf32>
    %79 = tpu.matmul %78, %3, %cst_26 {dimension_numbers = #tpu.dot_dimension_numbers<[1], [0], [0], [1], [0, 0, 1, 1], [], []>} : vector<8x128xbf16>, vector<128x512xbf16>, vector<8x512xf32> -> vector<8x512xf32>
    %80 = arith.addf %77, %79 : vector<8x512xf32>
    %c7_i32_27 = arith.constant 7 : i32
    %81 = arith.subi %c7_i32_27, %c1_i32 : i32
    %82 = arith.index_cast %81 : i32 to index
    %c0_28 = arith.constant 0 : index
    %c0_29 = arith.constant 0 : index
    %83 = vector.load %arg3[%82, %c0_28, %c0_29] : memref<8x8x512xbf16, #tpu.memory_space<vmem>>, vector<1x8x512xbf16>
    %84 = vector.shape_cast %83 : vector<1x8x512xbf16> to vector<8x512xbf16>
    %85 = arith.extf %84 : vector<8x512xbf16> to vector<8x512xf32>
    %86 = arith.truncf %73 : vector<8x128xf32> to vector<8x128xbf16>
    %cst_30 = arith.constant dense<0.000000e+00> : vector<8x512xf32>
    %87 = tpu.matmul %86, %4, %cst_30 {dimension_numbers = #tpu.dot_dimension_numbers<[1], [0], [0], [1], [0, 0, 1, 1], [], []>} : vector<8x128xbf16>, vector<128x512xbf16>, vector<8x512xf32> -> vector<8x512xf32>
    %88 = arith.addf %85, %87 : vector<8x512xf32>
    %89 = vector.extract_strided_slice %80 {offsets = [0, 0], sizes = [8, 128], strides = [1, 1]} : vector<8x512xf32> to vector<8x128xf32>
    %90 = arith.negf %89 : vector<8x128xf32>
    %91 = math.exp %90 : vector<8x128xf32>
    %cst_31 = arith.constant 1.000000e+00 : f32
    %92 = vector.broadcast %cst_31 : f32 to vector<8x128xf32>
    %93 = arith.addf %92, %91 : vector<8x128xf32>
    %94 = arith.divf %92, %93 : vector<8x128xf32>
    %95 = vector.extract_strided_slice %80 {offsets = [0, 128], sizes = [8, 128], strides = [1, 1]} : vector<8x512xf32> to vector<8x128xf32>
    %96 = arith.negf %95 : vector<8x128xf32>
    %97 = math.exp %96 : vector<8x128xf32>
    %cst_32 = arith.constant 1.000000e+00 : f32
    %98 = vector.broadcast %cst_32 : f32 to vector<8x128xf32>
    %99 = arith.addf %98, %97 : vector<8x128xf32>
    %100 = arith.divf %98, %99 : vector<8x128xf32>
    %101 = vector.extract_strided_slice %80 {offsets = [0, 256], sizes = [8, 128], strides = [1, 1]} : vector<8x512xf32> to vector<8x128xf32>
    %102 = math.tanh %101 : vector<8x128xf32>
    %103 = vector.extract_strided_slice %80 {offsets = [0, 384], sizes = [8, 128], strides = [1, 1]} : vector<8x512xf32> to vector<8x128xf32>
    %104 = arith.negf %103 : vector<8x128xf32>
    %105 = math.exp %104 : vector<8x128xf32>
    %cst_33 = arith.constant 1.000000e+00 : f32
    %106 = vector.broadcast %cst_33 : f32 to vector<8x128xf32>
    %107 = arith.addf %106, %105 : vector<8x128xf32>
    %108 = arith.divf %106, %107 : vector<8x128xf32>
    %109 = arith.mulf %100, %46 : vector<8x128xf32>
    %110 = arith.mulf %94, %102 : vector<8x128xf32>
    %111 = arith.addf %109, %110 : vector<8x128xf32>
    %112 = math.tanh %111 : vector<8x128xf32>
    %113 = arith.mulf %108, %112 : vector<8x128xf32>
    %114 = vector.extract_strided_slice %88 {offsets = [0, 0], sizes = [8, 128], strides = [1, 1]} : vector<8x512xf32> to vector<8x128xf32>
    %115 = arith.negf %114 : vector<8x128xf32>
    %116 = math.exp %115 : vector<8x128xf32>
    %cst_34 = arith.constant 1.000000e+00 : f32
    %117 = vector.broadcast %cst_34 : f32 to vector<8x128xf32>
    %118 = arith.addf %117, %116 : vector<8x128xf32>
    %119 = arith.divf %117, %118 : vector<8x128xf32>
    %120 = vector.extract_strided_slice %88 {offsets = [0, 128], sizes = [8, 128], strides = [1, 1]} : vector<8x512xf32> to vector<8x128xf32>
    %121 = arith.negf %120 : vector<8x128xf32>
    %122 = math.exp %121 : vector<8x128xf32>
    %cst_35 = arith.constant 1.000000e+00 : f32
    %123 = vector.broadcast %cst_35 : f32 to vector<8x128xf32>
    %124 = arith.addf %123, %122 : vector<8x128xf32>
    %125 = arith.divf %123, %124 : vector<8x128xf32>
    %126 = vector.extract_strided_slice %88 {offsets = [0, 256], sizes = [8, 128], strides = [1, 1]} : vector<8x512xf32> to vector<8x128xf32>
    %127 = math.tanh %126 : vector<8x128xf32>
    %128 = vector.extract_strided_slice %88 {offsets = [0, 384], sizes = [8, 128], strides = [1, 1]} : vector<8x512xf32> to vector<8x128xf32>
    %129 = arith.negf %128 : vector<8x128xf32>
    %130 = math.exp %129 : vector<8x128xf32>
    %cst_36 = arith.constant 1.000000e+00 : f32
    %131 = vector.broadcast %cst_36 : f32 to vector<8x128xf32>
    %132 = arith.addf %131, %130 : vector<8x128xf32>
    %133 = arith.divf %131, %132 : vector<8x128xf32>
    %134 = arith.mulf %125, %71 : vector<8x128xf32>
    %135 = arith.mulf %119, %127 : vector<8x128xf32>
    %136 = arith.addf %134, %135 : vector<8x128xf32>
    %137 = math.tanh %136 : vector<8x128xf32>
    %138 = arith.mulf %133, %137 : vector<8x128xf32>
    %c2_i32 = arith.constant 2 : i32
    %139 = arith.index_cast %c2_i32 : i32 to index
    %c0_37 = arith.constant 0 : index
    %c0_38 = arith.constant 0 : index
    %140 = vector.load %arg2[%139, %c0_37, %c0_38] : memref<8x8x512xbf16, #tpu.memory_space<vmem>>, vector<1x8x512xbf16>
    %141 = vector.shape_cast %140 : vector<1x8x512xbf16> to vector<8x512xbf16>
    %142 = arith.extf %141 : vector<8x512xbf16> to vector<8x512xf32>
    %143 = arith.truncf %113 : vector<8x128xf32> to vector<8x128xbf16>
    %cst_39 = arith.constant dense<0.000000e+00> : vector<8x512xf32>
    %144 = tpu.matmul %143, %3, %cst_39 {dimension_numbers = #tpu.dot_dimension_numbers<[1], [0], [0], [1], [0, 0, 1, 1], [], []>} : vector<8x128xbf16>, vector<128x512xbf16>, vector<8x512xf32> -> vector<8x512xf32>
    %145 = arith.addf %142, %144 : vector<8x512xf32>
    %c7_i32_40 = arith.constant 7 : i32
    %146 = arith.subi %c7_i32_40, %c2_i32 : i32
    %147 = arith.index_cast %146 : i32 to index
    %c0_41 = arith.constant 0 : index
    %c0_42 = arith.constant 0 : index
    %148 = vector.load %arg3[%147, %c0_41, %c0_42] : memref<8x8x512xbf16, #tpu.memory_space<vmem>>, vector<1x8x512xbf16>
    %149 = vector.shape_cast %148 : vector<1x8x512xbf16> to vector<8x512xbf16>
    %150 = arith.extf %149 : vector<8x512xbf16> to vector<8x512xf32>
    %151 = arith.truncf %138 : vector<8x128xf32> to vector<8x128xbf16>
    %cst_43 = arith.constant dense<0.000000e+00> : vector<8x512xf32>
    %152 = tpu.matmul %151, %4, %cst_43 {dimension_numbers = #tpu.dot_dimension_numbers<[1], [0], [0], [1], [0, 0, 1, 1], [], []>} : vector<8x128xbf16>, vector<128x512xbf16>, vector<8x512xf32> -> vector<8x512xf32>
    %153 = arith.addf %150, %152 : vector<8x512xf32>
    %154 = vector.extract_strided_slice %145 {offsets = [0, 0], sizes = [8, 128], strides = [1, 1]} : vector<8x512xf32> to vector<8x128xf32>
    %155 = arith.negf %154 : vector<8x128xf32>
    %156 = math.exp %155 : vector<8x128xf32>
    %cst_44 = arith.constant 1.000000e+00 : f32
    %157 = vector.broadcast %cst_44 : f32 to vector<8x128xf32>
    %158 = arith.addf %157, %156 : vector<8x128xf32>
    %159 = arith.divf %157, %158 : vector<8x128xf32>
    %160 = vector.extract_strided_slice %145 {offsets = [0, 128], sizes = [8, 128], strides = [1, 1]} : vector<8x512xf32> to vector<8x128xf32>
    %161 = arith.negf %160 : vector<8x128xf32>
    %162 = math.exp %161 : vector<8x128xf32>
    %cst_45 = arith.constant 1.000000e+00 : f32
    %163 = vector.broadcast %cst_45 : f32 to vector<8x128xf32>
    %164 = arith.addf %163, %162 : vector<8x128xf32>
    %165 = arith.divf %163, %164 : vector<8x128xf32>
    %166 = vector.extract_strided_slice %145 {offsets = [0, 256], sizes = [8, 128], strides = [1, 1]} : vector<8x512xf32> to vector<8x128xf32>
    %167 = math.tanh %166 : vector<8x128xf32>
    %168 = vector.extract_strided_slice %145 {offsets = [0, 384], sizes = [8, 128], strides = [1, 1]} : vector<8x512xf32> to vector<8x128xf32>
    %169 = arith.negf %168 : vector<8x128xf32>
    %170 = math.exp %169 : vector<8x128xf32>
    %cst_46 = arith.constant 1.000000e+00 : f32
    %171 = vector.broadcast %cst_46 : f32 to vector<8x128xf32>
    %172 = arith.addf %171, %170 : vector<8x128xf32>
    %173 = arith.divf %171, %172 : vector<8x128xf32>
    %174 = arith.mulf %165, %111 : vector<8x128xf32>
    %175 = arith.mulf %159, %167 : vector<8x128xf32>
    %176 = arith.addf %174, %175 : vector<8x128xf32>
    %177 = math.tanh %176 : vector<8x128xf32>
    %178 = arith.mulf %173, %177 : vector<8x128xf32>
    %179 = vector.extract_strided_slice %153 {offsets = [0, 0], sizes = [8, 128], strides = [1, 1]} : vector<8x512xf32> to vector<8x128xf32>
    %180 = arith.negf %179 : vector<8x128xf32>
    %181 = math.exp %180 : vector<8x128xf32>
    %cst_47 = arith.constant 1.000000e+00 : f32
    %182 = vector.broadcast %cst_47 : f32 to vector<8x128xf32>
    %183 = arith.addf %182, %181 : vector<8x128xf32>
    %184 = arith.divf %182, %183 : vector<8x128xf32>
    %185 = vector.extract_strided_slice %153 {offsets = [0, 128], sizes = [8, 128], strides = [1, 1]} : vector<8x512xf32> to vector<8x128xf32>
    %186 = arith.negf %185 : vector<8x128xf32>
    %187 = math.exp %186 : vector<8x128xf32>
    %cst_48 = arith.constant 1.000000e+00 : f32
    %188 = vector.broadcast %cst_48 : f32 to vector<8x128xf32>
    %189 = arith.addf %188, %187 : vector<8x128xf32>
    %190 = arith.divf %188, %189 : vector<8x128xf32>
    %191 = vector.extract_strided_slice %153 {offsets = [0, 256], sizes = [8, 128], strides = [1, 1]} : vector<8x512xf32> to vector<8x128xf32>
    %192 = math.tanh %191 : vector<8x128xf32>
    %193 = vector.extract_strided_slice %153 {offsets = [0, 384], sizes = [8, 128], strides = [1, 1]} : vector<8x512xf32> to vector<8x128xf32>
    %194 = arith.negf %193 : vector<8x128xf32>
    %195 = math.exp %194 : vector<8x128xf32>
    %cst_49 = arith.constant 1.000000e+00 : f32
    %196 = vector.broadcast %cst_49 : f32 to vector<8x128xf32>
    %197 = arith.addf %196, %195 : vector<8x128xf32>
    %198 = arith.divf %196, %197 : vector<8x128xf32>
    %199 = arith.mulf %190, %136 : vector<8x128xf32>
    %200 = arith.mulf %184, %192 : vector<8x128xf32>
    %201 = arith.addf %199, %200 : vector<8x128xf32>
    %202 = math.tanh %201 : vector<8x128xf32>
    %203 = arith.mulf %198, %202 : vector<8x128xf32>
    %c3_i32 = arith.constant 3 : i32
    %204 = arith.index_cast %c3_i32 : i32 to index
    %c0_50 = arith.constant 0 : index
    %c0_51 = arith.constant 0 : index
    %205 = vector.load %arg2[%204, %c0_50, %c0_51] : memref<8x8x512xbf16, #tpu.memory_space<vmem>>, vector<1x8x512xbf16>
    %206 = vector.shape_cast %205 : vector<1x8x512xbf16> to vector<8x512xbf16>
    %207 = arith.extf %206 : vector<8x512xbf16> to vector<8x512xf32>
    %208 = arith.truncf %178 : vector<8x128xf32> to vector<8x128xbf16>
    %cst_52 = arith.constant dense<0.000000e+00> : vector<8x512xf32>
    %209 = tpu.matmul %208, %3, %cst_52 {dimension_numbers = #tpu.dot_dimension_numbers<[1], [0], [0], [1], [0, 0, 1, 1], [], []>} : vector<8x128xbf16>, vector<128x512xbf16>, vector<8x512xf32> -> vector<8x512xf32>
    %210 = arith.addf %207, %209 : vector<8x512xf32>
    %c7_i32_53 = arith.constant 7 : i32
    %211 = arith.subi %c7_i32_53, %c3_i32 : i32
    %212 = arith.index_cast %211 : i32 to index
    %c0_54 = arith.constant 0 : index
    %c0_55 = arith.constant 0 : index
    %213 = vector.load %arg3[%212, %c0_54, %c0_55] : memref<8x8x512xbf16, #tpu.memory_space<vmem>>, vector<1x8x512xbf16>
    %214 = vector.shape_cast %213 : vector<1x8x512xbf16> to vector<8x512xbf16>
    %215 = arith.extf %214 : vector<8x512xbf16> to vector<8x512xf32>
    %216 = arith.truncf %203 : vector<8x128xf32> to vector<8x128xbf16>
    %cst_56 = arith.constant dense<0.000000e+00> : vector<8x512xf32>
    %217 = tpu.matmul %216, %4, %cst_56 {dimension_numbers = #tpu.dot_dimension_numbers<[1], [0], [0], [1], [0, 0, 1, 1], [], []>} : vector<8x128xbf16>, vector<128x512xbf16>, vector<8x512xf32> -> vector<8x512xf32>
    %218 = arith.addf %215, %217 : vector<8x512xf32>
    %219 = vector.extract_strided_slice %210 {offsets = [0, 0], sizes = [8, 128], strides = [1, 1]} : vector<8x512xf32> to vector<8x128xf32>
    %220 = arith.negf %219 : vector<8x128xf32>
    %221 = math.exp %220 : vector<8x128xf32>
    %cst_57 = arith.constant 1.000000e+00 : f32
    %222 = vector.broadcast %cst_57 : f32 to vector<8x128xf32>
    %223 = arith.addf %222, %221 : vector<8x128xf32>
    %224 = arith.divf %222, %223 : vector<8x128xf32>
    %225 = vector.extract_strided_slice %210 {offsets = [0, 128], sizes = [8, 128], strides = [1, 1]} : vector<8x512xf32> to vector<8x128xf32>
    %226 = arith.negf %225 : vector<8x128xf32>
    %227 = math.exp %226 : vector<8x128xf32>
    %cst_58 = arith.constant 1.000000e+00 : f32
    %228 = vector.broadcast %cst_58 : f32 to vector<8x128xf32>
    %229 = arith.addf %228, %227 : vector<8x128xf32>
    %230 = arith.divf %228, %229 : vector<8x128xf32>
    %231 = vector.extract_strided_slice %210 {offsets = [0, 256], sizes = [8, 128], strides = [1, 1]} : vector<8x512xf32> to vector<8x128xf32>
    %232 = math.tanh %231 : vector<8x128xf32>
    %233 = vector.extract_strided_slice %210 {offsets = [0, 384], sizes = [8, 128], strides = [1, 1]} : vector<8x512xf32> to vector<8x128xf32>
    %234 = arith.negf %233 : vector<8x128xf32>
    %235 = math.exp %234 : vector<8x128xf32>
    %cst_59 = arith.constant 1.000000e+00 : f32
    %236 = vector.broadcast %cst_59 : f32 to vector<8x128xf32>
    %237 = arith.addf %236, %235 : vector<8x128xf32>
    %238 = arith.divf %236, %237 : vector<8x128xf32>
    %239 = arith.mulf %230, %176 : vector<8x128xf32>
    %240 = arith.mulf %224, %232 : vector<8x128xf32>
    %241 = arith.addf %239, %240 : vector<8x128xf32>
    %242 = math.tanh %241 : vector<8x128xf32>
    %243 = arith.mulf %238, %242 : vector<8x128xf32>
    %244 = vector.extract_strided_slice %218 {offsets = [0, 0], sizes = [8, 128], strides = [1, 1]} : vector<8x512xf32> to vector<8x128xf32>
    %245 = arith.negf %244 : vector<8x128xf32>
    %246 = math.exp %245 : vector<8x128xf32>
    %cst_60 = arith.constant 1.000000e+00 : f32
    %247 = vector.broadcast %cst_60 : f32 to vector<8x128xf32>
    %248 = arith.addf %247, %246 : vector<8x128xf32>
    %249 = arith.divf %247, %248 : vector<8x128xf32>
    %250 = vector.extract_strided_slice %218 {offsets = [0, 128], sizes = [8, 128], strides = [1, 1]} : vector<8x512xf32> to vector<8x128xf32>
    %251 = arith.negf %250 : vector<8x128xf32>
    %252 = math.exp %251 : vector<8x128xf32>
    %cst_61 = arith.constant 1.000000e+00 : f32
    %253 = vector.broadcast %cst_61 : f32 to vector<8x128xf32>
    %254 = arith.addf %253, %252 : vector<8x128xf32>
    %255 = arith.divf %253, %254 : vector<8x128xf32>
    %256 = vector.extract_strided_slice %218 {offsets = [0, 256], sizes = [8, 128], strides = [1, 1]} : vector<8x512xf32> to vector<8x128xf32>
    %257 = math.tanh %256 : vector<8x128xf32>
    %258 = vector.extract_strided_slice %218 {offsets = [0, 384], sizes = [8, 128], strides = [1, 1]} : vector<8x512xf32> to vector<8x128xf32>
    %259 = arith.negf %258 : vector<8x128xf32>
    %260 = math.exp %259 : vector<8x128xf32>
    %cst_62 = arith.constant 1.000000e+00 : f32
    %261 = vector.broadcast %cst_62 : f32 to vector<8x128xf32>
    %262 = arith.addf %261, %260 : vector<8x128xf32>
    %263 = arith.divf %261, %262 : vector<8x128xf32>
    %264 = arith.mulf %255, %201 : vector<8x128xf32>
    %265 = arith.mulf %249, %257 : vector<8x128xf32>
    %266 = arith.addf %264, %265 : vector<8x128xf32>
    %267 = math.tanh %266 : vector<8x128xf32>
    %268 = arith.mulf %263, %267 : vector<8x128xf32>
    %c4_i32 = arith.constant 4 : i32
    %269 = arith.index_cast %c4_i32 : i32 to index
    %c0_63 = arith.constant 0 : index
    %c0_64 = arith.constant 0 : index
    %270 = vector.load %arg2[%269, %c0_63, %c0_64] : memref<8x8x512xbf16, #tpu.memory_space<vmem>>, vector<1x8x512xbf16>
    %271 = vector.shape_cast %270 : vector<1x8x512xbf16> to vector<8x512xbf16>
    %272 = arith.extf %271 : vector<8x512xbf16> to vector<8x512xf32>
    %273 = arith.truncf %243 : vector<8x128xf32> to vector<8x128xbf16>
    %cst_65 = arith.constant dense<0.000000e+00> : vector<8x512xf32>
    %274 = tpu.matmul %273, %3, %cst_65 {dimension_numbers = #tpu.dot_dimension_numbers<[1], [0], [0], [1], [0, 0, 1, 1], [], []>} : vector<8x128xbf16>, vector<128x512xbf16>, vector<8x512xf32> -> vector<8x512xf32>
    %275 = arith.addf %272, %274 : vector<8x512xf32>
    %c7_i32_66 = arith.constant 7 : i32
    %276 = arith.subi %c7_i32_66, %c4_i32 : i32
    %277 = arith.index_cast %276 : i32 to index
    %c0_67 = arith.constant 0 : index
    %c0_68 = arith.constant 0 : index
    %278 = vector.load %arg3[%277, %c0_67, %c0_68] : memref<8x8x512xbf16, #tpu.memory_space<vmem>>, vector<1x8x512xbf16>
    %279 = vector.shape_cast %278 : vector<1x8x512xbf16> to vector<8x512xbf16>
    %280 = arith.extf %279 : vector<8x512xbf16> to vector<8x512xf32>
    %281 = arith.truncf %268 : vector<8x128xf32> to vector<8x128xbf16>
    %cst_69 = arith.constant dense<0.000000e+00> : vector<8x512xf32>
    %282 = tpu.matmul %281, %4, %cst_69 {dimension_numbers = #tpu.dot_dimension_numbers<[1], [0], [0], [1], [0, 0, 1, 1], [], []>} : vector<8x128xbf16>, vector<128x512xbf16>, vector<8x512xf32> -> vector<8x512xf32>
    %283 = arith.addf %280, %282 : vector<8x512xf32>
    %284 = vector.extract_strided_slice %275 {offsets = [0, 0], sizes = [8, 128], strides = [1, 1]} : vector<8x512xf32> to vector<8x128xf32>
    %285 = arith.negf %284 : vector<8x128xf32>
    %286 = math.exp %285 : vector<8x128xf32>
    %cst_70 = arith.constant 1.000000e+00 : f32
    %287 = vector.broadcast %cst_70 : f32 to vector<8x128xf32>
    %288 = arith.addf %287, %286 : vector<8x128xf32>
    %289 = arith.divf %287, %288 : vector<8x128xf32>
    %290 = vector.extract_strided_slice %275 {offsets = [0, 128], sizes = [8, 128], strides = [1, 1]} : vector<8x512xf32> to vector<8x128xf32>
    %291 = arith.negf %290 : vector<8x128xf32>
    %292 = math.exp %291 : vector<8x128xf32>
    %cst_71 = arith.constant 1.000000e+00 : f32
    %293 = vector.broadcast %cst_71 : f32 to vector<8x128xf32>
    %294 = arith.addf %293, %292 : vector<8x128xf32>
    %295 = arith.divf %293, %294 : vector<8x128xf32>
    %296 = vector.extract_strided_slice %275 {offsets = [0, 256], sizes = [8, 128], strides = [1, 1]} : vector<8x512xf32> to vector<8x128xf32>
    %297 = math.tanh %296 : vector<8x128xf32>
    %298 = vector.extract_strided_slice %275 {offsets = [0, 384], sizes = [8, 128], strides = [1, 1]} : vector<8x512xf32> to vector<8x128xf32>
    %299 = arith.negf %298 : vector<8x128xf32>
    %300 = math.exp %299 : vector<8x128xf32>
    %cst_72 = arith.constant 1.000000e+00 : f32
    %301 = vector.broadcast %cst_72 : f32 to vector<8x128xf32>
    %302 = arith.addf %301, %300 : vector<8x128xf32>
    %303 = arith.divf %301, %302 : vector<8x128xf32>
    %304 = arith.mulf %295, %241 : vector<8x128xf32>
    %305 = arith.mulf %289, %297 : vector<8x128xf32>
    %306 = arith.addf %304, %305 : vector<8x128xf32>
    %307 = math.tanh %306 : vector<8x128xf32>
    %308 = arith.mulf %303, %307 : vector<8x128xf32>
    %309 = vector.extract_strided_slice %283 {offsets = [0, 0], sizes = [8, 128], strides = [1, 1]} : vector<8x512xf32> to vector<8x128xf32>
    %310 = arith.negf %309 : vector<8x128xf32>
    %311 = math.exp %310 : vector<8x128xf32>
    %cst_73 = arith.constant 1.000000e+00 : f32
    %312 = vector.broadcast %cst_73 : f32 to vector<8x128xf32>
    %313 = arith.addf %312, %311 : vector<8x128xf32>
    %314 = arith.divf %312, %313 : vector<8x128xf32>
    %315 = vector.extract_strided_slice %283 {offsets = [0, 128], sizes = [8, 128], strides = [1, 1]} : vector<8x512xf32> to vector<8x128xf32>
    %316 = arith.negf %315 : vector<8x128xf32>
    %317 = math.exp %316 : vector<8x128xf32>
    %cst_74 = arith.constant 1.000000e+00 : f32
    %318 = vector.broadcast %cst_74 : f32 to vector<8x128xf32>
    %319 = arith.addf %318, %317 : vector<8x128xf32>
    %320 = arith.divf %318, %319 : vector<8x128xf32>
    %321 = vector.extract_strided_slice %283 {offsets = [0, 256], sizes = [8, 128], strides = [1, 1]} : vector<8x512xf32> to vector<8x128xf32>
    %322 = math.tanh %321 : vector<8x128xf32>
    %323 = vector.extract_strided_slice %283 {offsets = [0, 384], sizes = [8, 128], strides = [1, 1]} : vector<8x512xf32> to vector<8x128xf32>
    %324 = arith.negf %323 : vector<8x128xf32>
    %325 = math.exp %324 : vector<8x128xf32>
    %cst_75 = arith.constant 1.000000e+00 : f32
    %326 = vector.broadcast %cst_75 : f32 to vector<8x128xf32>
    %327 = arith.addf %326, %325 : vector<8x128xf32>
    %328 = arith.divf %326, %327 : vector<8x128xf32>
    %329 = arith.mulf %320, %266 : vector<8x128xf32>
    %330 = arith.mulf %314, %322 : vector<8x128xf32>
    %331 = arith.addf %329, %330 : vector<8x128xf32>
    %332 = math.tanh %331 : vector<8x128xf32>
    %333 = arith.mulf %328, %332 : vector<8x128xf32>
    %c5_i32 = arith.constant 5 : i32
    %334 = arith.index_cast %c5_i32 : i32 to index
    %c0_76 = arith.constant 0 : index
    %c0_77 = arith.constant 0 : index
    %335 = vector.load %arg2[%334, %c0_76, %c0_77] : memref<8x8x512xbf16, #tpu.memory_space<vmem>>, vector<1x8x512xbf16>
    %336 = vector.shape_cast %335 : vector<1x8x512xbf16> to vector<8x512xbf16>
    %337 = arith.extf %336 : vector<8x512xbf16> to vector<8x512xf32>
    %338 = arith.truncf %308 : vector<8x128xf32> to vector<8x128xbf16>
    %cst_78 = arith.constant dense<0.000000e+00> : vector<8x512xf32>
    %339 = tpu.matmul %338, %3, %cst_78 {dimension_numbers = #tpu.dot_dimension_numbers<[1], [0], [0], [1], [0, 0, 1, 1], [], []>} : vector<8x128xbf16>, vector<128x512xbf16>, vector<8x512xf32> -> vector<8x512xf32>
    %340 = arith.addf %337, %339 : vector<8x512xf32>
    %c7_i32_79 = arith.constant 7 : i32
    %341 = arith.subi %c7_i32_79, %c5_i32 : i32
    %342 = arith.index_cast %341 : i32 to index
    %c0_80 = arith.constant 0 : index
    %c0_81 = arith.constant 0 : index
    %343 = vector.load %arg3[%342, %c0_80, %c0_81] : memref<8x8x512xbf16, #tpu.memory_space<vmem>>, vector<1x8x512xbf16>
    %344 = vector.shape_cast %343 : vector<1x8x512xbf16> to vector<8x512xbf16>
    %345 = arith.extf %344 : vector<8x512xbf16> to vector<8x512xf32>
    %346 = arith.truncf %333 : vector<8x128xf32> to vector<8x128xbf16>
    %cst_82 = arith.constant dense<0.000000e+00> : vector<8x512xf32>
    %347 = tpu.matmul %346, %4, %cst_82 {dimension_numbers = #tpu.dot_dimension_numbers<[1], [0], [0], [1], [0, 0, 1, 1], [], []>} : vector<8x128xbf16>, vector<128x512xbf16>, vector<8x512xf32> -> vector<8x512xf32>
    %348 = arith.addf %345, %347 : vector<8x512xf32>
    %349 = vector.extract_strided_slice %340 {offsets = [0, 0], sizes = [8, 128], strides = [1, 1]} : vector<8x512xf32> to vector<8x128xf32>
    %350 = arith.negf %349 : vector<8x128xf32>
    %351 = math.exp %350 : vector<8x128xf32>
    %cst_83 = arith.constant 1.000000e+00 : f32
    %352 = vector.broadcast %cst_83 : f32 to vector<8x128xf32>
    %353 = arith.addf %352, %351 : vector<8x128xf32>
    %354 = arith.divf %352, %353 : vector<8x128xf32>
    %355 = vector.extract_strided_slice %340 {offsets = [0, 128], sizes = [8, 128], strides = [1, 1]} : vector<8x512xf32> to vector<8x128xf32>
    %356 = arith.negf %355 : vector<8x128xf32>
    %357 = math.exp %356 : vector<8x128xf32>
    %cst_84 = arith.constant 1.000000e+00 : f32
    %358 = vector.broadcast %cst_84 : f32 to vector<8x128xf32>
    %359 = arith.addf %358, %357 : vector<8x128xf32>
    %360 = arith.divf %358, %359 : vector<8x128xf32>
    %361 = vector.extract_strided_slice %340 {offsets = [0, 256], sizes = [8, 128], strides = [1, 1]} : vector<8x512xf32> to vector<8x128xf32>
    %362 = math.tanh %361 : vector<8x128xf32>
    %363 = vector.extract_strided_slice %340 {offsets = [0, 384], sizes = [8, 128], strides = [1, 1]} : vector<8x512xf32> to vector<8x128xf32>
    %364 = arith.negf %363 : vector<8x128xf32>
    %365 = math.exp %364 : vector<8x128xf32>
    %cst_85 = arith.constant 1.000000e+00 : f32
    %366 = vector.broadcast %cst_85 : f32 to vector<8x128xf32>
    %367 = arith.addf %366, %365 : vector<8x128xf32>
    %368 = arith.divf %366, %367 : vector<8x128xf32>
    %369 = arith.mulf %360, %306 : vector<8x128xf32>
    %370 = arith.mulf %354, %362 : vector<8x128xf32>
    %371 = arith.addf %369, %370 : vector<8x128xf32>
    %372 = math.tanh %371 : vector<8x128xf32>
    %373 = arith.mulf %368, %372 : vector<8x128xf32>
    %374 = vector.extract_strided_slice %348 {offsets = [0, 0], sizes = [8, 128], strides = [1, 1]} : vector<8x512xf32> to vector<8x128xf32>
    %375 = arith.negf %374 : vector<8x128xf32>
    %376 = math.exp %375 : vector<8x128xf32>
    %cst_86 = arith.constant 1.000000e+00 : f32
    %377 = vector.broadcast %cst_86 : f32 to vector<8x128xf32>
    %378 = arith.addf %377, %376 : vector<8x128xf32>
    %379 = arith.divf %377, %378 : vector<8x128xf32>
    %380 = vector.extract_strided_slice %348 {offsets = [0, 128], sizes = [8, 128], strides = [1, 1]} : vector<8x512xf32> to vector<8x128xf32>
    %381 = arith.negf %380 : vector<8x128xf32>
    %382 = math.exp %381 : vector<8x128xf32>
    %cst_87 = arith.constant 1.000000e+00 : f32
    %383 = vector.broadcast %cst_87 : f32 to vector<8x128xf32>
    %384 = arith.addf %383, %382 : vector<8x128xf32>
    %385 = arith.divf %383, %384 : vector<8x128xf32>
    %386 = vector.extract_strided_slice %348 {offsets = [0, 256], sizes = [8, 128], strides = [1, 1]} : vector<8x512xf32> to vector<8x128xf32>
    %387 = math.tanh %386 : vector<8x128xf32>
    %388 = vector.extract_strided_slice %348 {offsets = [0, 384], sizes = [8, 128], strides = [1, 1]} : vector<8x512xf32> to vector<8x128xf32>
    %389 = arith.negf %388 : vector<8x128xf32>
    %390 = math.exp %389 : vector<8x128xf32>
    %cst_88 = arith.constant 1.000000e+00 : f32
    %391 = vector.broadcast %cst_88 : f32 to vector<8x128xf32>
    %392 = arith.addf %391, %390 : vector<8x128xf32>
    %393 = arith.divf %391, %392 : vector<8x128xf32>
    %394 = arith.mulf %385, %331 : vector<8x128xf32>
    %395 = arith.mulf %379, %387 : vector<8x128xf32>
    %396 = arith.addf %394, %395 : vector<8x128xf32>
    %397 = math.tanh %396 : vector<8x128xf32>
    %398 = arith.mulf %393, %397 : vector<8x128xf32>
    %c6_i32 = arith.constant 6 : i32
    %399 = arith.index_cast %c6_i32 : i32 to index
    %c0_89 = arith.constant 0 : index
    %c0_90 = arith.constant 0 : index
    %400 = vector.load %arg2[%399, %c0_89, %c0_90] : memref<8x8x512xbf16, #tpu.memory_space<vmem>>, vector<1x8x512xbf16>
    %401 = vector.shape_cast %400 : vector<1x8x512xbf16> to vector<8x512xbf16>
    %402 = arith.extf %401 : vector<8x512xbf16> to vector<8x512xf32>
    %403 = arith.truncf %373 : vector<8x128xf32> to vector<8x128xbf16>
    %cst_91 = arith.constant dense<0.000000e+00> : vector<8x512xf32>
    %404 = tpu.matmul %403, %3, %cst_91 {dimension_numbers = #tpu.dot_dimension_numbers<[1], [0], [0], [1], [0, 0, 1, 1], [], []>} : vector<8x128xbf16>, vector<128x512xbf16>, vector<8x512xf32> -> vector<8x512xf32>
    %405 = arith.addf %402, %404 : vector<8x512xf32>
    %c7_i32_92 = arith.constant 7 : i32
    %406 = arith.subi %c7_i32_92, %c6_i32 : i32
    %407 = arith.index_cast %406 : i32 to index
    %c0_93 = arith.constant 0 : index
    %c0_94 = arith.constant 0 : index
    %408 = vector.load %arg3[%407, %c0_93, %c0_94] : memref<8x8x512xbf16, #tpu.memory_space<vmem>>, vector<1x8x512xbf16>
    %409 = vector.shape_cast %408 : vector<1x8x512xbf16> to vector<8x512xbf16>
    %410 = arith.extf %409 : vector<8x512xbf16> to vector<8x512xf32>
    %411 = arith.truncf %398 : vector<8x128xf32> to vector<8x128xbf16>
    %cst_95 = arith.constant dense<0.000000e+00> : vector<8x512xf32>
    %412 = tpu.matmul %411, %4, %cst_95 {dimension_numbers = #tpu.dot_dimension_numbers<[1], [0], [0], [1], [0, 0, 1, 1], [], []>} : vector<8x128xbf16>, vector<128x512xbf16>, vector<8x512xf32> -> vector<8x512xf32>
    %413 = arith.addf %410, %412 : vector<8x512xf32>
    %414 = vector.extract_strided_slice %405 {offsets = [0, 0], sizes = [8, 128], strides = [1, 1]} : vector<8x512xf32> to vector<8x128xf32>
    %415 = arith.negf %414 : vector<8x128xf32>
    %416 = math.exp %415 : vector<8x128xf32>
    %cst_96 = arith.constant 1.000000e+00 : f32
    %417 = vector.broadcast %cst_96 : f32 to vector<8x128xf32>
    %418 = arith.addf %417, %416 : vector<8x128xf32>
    %419 = arith.divf %417, %418 : vector<8x128xf32>
    %420 = vector.extract_strided_slice %405 {offsets = [0, 128], sizes = [8, 128], strides = [1, 1]} : vector<8x512xf32> to vector<8x128xf32>
    %421 = arith.negf %420 : vector<8x128xf32>
    %422 = math.exp %421 : vector<8x128xf32>
    %cst_97 = arith.constant 1.000000e+00 : f32
    %423 = vector.broadcast %cst_97 : f32 to vector<8x128xf32>
    %424 = arith.addf %423, %422 : vector<8x128xf32>
    %425 = arith.divf %423, %424 : vector<8x128xf32>
    %426 = vector.extract_strided_slice %405 {offsets = [0, 256], sizes = [8, 128], strides = [1, 1]} : vector<8x512xf32> to vector<8x128xf32>
    %427 = math.tanh %426 : vector<8x128xf32>
    %428 = vector.extract_strided_slice %405 {offsets = [0, 384], sizes = [8, 128], strides = [1, 1]} : vector<8x512xf32> to vector<8x128xf32>
    %429 = arith.negf %428 : vector<8x128xf32>
    %430 = math.exp %429 : vector<8x128xf32>
    %cst_98 = arith.constant 1.000000e+00 : f32
    %431 = vector.broadcast %cst_98 : f32 to vector<8x128xf32>
    %432 = arith.addf %431, %430 : vector<8x128xf32>
    %433 = arith.divf %431, %432 : vector<8x128xf32>
    %434 = arith.mulf %425, %371 : vector<8x128xf32>
    %435 = arith.mulf %419, %427 : vector<8x128xf32>
    %436 = arith.addf %434, %435 : vector<8x128xf32>
    %437 = math.tanh %436 : vector<8x128xf32>
    %438 = arith.mulf %433, %437 : vector<8x128xf32>
    %439 = vector.extract_strided_slice %413 {offsets = [0, 0], sizes = [8, 128], strides = [1, 1]} : vector<8x512xf32> to vector<8x128xf32>
    %440 = arith.negf %439 : vector<8x128xf32>
    %441 = math.exp %440 : vector<8x128xf32>
    %cst_99 = arith.constant 1.000000e+00 : f32
    %442 = vector.broadcast %cst_99 : f32 to vector<8x128xf32>
    %443 = arith.addf %442, %441 : vector<8x128xf32>
    %444 = arith.divf %442, %443 : vector<8x128xf32>
    %445 = vector.extract_strided_slice %413 {offsets = [0, 128], sizes = [8, 128], strides = [1, 1]} : vector<8x512xf32> to vector<8x128xf32>
    %446 = arith.negf %445 : vector<8x128xf32>
    %447 = math.exp %446 : vector<8x128xf32>
    %cst_100 = arith.constant 1.000000e+00 : f32
    %448 = vector.broadcast %cst_100 : f32 to vector<8x128xf32>
    %449 = arith.addf %448, %447 : vector<8x128xf32>
    %450 = arith.divf %448, %449 : vector<8x128xf32>
    %451 = vector.extract_strided_slice %413 {offsets = [0, 256], sizes = [8, 128], strides = [1, 1]} : vector<8x512xf32> to vector<8x128xf32>
    %452 = math.tanh %451 : vector<8x128xf32>
    %453 = vector.extract_strided_slice %413 {offsets = [0, 384], sizes = [8, 128], strides = [1, 1]} : vector<8x512xf32> to vector<8x128xf32>
    %454 = arith.negf %453 : vector<8x128xf32>
    %455 = math.exp %454 : vector<8x128xf32>
    %cst_101 = arith.constant 1.000000e+00 : f32
    %456 = vector.broadcast %cst_101 : f32 to vector<8x128xf32>
    %457 = arith.addf %456, %455 : vector<8x128xf32>
    %458 = arith.divf %456, %457 : vector<8x128xf32>
    %459 = arith.mulf %450, %396 : vector<8x128xf32>
    %460 = arith.mulf %444, %452 : vector<8x128xf32>
    %461 = arith.addf %459, %460 : vector<8x128xf32>
    %462 = math.tanh %461 : vector<8x128xf32>
    %463 = arith.mulf %458, %462 : vector<8x128xf32>
    %c7_i32_102 = arith.constant 7 : i32
    %464 = arith.index_cast %c7_i32_102 : i32 to index
    %c0_103 = arith.constant 0 : index
    %c0_104 = arith.constant 0 : index
    %465 = vector.load %arg2[%464, %c0_103, %c0_104] : memref<8x8x512xbf16, #tpu.memory_space<vmem>>, vector<1x8x512xbf16>
    %466 = vector.shape_cast %465 : vector<1x8x512xbf16> to vector<8x512xbf16>
    %467 = arith.extf %466 : vector<8x512xbf16> to vector<8x512xf32>
    %468 = arith.truncf %438 : vector<8x128xf32> to vector<8x128xbf16>
    %cst_105 = arith.constant dense<0.000000e+00> : vector<8x512xf32>
    %469 = tpu.matmul %468, %3, %cst_105 {dimension_numbers = #tpu.dot_dimension_numbers<[1], [0], [0], [1], [0, 0, 1, 1], [], []>} : vector<8x128xbf16>, vector<128x512xbf16>, vector<8x512xf32> -> vector<8x512xf32>
    %470 = arith.addf %467, %469 : vector<8x512xf32>
    %c7_i32_106 = arith.constant 7 : i32
    %471 = arith.subi %c7_i32_106, %c7_i32_102 : i32
    %472 = arith.index_cast %471 : i32 to index
    %c0_107 = arith.constant 0 : index
    %c0_108 = arith.constant 0 : index
    %473 = vector.load %arg3[%472, %c0_107, %c0_108] : memref<8x8x512xbf16, #tpu.memory_space<vmem>>, vector<1x8x512xbf16>
    %474 = vector.shape_cast %473 : vector<1x8x512xbf16> to vector<8x512xbf16>
    %475 = arith.extf %474 : vector<8x512xbf16> to vector<8x512xf32>
    %476 = arith.truncf %463 : vector<8x128xf32> to vector<8x128xbf16>
    %cst_109 = arith.constant dense<0.000000e+00> : vector<8x512xf32>
    %477 = tpu.matmul %476, %4, %cst_109 {dimension_numbers = #tpu.dot_dimension_numbers<[1], [0], [0], [1], [0, 0, 1, 1], [], []>} : vector<8x128xbf16>, vector<128x512xbf16>, vector<8x512xf32> -> vector<8x512xf32>
    %478 = arith.addf %475, %477 : vector<8x512xf32>
    %479 = vector.extract_strided_slice %470 {offsets = [0, 0], sizes = [8, 128], strides = [1, 1]} : vector<8x512xf32> to vector<8x128xf32>
    %480 = arith.negf %479 : vector<8x128xf32>
    %481 = math.exp %480 : vector<8x128xf32>
    %cst_110 = arith.constant 1.000000e+00 : f32
    %482 = vector.broadcast %cst_110 : f32 to vector<8x128xf32>
    %483 = arith.addf %482, %481 : vector<8x128xf32>
    %484 = arith.divf %482, %483 : vector<8x128xf32>
    %485 = vector.extract_strided_slice %470 {offsets = [0, 128], sizes = [8, 128], strides = [1, 1]} : vector<8x512xf32> to vector<8x128xf32>
    %486 = arith.negf %485 : vector<8x128xf32>
    %487 = math.exp %486 : vector<8x128xf32>
    %cst_111 = arith.constant 1.000000e+00 : f32
    %488 = vector.broadcast %cst_111 : f32 to vector<8x128xf32>
    %489 = arith.addf %488, %487 : vector<8x128xf32>
    %490 = arith.divf %488, %489 : vector<8x128xf32>
    %491 = vector.extract_strided_slice %470 {offsets = [0, 256], sizes = [8, 128], strides = [1, 1]} : vector<8x512xf32> to vector<8x128xf32>
    %492 = math.tanh %491 : vector<8x128xf32>
    %493 = vector.extract_strided_slice %470 {offsets = [0, 384], sizes = [8, 128], strides = [1, 1]} : vector<8x512xf32> to vector<8x128xf32>
    %494 = arith.negf %493 : vector<8x128xf32>
    %495 = math.exp %494 : vector<8x128xf32>
    %cst_112 = arith.constant 1.000000e+00 : f32
    %496 = vector.broadcast %cst_112 : f32 to vector<8x128xf32>
    %497 = arith.addf %496, %495 : vector<8x128xf32>
    %498 = arith.divf %496, %497 : vector<8x128xf32>
    %499 = arith.mulf %490, %436 : vector<8x128xf32>
    %500 = arith.mulf %484, %492 : vector<8x128xf32>
    %501 = arith.addf %499, %500 : vector<8x128xf32>
    %502 = math.tanh %501 : vector<8x128xf32>
    %503 = arith.mulf %498, %502 : vector<8x128xf32>
    %504 = vector.extract_strided_slice %478 {offsets = [0, 0], sizes = [8, 128], strides = [1, 1]} : vector<8x512xf32> to vector<8x128xf32>
    %505 = arith.negf %504 : vector<8x128xf32>
    %506 = math.exp %505 : vector<8x128xf32>
    %cst_113 = arith.constant 1.000000e+00 : f32
    %507 = vector.broadcast %cst_113 : f32 to vector<8x128xf32>
    %508 = arith.addf %507, %506 : vector<8x128xf32>
    %509 = arith.divf %507, %508 : vector<8x128xf32>
    %510 = vector.extract_strided_slice %478 {offsets = [0, 128], sizes = [8, 128], strides = [1, 1]} : vector<8x512xf32> to vector<8x128xf32>
    %511 = arith.negf %510 : vector<8x128xf32>
    %512 = math.exp %511 : vector<8x128xf32>
    %cst_114 = arith.constant 1.000000e+00 : f32
    %513 = vector.broadcast %cst_114 : f32 to vector<8x128xf32>
    %514 = arith.addf %513, %512 : vector<8x128xf32>
    %515 = arith.divf %513, %514 : vector<8x128xf32>
    %516 = vector.extract_strided_slice %478 {offsets = [0, 256], sizes = [8, 128], strides = [1, 1]} : vector<8x512xf32> to vector<8x128xf32>
    %517 = math.tanh %516 : vector<8x128xf32>
    %518 = vector.extract_strided_slice %478 {offsets = [0, 384], sizes = [8, 128], strides = [1, 1]} : vector<8x512xf32> to vector<8x128xf32>
    %519 = arith.negf %518 : vector<8x128xf32>
    %520 = math.exp %519 : vector<8x128xf32>
    %cst_115 = arith.constant 1.000000e+00 : f32
    %521 = vector.broadcast %cst_115 : f32 to vector<8x128xf32>
    %522 = arith.addf %521, %520 : vector<8x128xf32>
    %523 = arith.divf %521, %522 : vector<8x128xf32>
    %524 = arith.mulf %515, %461 : vector<8x128xf32>
    %525 = arith.mulf %509, %517 : vector<8x128xf32>
    %526 = arith.addf %524, %525 : vector<8x128xf32>
    %527 = math.tanh %526 : vector<8x128xf32>
    %528 = arith.mulf %523, %527 : vector<8x128xf32>
    %c8_i32 = arith.constant 8 : i32
    %c0_116 = arith.constant 0 : index
    %c0_117 = arith.constant 0 : index
    %529 = vector.load %arg7[%c0_116, %c0_117] : memref<8x128xf32, #tpu.memory_space<vmem>>, vector<8x128xf32>
    tpu.vector_store %arg7[%c0_116, %c0_117], %503 {strides = array<i32>} : memref<8x128xf32, #tpu.memory_space<vmem>>, vector<8x128xf32>,
    %c0_118 = arith.constant 0 : index
    %c0_119 = arith.constant 0 : index
    %530 = vector.load %arg8[%c0_118, %c0_119] : memref<8x128xf32, #tpu.memory_space<vmem>>, vector<8x128xf32>
    tpu.vector_store %arg8[%c0_118, %c0_119], %501 {strides = array<i32>} : memref<8x128xf32, #tpu.memory_space<vmem>>, vector<8x128xf32>,
    %c0_120 = arith.constant 0 : index
    %c0_121 = arith.constant 0 : index
    %531 = vector.load %arg9[%c0_120, %c0_121] : memref<8x128xf32, #tpu.memory_space<vmem>>, vector<8x128xf32>
    tpu.vector_store %arg9[%c0_120, %c0_121], %528 {strides = array<i32>} : memref<8x128xf32, #tpu.memory_space<vmem>>, vector<8x128xf32>,
    %c0_122 = arith.constant 0 : index
    %c0_123 = arith.constant 0 : index
    %532 = vector.load %arg10[%c0_122, %c0_123] : memref<8x128xf32, #tpu.memory_space<vmem>>, vector<8x128xf32>
    tpu.vector_store %arg10[%c0_122, %c0_123], %526 {strides = array<i32>} : memref<8x128xf32, #tpu.memory_space<vmem>>, vector<8x128xf32>,
    %c0_i32_124 = arith.constant 0 : i32
    %533 = arith.cmpi eq, %arg1, %c0_i32_124 : i32
    %534 = arith.extui %533 : i1 to i32
    %c0_i32_125 = arith.constant 0 : i32
    %535 = arith.cmpi ne, %534, %c0_i32_125 : i32
    scf.if %535 {
      %c0_126 = arith.constant 0 : index
      %c0_127 = arith.constant 0 : index
      %536 = vector.load %arg6[%c0_126, %c0_127] : memref<8x256xf32, #tpu.memory_space<vmem>>, vector<8x128xf32>
      tpu.vector_store %arg6[%c0_126, %c0_127], %503 {strides = array<i32>} : memref<8x256xf32, #tpu.memory_space<vmem>>, vector<8x128xf32>,
      %c0_128 = arith.constant 0 : index
      %c128 = arith.constant 128 : index
      %537 = vector.load %arg6[%c0_128, %c128] : memref<8x256xf32, #tpu.memory_space<vmem>>, vector<8x128xf32>
      tpu.vector_store %arg6[%c0_128, %c128], %528 {strides = array<i32>} : memref<8x256xf32, #tpu.memory_space<vmem>>, vector<8x128xf32>,
    } else {
    }
    return
  }
  func.func @transform_0(%arg0: i32, %arg1: i32) -> (i32, i32, i32) {
    %c0_i32 = arith.constant 0 : i32
    %c0_i32_0 = arith.constant 0 : i32
    return %arg1, %arg0, %c0_i32 : i32, i32, i32
  }
  func.func @transform_1(%arg0: i32, %arg1: i32) -> (i32, i32, i32) {
    %c0_i32 = arith.constant 0 : i32
    %0 = arith.subi %c0_i32, %arg1 : i32
    %c1_i32 = arith.constant 1 : i32
    %c0_i32_0 = arith.constant 0 : i32
    return %0, %arg0, %c1_i32 : i32, i32, i32
  }
  func.func @transform_2(%arg0: i32, %arg1: i32) -> (i32, i32) {
    %c0_i32 = arith.constant 0 : i32
    %c0_i32_0 = arith.constant 0 : i32
    %c0_i32_1 = arith.constant 0 : i32
    return %c0_i32, %c0_i32_0 : i32, i32
  }
  func.func @transform_3(%arg0: i32, %arg1: i32) -> (i32, i32) {
    %c0_i32 = arith.constant 0 : i32
    %c0_i32_0 = arith.constant 0 : i32
    %c0_i32_1 = arith.constant 0 : i32
    return %c0_i32, %c0_i32_0 : i32, i32
  }
  func.func @transform_4(%arg0: i32, %arg1: i32) -> (i32, i32) {
    %c0_i32 = arith.constant 0 : i32
    %c0_i32_0 = arith.constant 0 : i32
    return %arg0, %c0_i32 : i32, i32
  }
}

</mosaic_0001>

<llo_original>
// kernel: bi_rnn_encode.2
$region0: #{bi_rnn_encode.2}
  #allocation0 [shape = 'u32[]', space=smem, size = 0x4, offset = 0x4, fixed_abs, tag = 'smem constant byte address 0x4 - core index']
  #allocation1 [shape = 'u32[144,128]{1,0:T(1,128)}', space=vmem, size = 0x12000, scoped, tag = 'internal scratch']
  %s0 = inlined_call_operand.vmem [shape: bf16[64,16], index: 0, kind: input, shape index: {}]
  %s1 = inlined_call_operand.vmem [shape: bf16[16,1024], index: 1, kind: input, shape index: {}]
  %s2 = inlined_call_operand.vmem [shape: f32[1,1024], index: 2, kind: input, shape index: {}]
  %s3 = inlined_call_operand.vmem [shape: bf16[64,1024], index: 3, kind: output, shape index: {}]
  %s4 = sld [smem:[#allocation0]]
  $region22: #{bi_rnn_encode.2} parent=0
    _
  %s6 = ssub.s32 1, %s4
  %s7 = scalar_select 0, %s6, %s4
  // Predicated region
  $region2: #{bi_rnn_encode.2} parent=0 // pred_check
    _
  $region3: #{bi_rnn_encode.2} parent=0 // pred_check_branch
    %9 = sbr.rel (0) target = $region5
  $region4: #{bi_rnn_encode.2} parent=0 // pred_region
    _
  $region5: #{bi_rnn_encode.2} parent=0 // pred_fallthru
    _
  // Predicated region
  $region6: #{bi_rnn_encode.2} parent=0 // pred_check
    _
  $region7: #{bi_rnn_encode.2} parent=0 // pred_check_branch
    %11 = sbr.rel (0) target = $region9
  $region8: #{bi_rnn_encode.2} parent=0 // pred_region
    _
  $region9: #{bi_rnn_encode.2} parent=0 // pred_fallthru
    _
  // Predicated region
  $region10: #{bi_rnn_encode.2} parent=0 // pred_check
    _
  $region11: #{bi_rnn_encode.2} parent=0 // pred_check_branch
    %13 = sbr.rel (0) target = $region13
  $region12: #{bi_rnn_encode.2} parent=0 // pred_region
    _
  $region13: #{bi_rnn_encode.2} parent=0 // pred_fallthru
    _
  %v15 = vld [vmem:[%s0] sm:$0xf]
  %v16 = vld [vmem:[%s0 + $0x4] sm:$0xf]
  %v17 = vld [vmem:[%s0 + $0x8] sm:$0xf]
  %v18 = vld [vmem:[%s0 + $0xc] sm:$0xf]
  %v19 = vld [vmem:[%s0 + $0x10] sm:$0xf]
  %v20 = vld [vmem:[%s0 + $0x14] sm:$0xf]
  %v21 = vld [vmem:[%s0 + $0x18] sm:$0xf]
  %v22 = vld [vmem:[%s0 + $0x1c] sm:$0xf]
  %v23 = vld [vmem:[%s1] sm:$0xff]
  %v24 = vld [vmem:[%s1 + $0x8] sm:$0xff]
  %v25 = vld [vmem:[%s1 + $0x10] sm:$0xff]
  %v26 = vld [vmem:[%s1 + $0x18] sm:$0xff]
  %v27 = vld [vmem:[%s1 + $0x20] sm:$0xff]
  %v28 = vld [vmem:[%s1 + $0x28] sm:$0xff]
  %v29 = vld [vmem:[%s1 + $0x30] sm:$0xff]
  %v30 = vld [vmem:[%s1 + $0x38] sm:$0xff]
  %v31 = vld [vmem:[%s2] sm:$0xff]
  %v33 = vlaneseq
  %v34 = vshrl.u32 %v33, 7
  %v35 = vsub.s32 0, %v34
  %v36 = vrot.slane %v31, %v35
  %v37 = vlaneseq
  %v38 = vshrl.u32 %v37, 7
  %v39 = vsub.s32 1, %v38
  %v40 = vrot.slane %v31, %v39
  %v41 = vlaneseq
  %v42 = vshrl.u32 %v41, 7
  %v43 = vsub.s32 2, %v42
  %v44 = vrot.slane %v31, %v43
  %v45 = vlaneseq
  %v46 = vshrl.u32 %v45, 7
  %v47 = vsub.s32 3, %v46
  %v48 = vrot.slane %v31, %v47
  %v49 = vlaneseq
  %v50 = vshrl.u32 %v49, 7
  %v51 = vsub.s32 4, %v50
  %v52 = vrot.slane %v31, %v51
  %v53 = vlaneseq
  %v54 = vshrl.u32 %v53, 7
  %v55 = vsub.s32 5, %v54
  %v56 = vrot.slane %v31, %v55
  %v57 = vlaneseq
  %v58 = vshrl.u32 %v57, 7
  %v59 = vsub.s32 6, %v58
  %v60 = vrot.slane %v31, %v59
  %v61 = vlaneseq
  %v62 = vshrl.u32 %v61, 7
  %v63 = vsub.s32 7, %v62
  %v64 = vrot.slane %v31, %v63
  %v81 = vunpack.c.l.b16 %v15
  %v82 = vunpack.c.l.b16 %v16
  %v83 = vunpack.c.l.b16 %v17
  %v84 = vunpack.c.l.b16 %v18
  %v85 = vunpack.c.l.b16 %v19
  %v86 = vunpack.c.l.b16 %v20
  %v87 = vunpack.c.l.b16 %v21
  %v88 = vunpack.c.l.b16 %v22
  %v89 = vpack.c.b16 %v82, %v81
  %v90 = vpack.c.b16 %v84, %v83
  %v91 = vpack.c.b16 %v86, %v85
  %v92 = vpack.c.b16 %v88, %v87
  %v101 = vunpack.c.l.b16 %v23
  %v102 = vunpack.c.h.b16 %v23
  %v103 = vunpack.c.l.b16 %v24
  %v104 = vunpack.c.h.b16 %v24
  %v105 = vunpack.c.l.b16 %v25
  %v106 = vunpack.c.h.b16 %v25
  %v107 = vunpack.c.l.b16 %v26
  %v108 = vunpack.c.h.b16 %v26
  %v109 = vunpack.c.l.b16 %v27
  %v110 = vunpack.c.h.b16 %v27
  %v111 = vunpack.c.l.b16 %v28
  %v112 = vunpack.c.h.b16 %v28
  %v113 = vunpack.c.l.b16 %v29
  %v114 = vunpack.c.h.b16 %v29
  %v115 = vunpack.c.l.b16 %v30
  %v116 = vunpack.c.h.b16 %v30
  %v117 = vpack.c.b16 %v109, %v101
  %v118 = vpack.c.b16 %v110, %v102
  %v119 = vpack.c.b16 %v111, %v103
  %v120 = vpack.c.b16 %v112, %v104
  %v121 = vpack.c.b16 %v113, %v105
  %v122 = vpack.c.b16 %v114, %v106
  %v123 = vpack.c.b16 %v115, %v107
  %v124 = vpack.c.b16 %v116, %v108
  %vm133 = vcmask 130048
  %v135 = vsel %vm133, %v89, 0
  %v138 = vsel %vm133, %v90, 0
  %v141 = vsel %vm133, %v91, 0
  %v144 = vsel %vm133, %v92, 0
  %146 = vmatprep.subr.bf16.mxu0 %v118
  %147 = vmatpush1.bf16.msra.mxu0 %v117
  %148 = vmatprep.subr.bf16.mxu0 0
  %149 = vmatpush1.bf16.msra.mxu0 0
  %150 = vmatprep.subr.bf16.mxu0 0
  %151 = vmatpush1.bf16.msra.mxu0 0
  %152 = vmatprep.subr.bf16.mxu0 0
  %153 = vmatpush1.bf16.msra.mxu0 0
  %154 = vmatprep.subr.bf16.mxu0 0
  %155 = vmatpush1.bf16.msra.mxu0 0
  %156 = vmatprep.subr.bf16.mxu0 0
  %157 = vmatpush1.bf16.msra.mxu0 0
  %158 = vmatprep.subr.bf16.mxu0 0
  %159 = vmatpush1.bf16.msra.mxu0 0
  %160 = vmatprep.subr.bf16.mxu0 0
  %161 = vmatpush1.bf16.msra.mxu0 0
  %162 = vmatprep.subr.bf16.mxu0 0
  %163 = vmatpush1.bf16.msra.mxu0 0
  %164 = vmatprep.subr.bf16.mxu0 0
  %165 = vmatpush1.bf16.msra.mxu0 0
  %166 = vmatprep.subr.bf16.mxu0 0
  %167 = vmatpush1.bf16.msra.mxu0 0
  %168 = vmatprep.subr.bf16.mxu0 0
  %169 = vmatpush1.bf16.msra.mxu0 0
  %170 = vmatprep.subr.bf16.mxu0 0
  %171 = vmatpush1.bf16.msra.mxu0 0
  %172 = vmatprep.subr.bf16.mxu0 0
  %173 = vmatpush1.bf16.msra.mxu0 0
  %174 = vmatprep.subr.bf16.mxu0 0
  %175 = vmatpush1.bf16.msra.mxu0 0
  %176 = vmatprep.subr.bf16.mxu0 0
  %177 = vmatpush1.bf16.msra.mxu0 0
  %178 = vmatprep.mubr.bf16.mxu0 0
  %179 = vmatmul.mubr.bf16.gmra.mrb[0].mxu0 %v135
  %v180 = vpop.f32.mrb[0].mxu0
  %v181 = vadd.f32 %v36, %v180
  %v182 = vpop.f32.mrb[0].mxu0
  %v183 = vadd.f32 %v40, %v182
  %v184 = vpop.f32.mrb[0].mxu0
  %v185 = vadd.f32 %v36, %v184
  %v186 = vpop.f32.mrb[0].mxu0
  %v187 = vadd.f32 %v40, %v186
  %188 = vmatprep.mubr.bf16.mxu0 0
  %189 = vmatmul.mubr.bf16.gmra.mrb[0].mxu0 %v138
  %v190 = vpop.f32.mrb[0].mxu0
  %v191 = vadd.f32 %v36, %v190
  %v192 = vpop.f32.mrb[0].mxu0
  %v193 = vadd.f32 %v40, %v192
  %v194 = vpop.f32.mrb[0].mxu0
  %v195 = vadd.f32 %v36, %v194
  %v196 = vpop.f32.mrb[0].mxu0
  %v197 = vadd.f32 %v40, %v196
  %198 = vmatprep.mubr.bf16.mxu0 0
  %199 = vmatmul.mubr.bf16.gmra.mrb[0].mxu0 %v141
  %v200 = vpop.f32.mrb[0].mxu0
  %v201 = vadd.f32 %v36, %v200
  %v202 = vpop.f32.mrb[0].mxu0
  %v203 = vadd.f32 %v40, %v202
  %v204 = vpop.f32.mrb[0].mxu0
  %v205 = vadd.f32 %v36, %v204
  %v206 = vpop.f32.mrb[0].mxu0
  %v207 = vadd.f32 %v40, %v206
  %208 = vmatprep.mubr.bf16.mxu0 0
  %209 = vmatmul.mubr.bf16.gmra.mrb[0].mxu0 %v144
  %v210 = vpop.f32.mrb[0].mxu0
  %v211 = vadd.f32 %v36, %v210
  %v212 = vpop.f32.mrb[0].mxu0
  %v213 = vadd.f32 %v40, %v212
  %v214 = vpop.f32.mrb[0].mxu0
  %v215 = vadd.f32 %v36, %v214
  %v216 = vpop.f32.mrb[0].mxu0
  %v217 = vadd.f32 %v40, %v216
  %218 = vdwg.mxu0
  %219 = vmatprep.subr.bf16.mxu0 %v120
  %220 = vmatpush1.bf16.msra.mxu0 %v119
  %221 = vmatprep.subr.bf16.mxu0 0
  %222 = vmatpush1.bf16.msra.mxu0 0
  %223 = vmatprep.subr.bf16.mxu0 0
  %224 = vmatpush1.bf16.msra.mxu0 0
  %225 = vmatprep.subr.bf16.mxu0 0
  %226 = vmatpush1.bf16.msra.mxu0 0
  %227 = vmatprep.subr.bf16.mxu0 0
  %228 = vmatpush1.bf16.msra.mxu0 0
  %229 = vmatprep.subr.bf16.mxu0 0
  %230 = vmatpush1.bf16.msra.mxu0 0
  %231 = vmatprep.subr.bf16.mxu0 0
  %232 = vmatpush1.bf16.msra.mxu0 0
  %233 = vmatprep.subr.bf16.mxu0 0
  %234 = vmatpush1.bf16.msra.mxu0 0
  %235 = vmatprep.subr.bf16.mxu0 0
  %236 = vmatpush1.bf16.msra.mxu0 0
  %237 = vmatprep.subr.bf16.mxu0 0
  %238 = vmatpush1.bf16.msra.mxu0 0
  %239 = vmatprep.subr.bf16.mxu0 0
  %240 = vmatpush1.bf16.msra.mxu0 0
  %241 = vmatprep.subr.bf16.mxu0 0
  %242 = vmatpush1.bf16.msra.mxu0 0
  %243 = vmatprep.subr.bf16.mxu0 0
  %244 = vmatpush1.bf16.msra.mxu0 0
  %245 = vmatprep.subr.bf16.mxu0 0
  %246 = vmatpush1.bf16.msra.mxu0 0
  %247 = vmatprep.subr.bf16.mxu0 0
  %248 = vmatpush1.bf16.msra.mxu0 0
  %249 = vmatprep.subr.bf16.mxu0 0
  %250 = vmatpush1.bf16.msra.mxu0 0
  %251 = vmatprep.mubr.bf16.mxu0 0
  %252 = vmatmul.mubr.bf16.gmra.mrb[0].mxu0 %v135
  %v253 = vpop.f32.mrb[0].mxu0
  %v254 = vadd.f32 %v44, %v253
  %v255 = vpop.f32.mrb[0].mxu0
  %v256 = vadd.f32 %v48, %v255
  %v257 = vpop.f32.mrb[0].mxu0
  %v258 = vadd.f32 %v44, %v257
  %v259 = vpop.f32.mrb[0].mxu0
  %v260 = vadd.f32 %v48, %v259
  %261 = vmatprep.mubr.bf16.mxu0 0
  %262 = vmatmul.mubr.bf16.gmra.mrb[0].mxu0 %v138
  %v263 = vpop.f32.mrb[0].mxu0
  %v264 = vadd.f32 %v44, %v263
  %v265 = vpop.f32.mrb[0].mxu0
  %v266 = vadd.f32 %v48, %v265
  %v267 = vpop.f32.mrb[0].mxu0
  %v268 = vadd.f32 %v44, %v267
  %v269 = vpop.f32.mrb[0].mxu0
  %v270 = vadd.f32 %v48, %v269
  %271 = vmatprep.mubr.bf16.mxu0 0
  %272 = vmatmul.mubr.bf16.gmra.mrb[0].mxu0 %v141
  %v273 = vpop.f32.mrb[0].mxu0
  %v274 = vadd.f32 %v44, %v273
  %v275 = vpop.f32.mrb[0].mxu0
  %v276 = vadd.f32 %v48, %v275
  %v277 = vpop.f32.mrb[0].mxu0
  %v278 = vadd.f32 %v44, %v277
  %v279 = vpop.f32.mrb[0].mxu0
  %v280 = vadd.f32 %v48, %v279
  %281 = vmatprep.mubr.bf16.mxu0 0
  %282 = vmatmul.mubr.bf16.gmra.mrb[0].mxu0 %v144
  %v283 = vpop.f32.mrb[0].mxu0
  %v284 = vadd.f32 %v44, %v283
  %v285 = vpop.f32.mrb[0].mxu0
  %v286 = vadd.f32 %v48, %v285
  %v287 = vpop.f32.mrb[0].mxu0
  %v288 = vadd.f32 %v44, %v287
  %v289 = vpop.f32.mrb[0].mxu0
  %v290 = vadd.f32 %v48, %v289
  %291 = vdwg.mxu0
  %292 = vmatprep.subr.bf16.mxu0 %v122
  %293 = vmatpush1.bf16.msra.mxu0 %v121
  %294 = vmatprep.subr.bf16.mxu0 0
  %295 = vmatpush1.bf16.msra.mxu0 0
  %296 = vmatprep.subr.bf16.mxu0 0
  %297 = vmatpush1.bf16.msra.mxu0 0
  %298 = vmatprep.subr.bf16.mxu0 0
  %299 = vmatpush1.bf16.msra.mxu0 0
  %300 = vmatprep.subr.bf16.mxu0 0
  %301 = vmatpush1.bf16.msra.mxu0 0
  %302 = vmatprep.subr.bf16.mxu0 0
  %303 = vmatpush1.bf16.msra.mxu0 0
  %304 = vmatprep.subr.bf16.mxu0 0
  %305 = vmatpush1.bf16.msra.mxu0 0
  %306 = vmatprep.subr.bf16.mxu0 0
  %307 = vmatpush1.bf16.msra.mxu0 0
  %308 = vmatprep.subr.bf16.mxu0 0
  %309 = vmatpush1.bf16.msra.mxu0 0
  %310 = vmatprep.subr.bf16.mxu0 0
  %311 = vmatpush1.bf16.msra.mxu0 0
  %312 = vmatprep.subr.bf16.mxu0 0
  %313 = vmatpush1.bf16.msra.mxu0 0
  %314 = vmatprep.subr.bf16.mxu0 0
  %315 = vmatpush1.bf16.msra.mxu0 0
  %316 = vmatprep.subr.bf16.mxu0 0
  %317 = vmatpush1.bf16.msra.mxu0 0
  %318 = vmatprep.subr.bf16.mxu0 0
  %319 = vmatpush1.bf16.msra.mxu0 0
  %320 = vmatprep.subr.bf16.mxu0 0
  %321 = vmatpush1.bf16.msra.mxu0 0
  %322 = vmatprep.subr.bf16.mxu0 0
  %323 = vmatpush1.bf16.msra.mxu0 0
  %324 = vmatprep.mubr.bf16.mxu0 0
  %325 = vmatmul.mubr.bf16.gmra.mrb[0].mxu0 %v135
  %v326 = vpop.f32.mrb[0].mxu0
  %v327 = vadd.f32 %v52, %v326
  %v328 = vpop.f32.mrb[0].mxu0
  %v329 = vadd.f32 %v56, %v328
  %v330 = vpop.f32.mrb[0].mxu0
  %v331 = vadd.f32 %v52, %v330
  %v332 = vpop.f32.mrb[0].mxu0
  %v333 = vadd.f32 %v56, %v332
  %334 = vmatprep.mubr.bf16.mxu0 0
  %335 = vmatmul.mubr.bf16.gmra.mrb[0].mxu0 %v138
  %v336 = vpop.f32.mrb[0].mxu0
  %v337 = vadd.f32 %v52, %v336
  %v338 = vpop.f32.mrb[0].mxu0
  %v339 = vadd.f32 %v56, %v338
  %v340 = vpop.f32.mrb[0].mxu0
  %v341 = vadd.f32 %v52, %v340
  %v342 = vpop.f32.mrb[0].mxu0
  %v343 = vadd.f32 %v56, %v342
  %344 = vmatprep.mubr.bf16.mxu0 0
  %345 = vmatmul.mubr.bf16.gmra.mrb[0].mxu0 %v141
  %v346 = vpop.f32.mrb[0].mxu0
  %v347 = vadd.f32 %v52, %v346
  %v348 = vpop.f32.mrb[0].mxu0
  %v349 = vadd.f32 %v56, %v348
  %v350 = vpop.f32.mrb[0].mxu0
  %v351 = vadd.f32 %v52, %v350
  %v352 = vpop.f32.mrb[0].mxu0
  %v353 = vadd.f32 %v56, %v352
  %354 = vmatprep.mubr.bf16.mxu0 0
  %355 = vmatmul.mubr.bf16.gmra.mrb[0].mxu0 %v144
  %v356 = vpop.f32.mrb[0].mxu0
  %v357 = vadd.f32 %v52, %v356
  %v358 = vpop.f32.mrb[0].mxu0
  %v359 = vadd.f32 %v56, %v358
  %v360 = vpop.f32.mrb[0].mxu0
  %v361 = vadd.f32 %v52, %v360
  %v362 = vpop.f32.mrb[0].mxu0
  %v363 = vadd.f32 %v56, %v362
  %364 = vdwg.mxu0
  %365 = vmatprep.subr.bf16.mxu0 %v124
  %366 = vmatpush1.bf16.msra.mxu0 %v123
  %367 = vmatprep.subr.bf16.mxu0 0
  %368 = vmatpush1.bf16.msra.mxu0 0
  %369 = vmatprep.subr.bf16.mxu0 0
  %370 = vmatpush1.bf16.msra.mxu0 0
  %371 = vmatprep.subr.bf16.mxu0 0
  %372 = vmatpush1.bf16.msra.mxu0 0
  %373 = vmatprep.subr.bf16.mxu0 0
  %374 = vmatpush1.bf16.msra.mxu0 0
  %375 = vmatprep.subr.bf16.mxu0 0
  %376 = vmatpush1.bf16.msra.mxu0 0
  %377 = vmatprep.subr.bf16.mxu0 0
  %378 = vmatpush1.bf16.msra.mxu0 0
  %379 = vmatprep.subr.bf16.mxu0 0
  %380 = vmatpush1.bf16.msra.mxu0 0
  %381 = vmatprep.subr.bf16.mxu0 0
  %382 = vmatpush1.bf16.msra.mxu0 0
  %383 = vmatprep.subr.bf16.mxu0 0
  %384 = vmatpush1.bf16.msra.mxu0 0
  %385 = vmatprep.subr.bf16.mxu0 0
  %386 = vmatpush1.bf16.msra.mxu0 0
  %387 = vmatprep.subr.bf16.mxu0 0
  %388 = vmatpush1.bf16.msra.mxu0 0
  %389 = vmatprep.subr.bf16.mxu0 0
  %390 = vmatpush1.bf16.msra.mxu0 0
  %391 = vmatprep.subr.bf16.mxu0 0
  %392 = vmatpush1.bf16.msra.mxu0 0
  %393 = vmatprep.subr.bf16.mxu0 0
  %394 = vmatpush1.bf16.msra.mxu0 0
  %395 = vmatprep.subr.bf16.mxu0 0
  %396 = vmatpush1.bf16.msra.mxu0 0
  %397 = vmatprep.mubr.bf16.mxu0 0
  %398 = vmatmul.mubr.bf16.gmra.mrb[0].mxu0 %v135
  %v399 = vpop.f32.mrb[0].mxu0
  %v400 = vadd.f32 %v60, %v399
  %v401 = vpop.f32.mrb[0].mxu0
  %v402 = vadd.f32 %v64, %v401
  %v403 = vpop.f32.mrb[0].mxu0
  %v404 = vadd.f32 %v60, %v403
  %v405 = vpop.f32.mrb[0].mxu0
  %v406 = vadd.f32 %v64, %v405
  %407 = vmatprep.mubr.bf16.mxu0 0
  %408 = vmatmul.mubr.bf16.gmra.mrb[0].mxu0 %v138
  %v409 = vpop.f32.mrb[0].mxu0
  %v410 = vadd.f32 %v60, %v409
  %v411 = vpop.f32.mrb[0].mxu0
  %v412 = vadd.f32 %v64, %v411
  %v413 = vpop.f32.mrb[0].mxu0
  %v414 = vadd.f32 %v60, %v413
  %v415 = vpop.f32.mrb[0].mxu0
  %v416 = vadd.f32 %v64, %v415
  %417 = vmatprep.mubr.bf16.mxu0 0
  %418 = vmatmul.mubr.bf16.gmra.mrb[0].mxu0 %v141
  %v419 = vpop.f32.mrb[0].mxu0
  %v420 = vadd.f32 %v60, %v419
  %v421 = vpop.f32.mrb[0].mxu0
  %v422 = vadd.f32 %v64, %v421
  %v423 = vpop.f32.mrb[0].mxu0
  %v424 = vadd.f32 %v60, %v423
  %v425 = vpop.f32.mrb[0].mxu0
  %v426 = vadd.f32 %v64, %v425
  %427 = vmatprep.mubr.bf16.mxu0 0
  %428 = vmatmul.mubr.bf16.gmra.mrb[0].mxu0 %v144
  %v429 = vpop.f32.mrb[0].mxu0
  %v430 = vadd.f32 %v60, %v429
  %v431 = vpop.f32.mrb[0].mxu0
  %v432 = vadd.f32 %v64, %v431
  %v433 = vpop.f32.mrb[0].mxu0
  %v434 = vadd.f32 %v60, %v433
  %v435 = vpop.f32.mrb[0].mxu0
  %v436 = vadd.f32 %v64, %v435
  %437 = vdwg.mxu0
  %v438 = vpack.c.bf16 %v185, %v181
  %v439 = vpack.c.bf16 %v187, %v183
  %v440 = vpack.c.bf16 %v258, %v254
  %v441 = vpack.c.bf16 %v260, %v256
  %v442 = vpack.c.bf16 %v331, %v327
  %v443 = vpack.c.bf16 %v333, %v329
  %v444 = vpack.c.bf16 %v404, %v400
  %v445 = vpack.c.bf16 %v406, %v402
  %v446 = vpack.c.bf16 %v195, %v191
  %v447 = vpack.c.bf16 %v197, %v193
  %v448 = vpack.c.bf16 %v268, %v264
  %v449 = vpack.c.bf16 %v270, %v266
  %v450 = vpack.c.bf16 %v341, %v337
  %v451 = vpack.c.bf16 %v343, %v339
  %v452 = vpack.c.bf16 %v414, %v410
  %v453 = vpack.c.bf16 %v416, %v412
  %v454 = vpack.c.bf16 %v205, %v201
  %v455 = vpack.c.bf16 %v207, %v203
  %v456 = vpack.c.bf16 %v278, %v274
  %v457 = vpack.c.bf16 %v280, %v276
  %v458 = vpack.c.bf16 %v351, %v347
  %v459 = vpack.c.bf16 %v353, %v349
  %v460 = vpack.c.bf16 %v424, %v420
  %v461 = vpack.c.bf16 %v426, %v422
  %v462 = vpack.c.bf16 %v215, %v211
  %v463 = vpack.c.bf16 %v217, %v213
  %v464 = vpack.c.bf16 %v288, %v284
  %v465 = vpack.c.bf16 %v290, %v286
  %v466 = vpack.c.bf16 %v361, %v357
  %v467 = vpack.c.bf16 %v363, %v359
  %v468 = vpack.c.bf16 %v434, %v430
  %v469 = vpack.c.bf16 %v436, %v432
  %v502 = vunpack.c.l.b16 %v438
  %v503 = vunpack.c.l.b16 %v439
  %v504 = vunpack.c.l.b16 %v440
  %v505 = vunpack.c.l.b16 %v441
  %v506 = vunpack.c.l.b16 %v442
  %v507 = vunpack.c.l.b16 %v443
  %v508 = vunpack.c.l.b16 %v444
  %v509 = vunpack.c.l.b16 %v445
  %v510 = vunpack.c.h.b16 %v438
  %v511 = vunpack.c.h.b16 %v439
  %v512 = vunpack.c.h.b16 %v440
  %v513 = vunpack.c.h.b16 %v441
  %v514 = vunpack.c.h.b16 %v442
  %v515 = vunpack.c.h.b16 %v443
  %v516 = vunpack.c.h.b16 %v444
  %v517 = vunpack.c.h.b16 %v445
  %v518 = vunpack.c.l.b16 %v446
  %v519 = vunpack.c.l.b16 %v447
  %v520 = vunpack.c.l.b16 %v448
  %v521 = vunpack.c.l.b16 %v449
  %v522 = vunpack.c.l.b16 %v450
  %v523 = vunpack.c.l.b16 %v451
  %v524 = vunpack.c.l.b16 %v452
  %v525 = vunpack.c.l.b16 %v453
  %v526 = vunpack.c.h.b16 %v446
  %v527 = vunpack.c.h.b16 %v447
  %v528 = vunpack.c.h.b16 %v448
  %v529 = vunpack.c.h.b16 %v449
  %v530 = vunpack.c.h.b16 %v450
  %v531 = vunpack.c.h.b16 %v451
  %v532 = vunpack.c.h.b16 %v452
  %v533 = vunpack.c.h.b16 %v453
  %v534 = vunpack.c.l.b16 %v454
  %v535 = vunpack.c.l.b16 %v455
  %v536 = vunpack.c.l.b16 %v456
  %v537 = vunpack.c.l.b16 %v457
  %v538 = vunpack.c.l.b16 %v458
  %v539 = vunpack.c.l.b16 %v459
  %v540 = vunpack.c.l.b16 %v460
  %v541 = vunpack.c.l.b16 %v461
  %v542 = vunpack.c.h.b16 %v454
  %v543 = vunpack.c.h.b16 %v455
  %v544 = vunpack.c.h.b16 %v456
  %v545 = vunpack.c.h.b16 %v457
  %v546 = vunpack.c.h.b16 %v458
  %v547 = vunpack.c.h.b16 %v459
  %v548 = vunpack.c.h.b16 %v460
  %v549 = vunpack.c.h.b16 %v461
  %v550 = vunpack.c.l.b16 %v462
  %v551 = vunpack.c.l.b16 %v463
  %v552 = vunpack.c.l.b16 %v464
  %v553 = vunpack.c.l.b16 %v465
  %v554 = vunpack.c.l.b16 %v466
  %v555 = vunpack.c.l.b16 %v467
  %v556 = vunpack.c.l.b16 %v468
  %v557 = vunpack.c.l.b16 %v469
  %v558 = vunpack.c.h.b16 %v462
  %v559 = vunpack.c.h.b16 %v463
  %v560 = vunpack.c.h.b16 %v464
  %v561 = vunpack.c.h.b16 %v465
  %v562 = vunpack.c.h.b16 %v466
  %v563 = vunpack.c.h.b16 %v467
  %v564 = vunpack.c.h.b16 %v468
  %v565 = vunpack.c.h.b16 %v469
  %v566 = vpack.c.b16 %v503, %v502
  %v567 = vpack.c.b16 %v505, %v504
  %v568 = vpack.c.b16 %v507, %v506
  %v569 = vpack.c.b16 %v509, %v508
  %v570 = vpack.c.b16 %v511, %v510
  %v571 = vpack.c.b16 %v513, %v512
  %v572 = vpack.c.b16 %v515, %v514
  %v573 = vpack.c.b16 %v517, %v516
  %v574 = vpack.c.b16 %v519, %v518
  %v575 = vpack.c.b16 %v521, %v520
  %v576 = vpack.c.b16 %v523, %v522
  %v577 = vpack.c.b16 %v525, %v524
  %v578 = vpack.c.b16 %v527, %v526
  %v579 = vpack.c.b16 %v529, %v528
  %v580 = vpack.c.b16 %v531, %v530
  %v581 = vpack.c.b16 %v533, %v532
  %v582 = vpack.c.b16 %v535, %v534
  %v583 = vpack.c.b16 %v537, %v536
  %v584 = vpack.c.b16 %v539, %v538
  %v585 = vpack.c.b16 %v541, %v540
  %v586 = vpack.c.b16 %v543, %v542
  %v587 = vpack.c.b16 %v545, %v544
  %v588 = vpack.c.b16 %v547, %v546
  %v589 = vpack.c.b16 %v549, %v548
  %v590 = vpack.c.b16 %v551, %v550
  %v591 = vpack.c.b16 %v553, %v552
  %v592 = vpack.c.b16 %v555, %v554
  %v593 = vpack.c.b16 %v557, %v556
  %v594 = vpack.c.b16 %v559, %v558
  %v595 = vpack.c.b16 %v561, %v560
  %v596 = vpack.c.b16 %v563, %v562
  %v597 = vpack.c.b16 %v565, %v564
  %630 = vst [vmem:[%s3] sm:$0xff] %v566
  %631 = vst [vmem:[%s3 + $0x8] sm:$0xff] %v567
  %632 = vst [vmem:[%s3 + $0x10] sm:$0xff] %v568
  %633 = vst [vmem:[%s3 + $0x18] sm:$0xff] %v569
  %634 = vst [vmem:[%s3 + $0x20] sm:$0xff] %v570
  %635 = vst [vmem:[%s3 + $0x28] sm:$0xff] %v571
  %636 = vst [vmem:[%s3 + $0x30] sm:$0xff] %v572
  %637 = vst [vmem:[%s3 + $0x38] sm:$0xff] %v573
  %638 = vst [vmem:[%s3 + $0x40] sm:$0xff] %v574
  %639 = vst [vmem:[%s3 + $0x48] sm:$0xff] %v575
  %640 = vst [vmem:[%s3 + $0x50] sm:$0xff] %v576
  %641 = vst [vmem:[%s3 + $0x58] sm:$0xff] %v577
  %642 = vst [vmem:[%s3 + $0x60] sm:$0xff] %v578
  %643 = vst [vmem:[%s3 + $0x68] sm:$0xff] %v579
  %644 = vst [vmem:[%s3 + $0x70] sm:$0xff] %v580
  %645 = vst [vmem:[%s3 + $0x78] sm:$0xff] %v581
  %646 = vst [vmem:[%s3 + $0x80] sm:$0xff] %v582
  %647 = vst [vmem:[%s3 + $0x88] sm:$0xff] %v583
  %648 = vst [vmem:[%s3 + $0x90] sm:$0xff] %v584
  %649 = vst [vmem:[%s3 + $0x98] sm:$0xff] %v585
  %650 = vst [vmem:[%s3 + $0xa0] sm:$0xff] %v586
  %651 = vst [vmem:[%s3 + $0xa8] sm:$0xff] %v587
  %652 = vst [vmem:[%s3 + $0xb0] sm:$0xff] %v588
  %653 = vst [vmem:[%s3 + $0xb8] sm:$0xff] %v589
  %654 = vst [vmem:[%s3 + $0xc0] sm:$0xff] %v590
  %655 = vst [vmem:[%s3 + $0xc8] sm:$0xff] %v591
  %656 = vst [vmem:[%s3 + $0xd0] sm:$0xff] %v592
  %657 = vst [vmem:[%s3 + $0xd8] sm:$0xff] %v593
  %658 = vst [vmem:[%s3 + $0xe0] sm:$0xff] %v594
  %659 = vst [vmem:[%s3 + $0xe8] sm:$0xff] %v595
  %660 = vst [vmem:[%s3 + $0xf0] sm:$0xff] %v596
  %661 = vst [vmem:[%s3 + $0xf8] sm:$0xff] %v597
  // Predicated region
  $region14: #{bi_rnn_encode.2} parent=0 // pred_check
    _
  $region15: #{bi_rnn_encode.2} parent=0 // pred_check_branch
    %663 = sbr.rel (0) target = $region17
  $region16: #{bi_rnn_encode.2} parent=0 // pred_region
    _
  $region17: #{bi_rnn_encode.2} parent=0 // pred_fallthru
    _
  // Predicated region
  $region18: #{bi_rnn_encode.2} parent=0 // pred_check
    _
  $region19: #{bi_rnn_encode.2} parent=0 // pred_check_branch
    %665 = sbr.rel (0) target = $region21
  $region20: #{bi_rnn_encode.2} parent=0 // pred_region
    _
  $region21: #{bi_rnn_encode.2} parent=0 // pred_fallthru
    _

// kernel: bi_rnn_encode.3
$region0: #{bi_rnn_encode.3}
  #allocation0 [shape = 'u32[]', space=smem, size = 0x4, offset = 0x4, fixed_abs, tag = 'smem constant byte address 0x4 - core index']
  #allocation1 [shape = 'u32[144,128]{1,0:T(1,128)}', space=vmem, size = 0x12000, scoped, tag = 'internal scratch']
  #allocation2 [shape = 'f32[8,128]{1,0:T(8,128)}', space=vmem, size = 0x1000, scoped, tag = 'scratch operand']
  #allocation3 [shape = 'f32[8,128]{1,0:T(8,128)}', space=vmem, size = 0x1000, scoped, tag = 'scratch operand']
  #allocation4 [shape = 'f32[8,128]{1,0:T(8,128)}', space=vmem, size = 0x1000, scoped, tag = 'scratch operand']
  #allocation5 [shape = 'f32[8,128]{1,0:T(8,128)}', space=vmem, size = 0x1000, scoped, tag = 'scratch operand']
  %s0 = inlined_call_operand.vmem [shape: bf16[8,8,1024], index: 0, kind: input, shape index: {}, may-alias: {0,1}]
  %s1 = inlined_call_operand.vmem [shape: bf16[8,8,1024], index: 1, kind: input, shape index: {}, may-alias: {0,1}]
  %s2 = inlined_call_operand.vmem [shape: bf16[128,512], index: 2, kind: input, shape index: {}]
  %s3 = inlined_call_operand.vmem [shape: bf16[128,512], index: 3, kind: input, shape index: {}]
  %s4 = inlined_call_operand.vmem [shape: f32[8,256], index: 4, kind: output, shape index: {}]
  %s5 = sld [smem:[#allocation0]]
  $region80: #{bi_rnn_encode.3} parent=0
    _
  %s7 = ssub.s32 1, %s5
  %s8 = scalar_select 0, %s7, %s5
  $region1: #{bi_rnn_encode.3} parent=0
    #allocation6 [shape = 'u8[65536]{0}', space=vmem, size = 0x10000, scoped, tag = 'input window, operand 0, single buffered']
    #allocation7 [shape = 'u8[65536]{0}', space=vmem, size = 0x10000, scoped, tag = 'input window, operand 1, single buffered']
    // Predicated region
    $region2: #{bi_rnn_encode.3} parent=1 // pred_check
      _
    $region3: #{bi_rnn_encode.3} parent=1 // pred_check_branch
      %10 = sbr.rel (0) target = $region5
    $region4: #{bi_rnn_encode.3} parent=1 // pred_region
      // Predicated region
      $region6: #{bi_rnn_encode.3} parent=4 // pred_check
        _
      $region7: #{bi_rnn_encode.3} parent=4 // pred_check_branch
        %12 = sbr.rel (0) target = $region9
      $region8: #{bi_rnn_encode.3} parent=4 // pred_region
        // Predicated region
        $region10: #{bi_rnn_encode.3} parent=8 // pred_check
          _
        $region11: #{bi_rnn_encode.3} parent=8 // pred_check_branch
          %14 = sbr.rel (0) target = $region13
        $region12: #{bi_rnn_encode.3} parent=8 // pred_region
          loop: start=0, step=1, limit=1
          $region14: #{bi_rnn_encode.3} parent=12 // loop_pre_header
            _
          $region15: #{bi_rnn_encode.3} parent=12 // loop_header
            %s16 = sphi 0, %s20
            %p17 = scmp.ge.s32.totalorder %s16, 1
            %s21 = sphi %s0, %s0
            %s22 = sphi [#allocation6], [#allocation6]
          $region16: #{bi_rnn_encode.3} parent=12 // loop_header_branch
            %19 = sbr.rel (%p17) target = $region20
          $region17: #{bi_rnn_encode.3} parent=12 // loop_body
            %v23 = vld [vmem:[%s21] sm:$0xff]
            %24 = vst [vmem:[%s22] sm:$0xff] %v23
            %v25 = vld [vmem:[%s21 + $0x8] sm:$0xff]
            %26 = vst [vmem:[%s22 + $0x8] sm:$0xff] %v25
            %v27 = vld [vmem:[%s21 + $0x20] sm:$0xff]
            %28 = vst [vmem:[%s22 + $0x10] sm:$0xff] %v27
            %v29 = vld [vmem:[%s21 + $0x28] sm:$0xff]
            %30 = vst [vmem:[%s22 + $0x18] sm:$0xff] %v29
            %v31 = vld [vmem:[%s21 + $0x40] sm:$0xff]
            %32 = vst [vmem:[%s22 + $0x20] sm:$0xff] %v31
            %v33 = vld [vmem:[%s21 + $0x48] sm:$0xff]
            %34 = vst [vmem:[%s22 + $0x28] sm:$0xff] %v33
            %v35 = vld [vmem:[%s21 + $0x60] sm:$0xff]
            %36 = vst [vmem:[%s22 + $0x30] sm:$0xff] %v35
            %v37 = vld [vmem:[%s21 + $0x68] sm:$0xff]
            %38 = vst [vmem:[%s22 + $0x38] sm:$0xff] %v37
            %v39 = vld [vmem:[%s21 + $0x80] sm:$0xff]
            %40 = vst [vmem:[%s22 + $0x40] sm:$0xff] %v39
            %v41 = vld [vmem:[%s21 + $0x88] sm:$0xff]
            %42 = vst [vmem:[%s22 + $0x48] sm:$0xff] %v41
            %v43 = vld [vmem:[%s21 + $0xa0] sm:$0xff]
            %44 = vst [vmem:[%s22 + $0x50] sm:$0xff] %v43
            %v45 = vld [vmem:[%s21 + $0xa8] sm:$0xff]
            %46 = vst [vmem:[%s22 + $0x58] sm:$0xff] %v45
            %v47 = vld [vmem:[%s21 + $0xc0] sm:$0xff]
            %48 = vst [vmem:[%s22 + $0x60] sm:$0xff] %v47
            %v49 = vld [vmem:[%s21 + $0xc8] sm:$0xff]
            %50 = vst [vmem:[%s22 + $0x68] sm:$0xff] %v49
            %v51 = vld [vmem:[%s21 + $0xe0] sm:$0xff]
            %52 = vst [vmem:[%s22 + $0x70] sm:$0xff] %v51
            %v53 = vld [vmem:[%s21 + $0xe8] sm:$0xff]
            %54 = vst [vmem:[%s22 + $0x78] sm:$0xff] %v53
          $region18: #{bi_rnn_encode.3} parent=12 // loop_footer
            %s20 = sadd.s32 1, %s16
          $region19: #{bi_rnn_encode.3} parent=12 // loop_footer_branch
            %15 = sbr.rel target = $region15
          $region20: #{bi_rnn_encode.3} parent=12 // loop_exit
            _
        $region13: #{bi_rnn_encode.3} parent=8 // pred_fallthru
          _
        // Predicated region
        $region21: #{bi_rnn_encode.3} parent=8 // pred_check
          _
        $region22: #{bi_rnn_encode.3} parent=8 // pred_check_branch
          %56 = sbr.rel target = $region24
        $region23: #{bi_rnn_encode.3} parent=8 // pred_region
          _
        $region24: #{bi_rnn_encode.3} parent=8 // pred_fallthru
          _
      $region9: #{bi_rnn_encode.3} parent=4 // pred_fallthru
        _
      %57 = vnop
    $region5: #{bi_rnn_encode.3} parent=1 // pred_fallthru
      _
    // Predicated region
    $region25: #{bi_rnn_encode.3} parent=1 // pred_check
      _
    $region26: #{bi_rnn_encode.3} parent=1 // pred_check_branch
      %59 = sbr.rel (0) target = $region28
    $region27: #{bi_rnn_encode.3} parent=1 // pred_region
      %s60 = ssub.s32 0, 0
      %s61 = smul.u32 8, %s60
      %s62 = smul.addr %s61, 8
      %s63 = sadd.s32 4, %s62
      %s64 = smul.addr %s63, 4
      %s65 = scalar_lea.vmem %s1, %s64
      // Predicated region
      $region29: #{bi_rnn_encode.3} parent=27 // pred_check
        _
      $region30: #{bi_rnn_encode.3} parent=27 // pred_check_branch
        %67 = sbr.rel (0) target = $region32
      $region31: #{bi_rnn_encode.3} parent=27 // pred_region
        // Predicated region
        $region33: #{bi_rnn_encode.3} parent=31 // pred_check
          _
        $region34: #{bi_rnn_encode.3} parent=31 // pred_check_branch
          %69 = sbr.rel (0) target = $region36
        $region35: #{bi_rnn_encode.3} parent=31 // pred_region
          loop: start=0, step=1, limit=1
          $region37: #{bi_rnn_encode.3} parent=35 // loop_pre_header
            _
          $region38: #{bi_rnn_encode.3} parent=35 // loop_header
            %s71 = sphi 0, %s75
            %p72 = scmp.ge.s32.totalorder %s71, 1
            %s76 = sphi %s65, %s65
            %s77 = sphi [#allocation7], [#allocation7]
          $region39: #{bi_rnn_encode.3} parent=35 // loop_header_branch
            %74 = sbr.rel (%p72) target = $region43
          $region40: #{bi_rnn_encode.3} parent=35 // loop_body
            %v78 = vld [vmem:[%s76] sm:$0xff]
            %79 = vst [vmem:[%s77] sm:$0xff] %v78
            %v80 = vld [vmem:[%s76 + $0x8] sm:$0xff]
            %81 = vst [vmem:[%s77 + $0x8] sm:$0xff] %v80
            %v82 = vld [vmem:[%s76 + $0x20] sm:$0xff]
            %83 = vst [vmem:[%s77 + $0x10] sm:$0xff] %v82
            %v84 = vld [vmem:[%s76 + $0x28] sm:$0xff]
            %85 = vst [vmem:[%s77 + $0x18] sm:$0xff] %v84
            %v86 = vld [vmem:[%s76 + $0x40] sm:$0xff]
            %87 = vst [vmem:[%s77 + $0x20] sm:$0xff] %v86
            %v88 = vld [vmem:[%s76 + $0x48] sm:$0xff]
            %89 = vst [vmem:[%s77 + $0x28] sm:$0xff] %v88
            %v90 = vld [vmem:[%s76 + $0x60] sm:$0xff]
            %91 = vst [vmem:[%s77 + $0x30] sm:$0xff] %v90
            %v92 = vld [vmem:[%s76 + $0x68] sm:$0xff]
            %93 = vst [vmem:[%s77 + $0x38] sm:$0xff] %v92
            %v94 = vld [vmem:[%s76 + $0x80] sm:$0xff]
            %95 = vst [vmem:[%s77 + $0x40] sm:$0xff] %v94
            %v96 = vld [vmem:[%s76 + $0x88] sm:$0xff]
            %97 = vst [vmem:[%s77 + $0x48] sm:$0xff] %v96
            %v98 = vld [vmem:[%s76 + $0xa0] sm:$0xff]
            %99 = vst [vmem:[%s77 + $0x50] sm:$0xff] %v98
            %v100 = vld [vmem:[%s76 + $0xa8] sm:$0xff]
            %101 = vst [vmem:[%s77 + $0x58] sm:$0xff] %v100
            %v102 = vld [vmem:[%s76 + $0xc0] sm:$0xff]
            %103 = vst [vmem:[%s77 + $0x60] sm:$0xff] %v102
            %v104 = vld [vmem:[%s76 + $0xc8] sm:$0xff]
            %105 = vst [vmem:[%s77 + $0x68] sm:$0xff] %v104
            %v106 = vld [vmem:[%s76 + $0xe0] sm:$0xff]
            %107 = vst [vmem:[%s77 + $0x70] sm:$0xff] %v106
            %v108 = vld [vmem:[%s76 + $0xe8] sm:$0xff]
            %109 = vst [vmem:[%s77 + $0x78] sm:$0xff] %v108
          $region41: #{bi_rnn_encode.3} parent=35 // loop_footer
            %s75 = sadd.s32 1, %s71
          $region42: #{bi_rnn_encode.3} parent=35 // loop_footer_branch
            %70 = sbr.rel target = $region38
          $region43: #{bi_rnn_encode.3} parent=35 // loop_exit
            _
        $region36: #{bi_rnn_encode.3} parent=31 // pred_fallthru
          _
        // Predicated region
        $region44: #{bi_rnn_encode.3} parent=31 // pred_check
          _
        $region45: #{bi_rnn_encode.3} parent=31 // pred_check_branch
          %111 = sbr.rel target = $region47
        $region46: #{bi_rnn_encode.3} parent=31 // pred_region
          _
        $region47: #{bi_rnn_encode.3} parent=31 // pred_fallthru
          _
      $region32: #{bi_rnn_encode.3} parent=27 // pred_fallthru
        _
      %112 = vnop
    $region28: #{bi_rnn_encode.3} parent=1 // pred_fallthru
      _
    // Predicated region
    $region48: #{bi_rnn_encode.3} parent=1 // pred_check
      _
    $region49: #{bi_rnn_encode.3} parent=1 // pred_check_branch
      %114 = sbr.rel (0) target = $region51
    $region50: #{bi_rnn_encode.3} parent=1 // pred_region
      _
    $region51: #{bi_rnn_encode.3} parent=1 // pred_fallthru
      _
    // Predicated region
    $region52: #{bi_rnn_encode.3} parent=1 // pred_check
      _
    $region53: #{bi_rnn_encode.3} parent=1 // pred_check_branch
      %116 = sbr.rel (0) target = $region55
    $region54: #{bi_rnn_encode.3} parent=1 // pred_region
      _
    $region55: #{bi_rnn_encode.3} parent=1 // pred_fallthru
      _
    // Predicated region
    $region56: #{bi_rnn_encode.3} parent=1 // pred_check
      _
    $region57: #{bi_rnn_encode.3} parent=1 // pred_check_branch
      %118 = sbr.rel (0) target = $region59
    $region58: #{bi_rnn_encode.3} parent=1 // pred_region
      _
    $region59: #{bi_rnn_encode.3} parent=1 // pred_fallthru
      _
    // Predicated region
    $region60: #{bi_rnn_encode.3} parent=1 // pred_check
      _
    $region61: #{bi_rnn_encode.3} parent=1 // pred_check_branch
      %120 = sbr.rel (0) target = $region63
    $region62: #{bi_rnn_encode.3} parent=1 // pred_region
      _
    $region63: #{bi_rnn_encode.3} parent=1 // pred_fallthru
      _
    %s121 = ssub.s32 0, 0
    %s122 = smul.u32 8, %s121
    %p124 = scmp.eq.s32.totalorder 0, 0
    // Predicated region
    $region64: #{bi_rnn_encode.3} parent=1 // pred_check
      %p125 = pneg %p124
    $region65: #{bi_rnn_encode.3} parent=1 // pred_check_branch
      %127 = sbr.rel (%p125) target = $region67
    $region66: #{bi_rnn_encode.3} parent=1 // pred_region
      %128 = vst [vmem:[#allocation2] sm:$0xff] 0.0
      %129 = vst [vmem:[#allocation3] sm:$0xff] 0.0
      %130 = vst [vmem:[#allocation4] sm:$0xff] 0.0
      %131 = vst [vmem:[#allocation5] sm:$0xff] 0.0
    $region67: #{bi_rnn_encode.3} parent=1 // pred_fallthru
      _
    %v132 = vld [vmem:[%s2] sm:$0xff]
    %v133 = vld [vmem:[%s2 + $0x8] sm:$0xff]
    %v134 = vld [vmem:[%s2 + $0x10] sm:$0xff]
    %v135 = vld [vmem:[%s2 + $0x18] sm:$0xff]
    %v136 = vld [vmem:[%s2 + $0x20] sm:$0xff]
    %v137 = vld [vmem:[%s2 + $0x28] sm:$0xff]
    %v138 = vld [vmem:[%s2 + $0x30] sm:$0xff]
    %v139 = vld [vmem:[%s2 + $0x38] sm:$0xff]
    %v140 = vld [vmem:[%s2 + $0x40] sm:$0xff]
    %v141 = vld [vmem:[%s2 + $0x48] sm:$0xff]
    %v142 = vld [vmem:[%s2 + $0x50] sm:$0xff]
    %v143 = vld [vmem:[%s2 + $0x58] sm:$0xff]
    %v144 = vld [vmem:[%s2 + $0x60] sm:$0xff]
    %v145 = vld [vmem:[%s2 + $0x68] sm:$0xff]
    %v146 = vld [vmem:[%s2 + $0x70] sm:$0xff]
    %v147 = vld [vmem:[%s2 + $0x78] sm:$0xff]
    %v148 = vld [vmem:[%s2 + $0x80] sm:$0xff]
    %v149 = vld [vmem:[%s2 + $0x88] sm:$0xff]
    %v150 = vld [vmem:[%s2 + $0x90] sm:$0xff]
    %v151 = vld [vmem:[%s2 + $0x98] sm:$0xff]
    %v152 = vld [vmem:[%s2 + $0xa0] sm:$0xff]
    %v153 = vld [vmem:[%s2 + $0xa8] sm:$0xff]
    %v154 = vld [vmem:[%s2 + $0xb0] sm:$0xff]
    %v155 = vld [vmem:[%s2 + $0xb8] sm:$0xff]
    %v156 = vld [vmem:[%s2 + $0xc0] sm:$0xff]
    %v157 = vld [vmem:[%s2 + $0xc8] sm:$0xff]
    %v158 = vld [vmem:[%s2 + $0xd0] sm:$0xff]
    %v159 = vld [vmem:[%s2 + $0xd8] sm:$0xff]
    %v160 = vld [vmem:[%s2 + $0xe0] sm:$0xff]
    %v161 = vld [vmem:[%s2 + $0xe8] sm:$0xff]
    %v162 = vld [vmem:[%s2 + $0xf0] sm:$0xff]
    %v163 = vld [vmem:[%s2 + $0xf8] sm:$0xff]
    %v164 = vld [vmem:[%s3] sm:$0xff]
    %v165 = vld [vmem:[%s3 + $0x8] sm:$0xff]
    %v166 = vld [vmem:[%s3 + $0x10] sm:$0xff]
    %v167 = vld [vmem:[%s3 + $0x18] sm:$0xff]
    %v168 = vld [vmem:[%s3 + $0x20] sm:$0xff]
    %v169 = vld [vmem:[%s3 + $0x28] sm:$0xff]
    %v170 = vld [vmem:[%s3 + $0x30] sm:$0xff]
    %v171 = vld [vmem:[%s3 + $0x38] sm:$0xff]
    %v172 = vld [vmem:[%s3 + $0x40] sm:$0xff]
    %v173 = vld [vmem:[%s3 + $0x48] sm:$0xff]
    %v174 = vld [vmem:[%s3 + $0x50] sm:$0xff]
    %v175 = vld [vmem:[%s3 + $0x58] sm:$0xff]
    %v176 = vld [vmem:[%s3 + $0x60] sm:$0xff]
    %v177 = vld [vmem:[%s3 + $0x68] sm:$0xff]
    %v178 = vld [vmem:[%s3 + $0x70] sm:$0xff]
    %v179 = vld [vmem:[%s3 + $0x78] sm:$0xff]
    %v180 = vld [vmem:[%s3 + $0x80] sm:$0xff]
    %v181 = vld [vmem:[%s3 + $0x88] sm:$0xff]
    %v182 = vld [vmem:[%s3 + $0x90] sm:$0xff]
    %v183 = vld [vmem:[%s3 + $0x98] sm:$0xff]
    %v184 = vld [vmem:[%s3 + $0xa0] sm:$0xff]
    %v185 = vld [vmem:[%s3 + $0xa8] sm:$0xff]
    %v186 = vld [vmem:[%s3 + $0xb0] sm:$0xff]
    %v187 = vld [vmem:[%s3 + $0xb8] sm:$0xff]
    %v188 = vld [vmem:[%s3 + $0xc0] sm:$0xff]
    %v189 = vld [vmem:[%s3 + $0xc8] sm:$0xff]
    %v190 = vld [vmem:[%s3 + $0xd0] sm:$0xff]
    %v191 = vld [vmem:[%s3 + $0xd8] sm:$0xff]
    %v192 = vld [vmem:[%s3 + $0xe0] sm:$0xff]
    %v193 = vld [vmem:[%s3 + $0xe8] sm:$0xff]
    %v194 = vld [vmem:[%s3 + $0xf0] sm:$0xff]
    %v195 = vld [vmem:[%s3 + $0xf8] sm:$0xff]
    %v196 = vld [vmem:[#allocation2] sm:$0xff]
    %v197 = vld [vmem:[#allocation3] sm:$0xff]
    %v198 = vld [vmem:[#allocation4] sm:$0xff]
    %v199 = vld [vmem:[#allocation5] sm:$0xff]
    %v200 = vld [vmem:[#allocation6] sm:$0xff]
    %v201 = vld [vmem:[#allocation6 + $0x8] sm:$0xff]
    %v202 = vunpack.c.l.bf16 %v200
    %v203 = vunpack.c.h.bf16 %v200
    %v204 = vunpack.c.l.bf16 %v201
    %v205 = vunpack.c.h.bf16 %v201
    %v206 = vpack.c.bf16 %v196, %v196
    %v239 = vunpack.c.l.b16 %v132
    %v240 = vunpack.c.h.b16 %v132
    %v241 = vunpack.c.l.b16 %v133
    %v242 = vunpack.c.h.b16 %v133
    %v243 = vunpack.c.l.b16 %v134
    %v244 = vunpack.c.h.b16 %v134
    %v245 = vunpack.c.l.b16 %v135
    %v246 = vunpack.c.h.b16 %v135
    %v247 = vunpack.c.l.b16 %v136
    %v248 = vunpack.c.h.b16 %v136
    %v249 = vunpack.c.l.b16 %v137
    %v250 = vunpack.c.h.b16 %v137
    %v251 = vunpack.c.l.b16 %v138
    %v252 = vunpack.c.h.b16 %v138
    %v253 = vunpack.c.l.b16 %v139
    %v254 = vunpack.c.h.b16 %v139
    %v255 = vunpack.c.l.b16 %v140
    %v256 = vunpack.c.h.b16 %v140
    %v257 = vunpack.c.l.b16 %v141
    %v258 = vunpack.c.h.b16 %v141
    %v259 = vunpack.c.l.b16 %v142
    %v260 = vunpack.c.h.b16 %v142
    %v261 = vunpack.c.l.b16 %v143
    %v262 = vunpack.c.h.b16 %v143
    %v263 = vunpack.c.l.b16 %v144
    %v264 = vunpack.c.h.b16 %v144
    %v265 = vunpack.c.l.b16 %v145
    %v266 = vunpack.c.h.b16 %v145
    %v267 = vunpack.c.l.b16 %v146
    %v268 = vunpack.c.h.b16 %v146
    %v269 = vunpack.c.l.b16 %v147
    %v270 = vunpack.c.h.b16 %v147
    %v271 = vunpack.c.l.b16 %v148
    %v272 = vunpack.c.h.b16 %v148
    %v273 = vunpack.c.l.b16 %v149
    %v274 = vunpack.c.h.b16 %v149
    %v275 = vunpack.c.l.b16 %v150
    %v276 = vunpack.c.h.b16 %v150
    %v277 = vunpack.c.l.b16 %v151
    %v278 = vunpack.c.h.b16 %v151
    %v279 = vunpack.c.l.b16 %v152
    %v280 = vunpack.c.h.b16 %v152
    %v281 = vunpack.c.l.b16 %v153
    %v282 = vunpack.c.h.b16 %v153
    %v283 = vunpack.c.l.b16 %v154
    %v284 = vunpack.c.h.b16 %v154
    %v285 = vunpack.c.l.b16 %v155
    %v286 = vunpack.c.h.b16 %v155
    %v287 = vunpack.c.l.b16 %v156
    %v288 = vunpack.c.h.b16 %v156
    %v289 = vunpack.c.l.b16 %v157
    %v290 = vunpack.c.h.b16 %v157
    %v291 = vunpack.c.l.b16 %v158
    %v292 = vunpack.c.h.b16 %v158
    %v293 = vunpack.c.l.b16 %v159
    %v294 = vunpack.c.h.b16 %v159
    %v295 = vunpack.c.l.b16 %v160
    %v296 = vunpack.c.h.b16 %v160
    %v297 = vunpack.c.l.b16 %v161
    %v298 = vunpack.c.h.b16 %v161
    %v299 = vunpack.c.l.b16 %v162
    %v300 = vunpack.c.h.b16 %v162
    %v301 = vunpack.c.l.b16 %v163
    %v302 = vunpack.c.h.b16 %v163
    %v303 = vpack.c.b16 %v243, %v239
    %v304 = vpack.c.b16 %v244, %v240
    %v305 = vpack.c.b16 %v245, %v241
    %v306 = vpack.c.b16 %v246, %v242
    %v307 = vpack.c.b16 %v251, %v247
    %v308 = vpack.c.b16 %v252, %v248
    %v309 = vpack.c.b16 %v253, %v249
    %v310 = vpack.c.b16 %v254, %v250
    %v311 = vpack.c.b16 %v259, %v255
    %v312 = vpack.c.b16 %v260, %v256
    %v313 = vpack.c.b16 %v261, %v257
    %v314 = vpack.c.b16 %v262, %v258
    %v315 = vpack.c.b16 %v267, %v263
    %v316 = vpack.c.b16 %v268, %v264
    %v317 = vpack.c.b16 %v269, %v265
    %v318 = vpack.c.b16 %v270, %v266
    %v319 = vpack.c.b16 %v275, %v271
    %v320 = vpack.c.b16 %v276, %v272
    %v321 = vpack.c.b16 %v277, %v273
    %v322 = vpack.c.b16 %v278, %v274
    %v323 = vpack.c.b16 %v283, %v279
    %v324 = vpack.c.b16 %v284, %v280
    %v325 = vpack.c.b16 %v285, %v281
    %v326 = vpack.c.b16 %v286, %v282
    %v327 = vpack.c.b16 %v291, %v287
    %v328 = vpack.c.b16 %v292, %v288
    %v329 = vpack.c.b16 %v293, %v289
    %v330 = vpack.c.b16 %v294, %v290
    %v331 = vpack.c.b16 %v299, %v295
    %v332 = vpack.c.b16 %v300, %v296
    %v333 = vpack.c.b16 %v301, %v297
    %v334 = vpack.c.b16 %v302, %v298
    %367 = vmatprep.subr.bf16.mxu0 %v304
    %368 = vmatpush1.bf16.msra.mxu0 %v303
    %369 = vmatprep.subr.bf16.mxu0 %v308
    %370 = vmatpush1.bf16.msra.mxu0 %v307
    %371 = vmatprep.subr.bf16.mxu0 %v312
    %372 = vmatpush1.bf16.msra.mxu0 %v311
    %373 = vmatprep.subr.bf16.mxu0 %v316
    %374 = vmatpush1.bf16.msra.mxu0 %v315
    %375 = vmatprep.subr.bf16.mxu0 %v320
    %376 = vmatpush1.bf16.msra.mxu0 %v319
    %377 = vmatprep.subr.bf16.mxu0 %v324
    %378 = vmatpush1.bf16.msra.mxu0 %v323
    %379 = vmatprep.subr.bf16.mxu0 %v328
    %380 = vmatpush1.bf16.msra.mxu0 %v327
    %381 = vmatprep.subr.bf16.mxu0 %v332
    %382 = vmatpush1.bf16.msra.mxu0 %v331
    %383 = vmatprep.subr.bf16.mxu0 0
    %384 = vmatpush1.bf16.msra.mxu0 0
    %385 = vmatprep.subr.bf16.mxu0 0
    %386 = vmatpush1.bf16.msra.mxu0 0
    %387 = vmatprep.subr.bf16.mxu0 0
    %388 = vmatpush1.bf16.msra.mxu0 0
    %389 = vmatprep.subr.bf16.mxu0 0
    %390 = vmatpush1.bf16.msra.mxu0 0
    %391 = vmatprep.subr.bf16.mxu0 0
    %392 = vmatpush1.bf16.msra.mxu0 0
    %393 = vmatprep.subr.bf16.mxu0 0
    %394 = vmatpush1.bf16.msra.mxu0 0
    %395 = vmatprep.subr.bf16.mxu0 0
    %396 = vmatpush1.bf16.msra.mxu0 0
    %397 = vmatprep.subr.bf16.mxu0 0
    %398 = vmatpush1.bf16.msra.mxu0 0
    %399 = vmatprep.mubr.bf16.mxu0 0
    %400 = vmatmul.mubr.bf16.gmra.mrb[0].mxu0 %v206
    %v401 = vpop.f32.mrb[0].mxu0
    %v402 = vadd.f32 0.0, %v401
    %v403 = vpop.f32.mrb[0].mxu0
    %v404 = vadd.f32 0.0, %v403
    %v405 = vpop.f32.mrb[0].mxu0
    %v406 = vpop.f32.mrb[0].mxu0
    %407 = vdwg.mxu0
    %408 = vmatprep.subr.bf16.mxu0 %v306
    %409 = vmatpush1.bf16.msra.mxu0 %v305
    %410 = vmatprep.subr.bf16.mxu0 %v310
    %411 = vmatpush1.bf16.msra.mxu0 %v309
    %412 = vmatprep.subr.bf16.mxu0 %v314
    %413 = vmatpush1.bf16.msra.mxu0 %v313
    %414 = vmatprep.subr.bf16.mxu0 %v318
    %415 = vmatpush1.bf16.msra.mxu0 %v317
    %416 = vmatprep.subr.bf16.mxu0 %v322
    %417 = vmatpush1.bf16.msra.mxu0 %v321
    %418 = vmatprep.subr.bf16.mxu0 %v326
    %419 = vmatpush1.bf16.msra.mxu0 %v325
    %420 = vmatprep.subr.bf16.mxu0 %v330
    %421 = vmatpush1.bf16.msra.mxu0 %v329
    %422 = vmatprep.subr.bf16.mxu0 %v334
    %423 = vmatpush1.bf16.msra.mxu0 %v333
    %424 = vmatprep.subr.bf16.mxu0 0
    %425 = vmatpush1.bf16.msra.mxu0 0
    %426 = vmatprep.subr.bf16.mxu0 0
    %427 = vmatpush1.bf16.msra.mxu0 0
    %428 = vmatprep.subr.bf16.mxu0 0
    %429 = vmatpush1.bf16.msra.mxu0 0
    %430 = vmatprep.subr.bf16.mxu0 0
    %431 = vmatpush1.bf16.msra.mxu0 0
    %432 = vmatprep.subr.bf16.mxu0 0
    %433 = vmatpush1.bf16.msra.mxu0 0
    %434 = vmatprep.subr.bf16.mxu0 0
    %435 = vmatpush1.bf16.msra.mxu0 0
    %436 = vmatprep.subr.bf16.mxu0 0
    %437 = vmatpush1.bf16.msra.mxu0 0
    %438 = vmatprep.subr.bf16.mxu0 0
    %439 = vmatpush1.bf16.msra.mxu0 0
    %440 = vmatprep.mubr.bf16.mxu0 0
    %441 = vmatmul.mubr.bf16.gmra.mrb[0].mxu0 %v206
    %v442 = vpop.f32.mrb[0].mxu0
    %v443 = vadd.f32 0.0, %v442
    %v444 = vpop.f32.mrb[0].mxu0
    %v445 = vadd.f32 0.0, %v444
    %v446 = vpop.f32.mrb[0].mxu0
    %v447 = vpop.f32.mrb[0].mxu0
    %448 = vdwg.mxu0
    %v449 = vadd.f32 %v202, %v402
    %v450 = vadd.f32 %v203, %v404
    %v451 = vadd.f32 %v204, %v443
    %v452 = vadd.f32 %v205, %v445
    %s453 = scalar_lea.vmem [#allocation7], 112
    %v454 = vld [vmem:[%s453] sm:$0xff]
    %v455 = vld [vmem:[%s453 + $0x8] sm:$0xff]
    %v456 = vunpack.c.l.bf16 %v454
    %v457 = vunpack.c.h.bf16 %v454
    %v458 = vunpack.c.l.bf16 %v455
    %v459 = vunpack.c.h.bf16 %v455
    %v460 = vpack.c.bf16 %v198, %v198
    %v493 = vunpack.c.l.b16 %v164
    %v494 = vunpack.c.h.b16 %v164
    %v495 = vunpack.c.l.b16 %v165
    %v496 = vunpack.c.h.b16 %v165
    %v497 = vunpack.c.l.b16 %v166
    %v498 = vunpack.c.h.b16 %v166
    %v499 = vunpack.c.l.b16 %v167
    %v500 = vunpack.c.h.b16 %v167
    %v501 = vunpack.c.l.b16 %v168
    %v502 = vunpack.c.h.b16 %v168
    %v503 = vunpack.c.l.b16 %v169
    %v504 = vunpack.c.h.b16 %v169
    %v505 = vunpack.c.l.b16 %v170
    %v506 = vunpack.c.h.b16 %v170
    %v507 = vunpack.c.l.b16 %v171
    %v508 = vunpack.c.h.b16 %v171
    %v509 = vunpack.c.l.b16 %v172
    %v510 = vunpack.c.h.b16 %v172
    %v511 = vunpack.c.l.b16 %v173
    %v512 = vunpack.c.h.b16 %v173
    %v513 = vunpack.c.l.b16 %v174
    %v514 = vunpack.c.h.b16 %v174
    %v515 = vunpack.c.l.b16 %v175
    %v516 = vunpack.c.h.b16 %v175
    %v517 = vunpack.c.l.b16 %v176
    %v518 = vunpack.c.h.b16 %v176
    %v519 = vunpack.c.l.b16 %v177
    %v520 = vunpack.c.h.b16 %v177
    %v521 = vunpack.c.l.b16 %v178
    %v522 = vunpack.c.h.b16 %v178
    %v523 = vunpack.c.l.b16 %v179
    %v524 = vunpack.c.h.b16 %v179
    %v525 = vunpack.c.l.b16 %v180
    %v526 = vunpack.c.h.b16 %v180
    %v527 = vunpack.c.l.b16 %v181
    %v528 = vunpack.c.h.b16 %v181
    %v529 = vunpack.c.l.b16 %v182
    %v530 = vunpack.c.h.b16 %v182
    %v531 = vunpack.c.l.b16 %v183
    %v532 = vunpack.c.h.b16 %v183
    %v533 = vunpack.c.l.b16 %v184
    %v534 = vunpack.c.h.b16 %v184
    %v535 = vunpack.c.l.b16 %v185
    %v536 = vunpack.c.h.b16 %v185
    %v537 = vunpack.c.l.b16 %v186
    %v538 = vunpack.c.h.b16 %v186
    %v539 = vunpack.c.l.b16 %v187
    %v540 = vunpack.c.h.b16 %v187
    %v541 = vunpack.c.l.b16 %v188
    %v542 = vunpack.c.h.b16 %v188
    %v543 = vunpack.c.l.b16 %v189
    %v544 = vunpack.c.h.b16 %v189
    %v545 = vunpack.c.l.b16 %v190
    %v546 = vunpack.c.h.b16 %v190
    %v547 = vunpack.c.l.b16 %v191
    %v548 = vunpack.c.h.b16 %v191
    %v549 = vunpack.c.l.b16 %v192
    %v550 = vunpack.c.h.b16 %v192
    %v551 = vunpack.c.l.b16 %v193
    %v552 = vunpack.c.h.b16 %v193
    %v553 = vunpack.c.l.b16 %v194
    %v554 = vunpack.c.h.b16 %v194
    %v555 = vunpack.c.l.b16 %v195
    %v556 = vunpack.c.h.b16 %v195
    %v557 = vpack.c.b16 %v497, %v493
    %v558 = vpack.c.b16 %v498, %v494
    %v559 = vpack.c.b16 %v499, %v495
    %v560 = vpack.c.b16 %v500, %v496
    %v561 = vpack.c.b16 %v505, %v501
    %v562 = vpack.c.b16 %v506, %v502
    %v563 = vpack.c.b16 %v507, %v503
    %v564 = vpack.c.b16 %v508, %v504
    %v565 = vpack.c.b16 %v513, %v509
    %v566 = vpack.c.b16 %v514, %v510
    %v567 = vpack.c.b16 %v515, %v511
    %v568 = vpack.c.b16 %v516, %v512
    %v569 = vpack.c.b16 %v521, %v517
    %v570 = vpack.c.b16 %v522, %v518
    %v571 = vpack.c.b16 %v523, %v519
    %v572 = vpack.c.b16 %v524, %v520
    %v573 = vpack.c.b16 %v529, %v525
    %v574 = vpack.c.b16 %v530, %v526
    %v575 = vpack.c.b16 %v531, %v527
    %v576 = vpack.c.b16 %v532, %v528
    %v577 = vpack.c.b16 %v537, %v533
    %v578 = vpack.c.b16 %v538, %v534
    %v579 = vpack.c.b16 %v539, %v535
    %v580 = vpack.c.b16 %v540, %v536
    %v581 = vpack.c.b16 %v545, %v541
    %v582 = vpack.c.b16 %v546, %v542
    %v583 = vpack.c.b16 %v547, %v543
    %v584 = vpack.c.b16 %v548, %v544
    %v585 = vpack.c.b16 %v553, %v549
    %v586 = vpack.c.b16 %v554, %v550
    %v587 = vpack.c.b16 %v555, %v551
    %v588 = vpack.c.b16 %v556, %v552
    %621 = vmatprep.subr.bf16.mxu0 %v558
    %622 = vmatpush1.bf16.msra.mxu0 %v557
    %623 = vmatprep.subr.bf16.mxu0 %v562
    %624 = vmatpush1.bf16.msra.mxu0 %v561
    %625 = vmatprep.subr.bf16.mxu0 %v566
    %626 = vmatpush1.bf16.msra.mxu0 %v565
    %627 = vmatprep.subr.bf16.mxu0 %v570
    %628 = vmatpush1.bf16.msra.mxu0 %v569
    %629 = vmatprep.subr.bf16.mxu0 %v574
    %630 = vmatpush1.bf16.msra.mxu0 %v573
    %631 = vmatprep.subr.bf16.mxu0 %v578
    %632 = vmatpush1.bf16.msra.mxu0 %v577
    %633 = vmatprep.subr.bf16.mxu0 %v582
    %634 = vmatpush1.bf16.msra.mxu0 %v581
    %635 = vmatprep.subr.bf16.mxu0 %v586
    %636 = vmatpush1.bf16.msra.mxu0 %v585
    %637 = vmatprep.subr.bf16.mxu0 0
    %638 = vmatpush1.bf16.msra.mxu0 0
    %639 = vmatprep.subr.bf16.mxu0 0
    %640 = vmatpush1.bf16.msra.mxu0 0
    %641 = vmatprep.subr.bf16.mxu0 0
    %642 = vmatpush1.bf16.msra.mxu0 0
    %643 = vmatprep.subr.bf16.mxu0 0
    %644 = vmatpush1.bf16.msra.mxu0 0
    %645 = vmatprep.subr.bf16.mxu0 0
    %646 = vmatpush1.bf16.msra.mxu0 0
    %647 = vmatprep.subr.bf16.mxu0 0
    %648 = vmatpush1.bf16.msra.mxu0 0
    %649 = vmatprep.subr.bf16.mxu0 0
    %650 = vmatpush1.bf16.msra.mxu0 0
    %651 = vmatprep.subr.bf16.mxu0 0
    %652 = vmatpush1.bf16.msra.mxu0 0
    %653 = vmatprep.mubr.bf16.mxu0 0
    %654 = vmatmul.mubr.bf16.gmra.mrb[0].mxu0 %v460
    %v655 = vpop.f32.mrb[0].mxu0
    %v656 = vadd.f32 0.0, %v655
    %v657 = vpop.f32.mrb[0].mxu0
    %v658 = vadd.f32 0.0, %v657
    %v659 = vpop.f32.mrb[0].mxu0
    %v660 = vpop.f32.mrb[0].mxu0
    %661 = vdwg.mxu0
    %662 = vmatprep.subr.bf16.mxu0 %v560
    %663 = vmatpush1.bf16.msra.mxu0 %v559
    %664 = vmatprep.subr.bf16.mxu0 %v564
    %665 = vmatpush1.bf16.msra.mxu0 %v563
    %666 = vmatprep.subr.bf16.mxu0 %v568
    %667 = vmatpush1.bf16.msra.mxu0 %v567
    %668 = vmatprep.subr.bf16.mxu0 %v572
    %669 = vmatpush1.bf16.msra.mxu0 %v571
    %670 = vmatprep.subr.bf16.mxu0 %v576
    %671 = vmatpush1.bf16.msra.mxu0 %v575
    %672 = vmatprep.subr.bf16.mxu0 %v580
    %673 = vmatpush1.bf16.msra.mxu0 %v579
    %674 = vmatprep.subr.bf16.mxu0 %v584
    %675 = vmatpush1.bf16.msra.mxu0 %v583
    %676 = vmatprep.subr.bf16.mxu0 %v588
    %677 = vmatpush1.bf16.msra.mxu0 %v587
    %678 = vmatprep.subr.bf16.mxu0 0
    %679 = vmatpush1.bf16.msra.mxu0 0
    %680 = vmatprep.subr.bf16.mxu0 0
    %681 = vmatpush1.bf16.msra.mxu0 0
    %682 = vmatprep.subr.bf16.mxu0 0
    %683 = vmatpush1.bf16.msra.mxu0 0
    %684 = vmatprep.subr.bf16.mxu0 0
    %685 = vmatpush1.bf16.msra.mxu0 0
    %686 = vmatprep.subr.bf16.mxu0 0
    %687 = vmatpush1.bf16.msra.mxu0 0
    %688 = vmatprep.subr.bf16.mxu0 0
    %689 = vmatpush1.bf16.msra.mxu0 0
    %690 = vmatprep.subr.bf16.mxu0 0
    %691 = vmatpush1.bf16.msra.mxu0 0
    %692 = vmatprep.subr.bf16.mxu0 0
    %693 = vmatpush1.bf16.msra.mxu0 0
    %694 = vmatprep.mubr.bf16.mxu0 0
    %695 = vmatmul.mubr.bf16.gmra.mrb[0].mxu0 %v460
    %v696 = vpop.f32.mrb[0].mxu0
    %v697 = vadd.f32 0.0, %v696
    %v698 = vpop.f32.mrb[0].mxu0
    %v699 = vadd.f32 0.0, %v698
    %v700 = vpop.f32.mrb[0].mxu0
    %v701 = vpop.f32.mrb[0].mxu0
    %702 = vdwg.mxu0
    %v703 = vadd.f32 %v456, %v656
    %v704 = vadd.f32 %v457, %v658
    %v705 = vadd.f32 %v458, %v697
    %v706 = vadd.f32 %v459, %v699
    %v707 = vxor.u32 %v449, 2147483648
    %v708 = vmul.f32 %v707, 1.442695
    %v709 = vpow.pop %v708
    %v710 = vadd.f32 %v709, 1.0
    %v711 = vrcp.pop %v710
    %v712 = vmul.f32 1.0, %v711
    %v713 = vxor.u32 %v450, 2147483648
    %v714 = vmul.f32 %v713, 1.442695
    %v715 = vpow.pop %v714
    %v716 = vadd.f32 %v715, 1.0
    %v717 = vrcp.pop %v716
    %v718 = vmul.f32 1.0, %v717
    %v719 = vtanh.pop %v451
    %v720 = vxor.u32 %v452, 2147483648
    %v721 = vmul.f32 %v720, 1.442695
    %v722 = vpow.pop %v721
    %v723 = vadd.f32 %v722, 1.0
    %v724 = vrcp.pop %v723
    %v725 = vmul.f32 1.0, %v724
    %v726 = vmul.f32 %v718, %v197
    %v727 = vmul.f32 %v712, %v719
    %v728 = vadd.f32 %v726, %v727
    %v729 = vtanh.pop %v728
    %v730 = vmul.f32 %v725, %v729
    %v731 = vxor.u32 %v703, 2147483648
    %v732 = vmul.f32 %v731, 1.442695
    %v733 = vpow.pop %v732
    %v734 = vadd.f32 %v733, 1.0
    %v735 = vrcp.pop %v734
    %v736 = vmul.f32 1.0, %v735
    %v737 = vxor.u32 %v704, 2147483648
    %v738 = vmul.f32 %v737, 1.442695
    %v739 = vpow.pop %v738
    %v740 = vadd.f32 %v739, 1.0
    %v741 = vrcp.pop %v740
    %v742 = vmul.f32 1.0, %v741
    %v743 = vtanh.pop %v705
    %v744 = vxor.u32 %v706, 2147483648
    %v745 = vmul.f32 %v744, 1.442695
    %v746 = vpow.pop %v745
    %v747 = vadd.f32 %v746, 1.0
    %v748 = vrcp.pop %v747
    %v749 = vmul.f32 1.0, %v748
    %v750 = vmul.f32 %v742, %v199
    %v751 = vmul.f32 %v736, %v743
    %v752 = vadd.f32 %v750, %v751
    %v753 = vtanh.pop %v752
    %v754 = vmul.f32 %v749, %v753
    %s755 = scalar_lea.vmem [#allocation6], 16
    %v756 = vld [vmem:[%s755] sm:$0xff]
    %v757 = vld [vmem:[%s755 + $0x8] sm:$0xff]
    %v758 = vunpack.c.l.bf16 %v756
    %v759 = vunpack.c.h.bf16 %v756
    %v760 = vunpack.c.l.bf16 %v757
    %v761 = vunpack.c.h.bf16 %v757
    %v762 = vpack.c.bf16 %v730, %v730
    %763 = vmatprep.subr.bf16.mxu0 %v304
    %764 = vmatpush1.bf16.msra.mxu0 %v303
    %765 = vmatprep.subr.bf16.mxu0 %v308
    %766 = vmatpush1.bf16.msra.mxu0 %v307
    %767 = vmatprep.subr.bf16.mxu0 %v312
    %768 = vmatpush1.bf16.msra.mxu0 %v311
    %769 = vmatprep.subr.bf16.mxu0 %v316
    %770 = vmatpush1.bf16.msra.mxu0 %v315
    %771 = vmatprep.subr.bf16.mxu0 %v320
    %772 = vmatpush1.bf16.msra.mxu0 %v319
    %773 = vmatprep.subr.bf16.mxu0 %v324
    %774 = vmatpush1.bf16.msra.mxu0 %v323
    %775 = vmatprep.subr.bf16.mxu0 %v328
    %776 = vmatpush1.bf16.msra.mxu0 %v327
    %777 = vmatprep.subr.bf16.mxu0 %v332
    %778 = vmatpush1.bf16.msra.mxu0 %v331
    %779 = vmatprep.subr.bf16.mxu0 0
    %780 = vmatpush1.bf16.msra.mxu0 0
    %781 = vmatprep.subr.bf16.mxu0 0
    %782 = vmatpush1.bf16.msra.mxu0 0
    %783 = vmatprep.subr.bf16.mxu0 0
    %784 = vmatpush1.bf16.msra.mxu0 0
    %785 = vmatprep.subr.bf16.mxu0 0
    %786 = vmatpush1.bf16.msra.mxu0 0
    %787 = vmatprep.subr.bf16.mxu0 0
    %788 = vmatpush1.bf16.msra.mxu0 0
    %789 = vmatprep.subr.bf16.mxu0 0
    %790 = vmatpush1.bf16.msra.mxu0 0
    %791 = vmatprep.subr.bf16.mxu0 0
    %792 = vmatpush1.bf16.msra.mxu0 0
    %793 = vmatprep.subr.bf16.mxu0 0
    %794 = vmatpush1.bf16.msra.mxu0 0
    %795 = vmatprep.mubr.bf16.mxu0 0
    %796 = vmatmul.mubr.bf16.gmra.mrb[0].mxu0 %v762
    %v797 = vpop.f32.mrb[0].mxu0
    %v798 = vadd.f32 0.0, %v797
    %v799 = vpop.f32.mrb[0].mxu0
    %v800 = vadd.f32 0.0, %v799
    %v801 = vpop.f32.mrb[0].mxu0
    %v802 = vpop.f32.mrb[0].mxu0
    %803 = vdwg.mxu0
    %804 = vmatprep.subr.bf16.mxu0 %v306
    %805 = vmatpush1.bf16.msra.mxu0 %v305
    %806 = vmatprep.subr.bf16.mxu0 %v310
    %807 = vmatpush1.bf16.msra.mxu0 %v309
    %808 = vmatprep.subr.bf16.mxu0 %v314
    %809 = vmatpush1.bf16.msra.mxu0 %v313
    %810 = vmatprep.subr.bf16.mxu0 %v318
    %811 = vmatpush1.bf16.msra.mxu0 %v317
    %812 = vmatprep.subr.bf16.mxu0 %v322
    %813 = vmatpush1.bf16.msra.mxu0 %v321
    %814 = vmatprep.subr.bf16.mxu0 %v326
    %815 = vmatpush1.bf16.msra.mxu0 %v325
    %816 = vmatprep.subr.bf16.mxu0 %v330
    %817 = vmatpush1.bf16.msra.mxu0 %v329
    %818 = vmatprep.subr.bf16.mxu0 %v334
    %819 = vmatpush1.bf16.msra.mxu0 %v333
    %820 = vmatprep.subr.bf16.mxu0 0
    %821 = vmatpush1.bf16.msra.mxu0 0
    %822 = vmatprep.subr.bf16.mxu0 0
    %823 = vmatpush1.bf16.msra.mxu0 0
    %824 = vmatprep.subr.bf16.mxu0 0
    %825 = vmatpush1.bf16.msra.mxu0 0
    %826 = vmatprep.subr.bf16.mxu0 0
    %827 = vmatpush1.bf16.msra.mxu0 0
    %828 = vmatprep.subr.bf16.mxu0 0
    %829 = vmatpush1.bf16.msra.mxu0 0
    %830 = vmatprep.subr.bf16.mxu0 0
    %831 = vmatpush1.bf16.msra.mxu0 0
    %832 = vmatprep.subr.bf16.mxu0 0
    %833 = vmatpush1.bf16.msra.mxu0 0
    %834 = vmatprep.subr.bf16.mxu0 0
    %835 = vmatpush1.bf16.msra.mxu0 0
    %836 = vmatprep.mubr.bf16.mxu0 0
    %837 = vmatmul.mubr.bf16.gmra.mrb[0].mxu0 %v762
    %v838 = vpop.f32.mrb[0].mxu0
    %v839 = vadd.f32 0.0, %v838
    %v840 = vpop.f32.mrb[0].mxu0
    %v841 = vadd.f32 0.0, %v840
    %v842 = vpop.f32.mrb[0].mxu0
    %v843 = vpop.f32.mrb[0].mxu0
    %844 = vdwg.mxu0
    %v845 = vadd.f32 %v758, %v798
    %v846 = vadd.f32 %v759, %v800
    %v847 = vadd.f32 %v760, %v839
    %v848 = vadd.f32 %v761, %v841
    %s849 = scalar_lea.vmem [#allocation7], 96
    %v850 = vld [vmem:[%s849] sm:$0xff]
    %v851 = vld [vmem:[%s849 + $0x8] sm:$0xff]
    %v852 = vunpack.c.l.bf16 %v850
    %v853 = vunpack.c.h.bf16 %v850
    %v854 = vunpack.c.l.bf16 %v851
    %v855 = vunpack.c.h.bf16 %v851
    %v856 = vpack.c.bf16 %v754, %v754
    %857 = vmatprep.subr.bf16.mxu0 %v558
    %858 = vmatpush1.bf16.msra.mxu0 %v557
    %859 = vmatprep.subr.bf16.mxu0 %v562
    %860 = vmatpush1.bf16.msra.mxu0 %v561
    %861 = vmatprep.subr.bf16.mxu0 %v566
    %862 = vmatpush1.bf16.msra.mxu0 %v565
    %863 = vmatprep.subr.bf16.mxu0 %v570
    %864 = vmatpush1.bf16.msra.mxu0 %v569
    %865 = vmatprep.subr.bf16.mxu0 %v574
    %866 = vmatpush1.bf16.msra.mxu0 %v573
    %867 = vmatprep.subr.bf16.mxu0 %v578
    %868 = vmatpush1.bf16.msra.mxu0 %v577
    %869 = vmatprep.subr.bf16.mxu0 %v582
    %870 = vmatpush1.bf16.msra.mxu0 %v581
    %871 = vmatprep.subr.bf16.mxu0 %v586
    %872 = vmatpush1.bf16.msra.mxu0 %v585
    %873 = vmatprep.subr.bf16.mxu0 0
    %874 = vmatpush1.bf16.msra.mxu0 0
    %875 = vmatprep.subr.bf16.mxu0 0
    %876 = vmatpush1.bf16.msra.mxu0 0
    %877 = vmatprep.subr.bf16.mxu0 0
    %878 = vmatpush1.bf16.msra.mxu0 0
    %879 = vmatprep.subr.bf16.mxu0 0
    %880 = vmatpush1.bf16.msra.mxu0 0
    %881 = vmatprep.subr.bf16.mxu0 0
    %882 = vmatpush1.bf16.msra.mxu0 0
    %883 = vmatprep.subr.bf16.mxu0 0
    %884 = vmatpush1.bf16.msra.mxu0 0
    %885 = vmatprep.subr.bf16.mxu0 0
    %886 = vmatpush1.bf16.msra.mxu0 0
    %887 = vmatprep.subr.bf16.mxu0 0
    %888 = vmatpush1.bf16.msra.mxu0 0
    %889 = vmatprep.mubr.bf16.mxu0 0
    %890 = vmatmul.mubr.bf16.gmra.mrb[0].mxu0 %v856
    %v891 = vpop.f32.mrb[0].mxu0
    %v892 = vadd.f32 0.0, %v891
    %v893 = vpop.f32.mrb[0].mxu0
    %v894 = vadd.f32 0.0, %v893
    %v895 = vpop.f32.mrb[0].mxu0
    %v896 = vpop.f32.mrb[0].mxu0
    %897 = vdwg.mxu0
    %898 = vmatprep.subr.bf16.mxu0 %v560
    %899 = vmatpush1.bf16.msra.mxu0 %v559
    %900 = vmatprep.subr.bf16.mxu0 %v564
    %901 = vmatpush1.bf16.msra.mxu0 %v563
    %902 = vmatprep.subr.bf16.mxu0 %v568
    %903 = vmatpush1.bf16.msra.mxu0 %v567
    %904 = vmatprep.subr.bf16.mxu0 %v572
    %905 = vmatpush1.bf16.msra.mxu0 %v571
    %906 = vmatprep.subr.bf16.mxu0 %v576
    %907 = vmatpush1.bf16.msra.mxu0 %v575
    %908 = vmatprep.subr.bf16.mxu0 %v580
    %909 = vmatpush1.bf16.msra.mxu0 %v579
    %910 = vmatprep.subr.bf16.mxu0 %v584
    %911 = vmatpush1.bf16.msra.mxu0 %v583
    %912 = vmatprep.subr.bf16.mxu0 %v588
    %913 = vmatpush1.bf16.msra.mxu0 %v587
    %914 = vmatprep.subr.bf16.mxu0 0
    %915 = vmatpush1.bf16.msra.mxu0 0
    %916 = vmatprep.subr.bf16.mxu0 0
    %917 = vmatpush1.bf16.msra.mxu0 0
    %918 = vmatprep.subr.bf16.mxu0 0
    %919 = vmatpush1.bf16.msra.mxu0 0
    %920 = vmatprep.subr.bf16.mxu0 0
    %921 = vmatpush1.bf16.msra.mxu0 0
    %922 = vmatprep.subr.bf16.mxu0 0
    %923 = vmatpush1.bf16.msra.mxu0 0
    %924 = vmatprep.subr.bf16.mxu0 0
    %925 = vmatpush1.bf16.msra.mxu0 0
    %926 = vmatprep.subr.bf16.mxu0 0
    %927 = vmatpush1.bf16.msra.mxu0 0
    %928 = vmatprep.subr.bf16.mxu0 0
    %929 = vmatpush1.bf16.msra.mxu0 0
    %930 = vmatprep.mubr.bf16.mxu0 0
    %931 = vmatmul.mubr.bf16.gmra.mrb[0].mxu0 %v856
    %v932 = vpop.f32.mrb[0].mxu0
    %v933 = vadd.f32 0.0, %v932
    %v934 = vpop.f32.mrb[0].mxu0
    %v935 = vadd.f32 0.0, %v934
    %v936 = vpop.f32.mrb[0].mxu0
    %v937 = vpop.f32.mrb[0].mxu0
    %938 = vdwg.mxu0
    %v939 = vadd.f32 %v852, %v892
    %v940 = vadd.f32 %v853, %v894
    %v941 = vadd.f32 %v854, %v933
    %v942 = vadd.f32 %v855, %v935
    %v943 = vxor.u32 %v845, 2147483648
    %v944 = vmul.f32 %v943, 1.442695
    %v945 = vpow.pop %v944
    %v946 = vadd.f32 %v945, 1.0
    %v947 = vrcp.pop %v946
    %v948 = vmul.f32 1.0, %v947
    %v949 = vxor.u32 %v846, 2147483648
    %v950 = vmul.f32 %v949, 1.442695
    %v951 = vpow.pop %v950
    %v952 = vadd.f32 %v951, 1.0
    %v953 = vrcp.pop %v952
    %v954 = vmul.f32 1.0, %v953
    %v955 = vtanh.pop %v847
    %v956 = vxor.u32 %v848, 2147483648
    %v957 = vmul.f32 %v956, 1.442695
    %v958 = vpow.pop %v957
    %v959 = vadd.f32 %v958, 1.0
    %v960 = vrcp.pop %v959
    %v961 = vmul.f32 1.0, %v960
    %v962 = vmul.f32 %v954, %v728
    %v963 = vmul.f32 %v948, %v955
    %v964 = vadd.f32 %v962, %v963
    %v965 = vtanh.pop %v964
    %v966 = vmul.f32 %v961, %v965
    %v967 = vxor.u32 %v939, 2147483648
    %v968 = vmul.f32 %v967, 1.442695
    %v969 = vpow.pop %v968
    %v970 = vadd.f32 %v969, 1.0
    %v971 = vrcp.pop %v970
    %v972 = vmul.f32 1.0, %v971
    %v973 = vxor.u32 %v940, 2147483648
    %v974 = vmul.f32 %v973, 1.442695
    %v975 = vpow.pop %v974
    %v976 = vadd.f32 %v975, 1.0
    %v977 = vrcp.pop %v976
    %v978 = vmul.f32 1.0, %v977
    %v979 = vtanh.pop %v941
    %v980 = vxor.u32 %v942, 2147483648
    %v981 = vmul.f32 %v980, 1.442695
    %v982 = vpow.pop %v981
    %v983 = vadd.f32 %v982, 1.0
    %v984 = vrcp.pop %v983
    %v985 = vmul.f32 1.0, %v984
    %v986 = vmul.f32 %v978, %v752
    %v987 = vmul.f32 %v972, %v979
    %v988 = vadd.f32 %v986, %v987
    %v989 = vtanh.pop %v988
    %v990 = vmul.f32 %v985, %v989
    %s991 = scalar_lea.vmem [#allocation6], 32
    %v992 = vld [vmem:[%s991] sm:$0xff]
    %v993 = vld [vmem:[%s991 + $0x8] sm:$0xff]
    %v994 = vunpack.c.l.bf16 %v992
    %v995 = vunpack.c.h.bf16 %v992
    %v996 = vunpack.c.l.bf16 %v993
    %v997 = vunpack.c.h.bf16 %v993
    %v998 = vpack.c.bf16 %v966, %v966
    %999 = vmatprep.subr.bf16.mxu0 %v304
    %1000 = vmatpush1.bf16.msra.mxu0 %v303
    %1001 = vmatprep.subr.bf16.mxu0 %v308
    %1002 = vmatpush1.bf16.msra.mxu0 %v307
    %1003 = vmatprep.subr.bf16.mxu0 %v312
    %1004 = vmatpush1.bf16.msra.mxu0 %v311
    %1005 = vmatprep.subr.bf16.mxu0 %v316
    %1006 = vmatpush1.bf16.msra.mxu0 %v315
    %1007 = vmatprep.subr.bf16.mxu0 %v320
    %1008 = vmatpush1.bf16.msra.mxu0 %v319
    %1009 = vmatprep.subr.bf16.mxu0 %v324
    %1010 = vmatpush1.bf16.msra.mxu0 %v323
    %1011 = vmatprep.subr.bf16.mxu0 %v328
    %1012 = vmatpush1.bf16.msra.mxu0 %v327
    %1013 = vmatprep.subr.bf16.mxu0 %v332
    %1014 = vmatpush1.bf16.msra.mxu0 %v331
    %1015 = vmatprep.subr.bf16.mxu0 0
    %1016 = vmatpush1.bf16.msra.mxu0 0
    %1017 = vmatprep.subr.bf16.mxu0 0
    %1018 = vmatpush1.bf16.msra.mxu0 0
    %1019 = vmatprep.subr.bf16.mxu0 0
    %1020 = vmatpush1.bf16.msra.mxu0 0
    %1021 = vmatprep.subr.bf16.mxu0 0
    %1022 = vmatpush1.bf16.msra.mxu0 0
    %1023 = vmatprep.subr.bf16.mxu0 0
    %1024 = vmatpush1.bf16.msra.mxu0 0
    %1025 = vmatprep.subr.bf16.mxu0 0
    %1026 = vmatpush1.bf16.msra.mxu0 0
    %1027 = vmatprep.subr.bf16.mxu0 0
    %1028 = vmatpush1.bf16.msra.mxu0 0
    %1029 = vmatprep.subr.bf16.mxu0 0
    %1030 = vmatpush1.bf16.msra.mxu0 0
    %1031 = vmatprep.mubr.bf16.mxu0 0
    %1032 = vmatmul.mubr.bf16.gmra.mrb[0].mxu0 %v998
    %v1033 = vpop.f32.mrb[0].mxu0
    %v1034 = vadd.f32 0.0, %v1033
    %v1035 = vpop.f32.mrb[0].mxu0
    %v1036 = vadd.f32 0.0, %v1035
    %v1037 = vpop.f32.mrb[0].mxu0
    %v1038 = vpop.f32.mrb[0].mxu0
    %1039 = vdwg.mxu0
    %1040 = vmatprep.subr.bf16.mxu0 %v306
    %1041 = vmatpush1.bf16.msra.mxu0 %v305
    %1042 = vmatprep.subr.bf16.mxu0 %v310
    %1043 = vmatpush1.bf16.msra.mxu0 %v309
    %1044 = vmatprep.subr.bf16.mxu0 %v314
    %1045 = vmatpush1.bf16.msra.mxu0 %v313
    %1046 = vmatprep.subr.bf16.mxu0 %v318
    %1047 = vmatpush1.bf16.msra.mxu0 %v317
    %1048 = vmatprep.subr.bf16.mxu0 %v322
    %1049 = vmatpush1.bf16.msra.mxu0 %v321
    %1050 = vmatprep.subr.bf16.mxu0 %v326
    %1051 = vmatpush1.bf16.msra.mxu0 %v325
    %1052 = vmatprep.subr.bf16.mxu0 %v330
    %1053 = vmatpush1.bf16.msra.mxu0 %v329
    %1054 = vmatprep.subr.bf16.mxu0 %v334
    %1055 = vmatpush1.bf16.msra.mxu0 %v333
    %1056 = vmatprep.subr.bf16.mxu0 0
    %1057 = vmatpush1.bf16.msra.mxu0 0
    %1058 = vmatprep.subr.bf16.mxu0 0
    %1059 = vmatpush1.bf16.msra.mxu0 0
    %1060 = vmatprep.subr.bf16.mxu0 0
    %1061 = vmatpush1.bf16.msra.mxu0 0
    %1062 = vmatprep.subr.bf16.mxu0 0
    %1063 = vmatpush1.bf16.msra.mxu0 0
    %1064 = vmatprep.subr.bf16.mxu0 0
    %1065 = vmatpush1.bf16.msra.mxu0 0
    %1066 = vmatprep.subr.bf16.mxu0 0
    %1067 = vmatpush1.bf16.msra.mxu0 0
    %1068 = vmatprep.subr.bf16.mxu0 0
    %1069 = vmatpush1.bf16.msra.mxu0 0
    %1070 = vmatprep.subr.bf16.mxu0 0
    %1071 = vmatpush1.bf16.msra.mxu0 0
    %1072 = vmatprep.mubr.bf16.mxu0 0
    %1073 = vmatmul.mubr.bf16.gmra.mrb[0].mxu0 %v998
    %v1074 = vpop.f32.mrb[0].mxu0
    %v1075 = vadd.f32 0.0, %v1074
    %v1076 = vpop.f32.mrb[0].mxu0
    %v1077 = vadd.f32 0.0, %v1076
    %v1078 = vpop.f32.mrb[0].mxu0
    %v1079 = vpop.f32.mrb[0].mxu0
    %1080 = vdwg.mxu0
    %v1081 = vadd.f32 %v994, %v1034
    %v1082 = vadd.f32 %v995, %v1036
    %v1083 = vadd.f32 %v996, %v1075
    %v1084 = vadd.f32 %v997, %v1077
    %s1085 = scalar_lea.vmem [#allocation7], 80
    %v1086 = vld [vmem:[%s1085] sm:$0xff]
    %v1087 = vld [vmem:[%s1085 + $0x8] sm:$0xff]
    %v1088 = vunpack.c.l.bf16 %v1086
    %v1089 = vunpack.c.h.bf16 %v1086
    %v1090 = vunpack.c.l.bf16 %v1087
    %v1091 = vunpack.c.h.bf16 %v1087
    %v1092 = vpack.c.bf16 %v990, %v990
    %1093 = vmatprep.subr.bf16.mxu0 %v558
    %1094 = vmatpush1.bf16.msra.mxu0 %v557
    %1095 = vmatprep.subr.bf16.mxu0 %v562
    %1096 = vmatpush1.bf16.msra.mxu0 %v561
    %1097 = vmatprep.subr.bf16.mxu0 %v566
    %1098 = vmatpush1.bf16.msra.mxu0 %v565
    %1099 = vmatprep.subr.bf16.mxu0 %v570
    %1100 = vmatpush1.bf16.msra.mxu0 %v569
    %1101 = vmatprep.subr.bf16.mxu0 %v574
    %1102 = vmatpush1.bf16.msra.mxu0 %v573
    %1103 = vmatprep.subr.bf16.mxu0 %v578
    %1104 = vmatpush1.bf16.msra.mxu0 %v577
    %1105 = vmatprep.subr.bf16.mxu0 %v582
    %1106 = vmatpush1.bf16.msra.mxu0 %v581
    %1107 = vmatprep.subr.bf16.mxu0 %v586
    %1108 = vmatpush1.bf16.msra.mxu0 %v585
    %1109 = vmatprep.subr.bf16.mxu0 0
    %1110 = vmatpush1.bf16.msra.mxu0 0
    %1111 = vmatprep.subr.bf16.mxu0 0
    %1112 = vmatpush1.bf16.msra.mxu0 0
    %1113 = vmatprep.subr.bf16.mxu0 0
    %1114 = vmatpush1.bf16.msra.mxu0 0
    %1115 = vmatprep.subr.bf16.mxu0 0
    %1116 = vmatpush1.bf16.msra.mxu0 0
    %1117 = vmatprep.subr.bf16.mxu0 0
    %1118 = vmatpush1.bf16.msra.mxu0 0
    %1119 = vmatprep.subr.bf16.mxu0 0
    %1120 = vmatpush1.bf16.msra.mxu0 0
    %1121 = vmatprep.subr.bf16.mxu0 0
    %1122 = vmatpush1.bf16.msra.mxu0 0
    %1123 = vmatprep.subr.bf16.mxu0 0
    %1124 = vmatpush1.bf16.msra.mxu0 0
    %1125 = vmatprep.mubr.bf16.mxu0 0
    %1126 = vmatmul.mubr.bf16.gmra.mrb[0].mxu0 %v1092
    %v1127 = vpop.f32.mrb[0].mxu0
    %v1128 = vadd.f32 0.0, %v1127
    %v1129 = vpop.f32.mrb[0].mxu0
    %v1130 = vadd.f32 0.0, %v1129
    %v1131 = vpop.f32.mrb[0].mxu0
    %v1132 = vpop.f32.mrb[0].mxu0
    %1133 = vdwg.mxu0
    %1134 = vmatprep.subr.bf16.mxu0 %v560
    %1135 = vmatpush1.bf16.msra.mxu0 %v559
    %1136 = vmatprep.subr.bf16.mxu0 %v564
    %1137 = vmatpush1.bf16.msra.mxu0 %v563
    %1138 = vmatprep.subr.bf16.mxu0 %v568
    %1139 = vmatpush1.bf16.msra.mxu0 %v567
    %1140 = vmatprep.subr.bf16.mxu0 %v572
    %1141 = vmatpush1.bf16.msra.mxu0 %v571
    %1142 = vmatprep.subr.bf16.mxu0 %v576
    %1143 = vmatpush1.bf16.msra.mxu0 %v575
    %1144 = vmatprep.subr.bf16.mxu0 %v580
    %1145 = vmatpush1.bf16.msra.mxu0 %v579
    %1146 = vmatprep.subr.bf16.mxu0 %v584
    %1147 = vmatpush1.bf16.msra.mxu0 %v583
    %1148 = vmatprep.subr.bf16.mxu0 %v588
    %1149 = vmatpush1.bf16.msra.mxu0 %v587
    %1150 = vmatprep.subr.bf16.mxu0 0
    %1151 = vmatpush1.bf16.msra.mxu0 0
    %1152 = vmatprep.subr.bf16.mxu0 0
    %1153 = vmatpush1.bf16.msra.mxu0 0
    %1154 = vmatprep.subr.bf16.mxu0 0
    %1155 = vmatpush1.bf16.msra.mxu0 0
    %1156 = vmatprep.subr.bf16.mxu0 0
    %1157 = vmatpush1.bf16.msra.mxu0 0
    %1158 = vmatprep.subr.bf16.mxu0 0
    %1159 = vmatpush1.bf16.msra.mxu0 0
    %1160 = vmatprep.subr.bf16.mxu0 0
    %1161 = vmatpush1.bf16.msra.mxu0 0
    %1162 = vmatprep.subr.bf16.mxu0 0
    %1163 = vmatpush1.bf16.msra.mxu0 0
    %1164 = vmatprep.subr.bf16.mxu0 0
    %1165 = vmatpush1.bf16.msra.mxu0 0
    %1166 = vmatprep.mubr.bf16.mxu0 0
    %1167 = vmatmul.mubr.bf16.gmra.mrb[0].mxu0 %v1092
    %v1168 = vpop.f32.mrb[0].mxu0
    %v1169 = vadd.f32 0.0, %v1168
    %v1170 = vpop.f32.mrb[0].mxu0
    %v1171 = vadd.f32 0.0, %v1170
    %v1172 = vpop.f32.mrb[0].mxu0
    %v1173 = vpop.f32.mrb[0].mxu0
    %1174 = vdwg.mxu0
    %v1175 = vadd.f32 %v1088, %v1128
    %v1176 = vadd.f32 %v1089, %v1130
    %v1177 = vadd.f32 %v1090, %v1169
    %v1178 = vadd.f32 %v1091, %v1171
    %v1179 = vxor.u32 %v1081, 2147483648
    %v1180 = vmul.f32 %v1179, 1.442695
    %v1181 = vpow.pop %v1180
    %v1182 = vadd.f32 %v1181, 1.0
    %v1183 = vrcp.pop %v1182
    %v1184 = vmul.f32 1.0, %v1183
    %v1185 = vxor.u32 %v1082, 2147483648
    %v1186 = vmul.f32 %v1185, 1.442695
    %v1187 = vpow.pop %v1186
    %v1188 = vadd.f32 %v1187, 1.0
    %v1189 = vrcp.pop %v1188
    %v1190 = vmul.f32 1.0, %v1189
    %v1191 = vtanh.pop %v1083
    %v1192 = vxor.u32 %v1084, 2147483648
    %v1193 = vmul.f32 %v1192, 1.442695
    %v1194 = vpow.pop %v1193
    %v1195 = vadd.f32 %v1194, 1.0
    %v1196 = vrcp.pop %v1195
    %v1197 = vmul.f32 1.0, %v1196
    %v1198 = vmul.f32 %v1190, %v964
    %v1199 = vmul.f32 %v1184, %v1191
    %v1200 = vadd.f32 %v1198, %v1199
    %v1201 = vtanh.pop %v1200
    %v1202 = vmul.f32 %v1197, %v1201
    %v1203 = vxor.u32 %v1175, 2147483648
    %v1204 = vmul.f32 %v1203, 1.442695
    %v1205 = vpow.pop %v1204
    %v1206 = vadd.f32 %v1205, 1.0
    %v1207 = vrcp.pop %v1206
    %v1208 = vmul.f32 1.0, %v1207
    %v1209 = vxor.u32 %v1176, 2147483648
    %v1210 = vmul.f32 %v1209, 1.442695
    %v1211 = vpow.pop %v1210
    %v1212 = vadd.f32 %v1211, 1.0
    %v1213 = vrcp.pop %v1212
    %v1214 = vmul.f32 1.0, %v1213
    %v1215 = vtanh.pop %v1177
    %v1216 = vxor.u32 %v1178, 2147483648
    %v1217 = vmul.f32 %v1216, 1.442695
    %v1218 = vpow.pop %v1217
    %v1219 = vadd.f32 %v1218, 1.0
    %v1220 = vrcp.pop %v1219
    %v1221 = vmul.f32 1.0, %v1220
    %v1222 = vmul.f32 %v1214, %v988
    %v1223 = vmul.f32 %v1208, %v1215
    %v1224 = vadd.f32 %v1222, %v1223
    %v1225 = vtanh.pop %v1224
    %v1226 = vmul.f32 %v1221, %v1225
    %s1227 = scalar_lea.vmem [#allocation6], 48
    %v1228 = vld [vmem:[%s1227] sm:$0xff]
    %v1229 = vld [vmem:[%s1227 + $0x8] sm:$0xff]
    %v1230 = vunpack.c.l.bf16 %v1228
    %v1231 = vunpack.c.h.bf16 %v1228
    %v1232 = vunpack.c.l.bf16 %v1229
    %v1233 = vunpack.c.h.bf16 %v1229
    %v1234 = vpack.c.bf16 %v1202, %v1202
    %1235 = vmatprep.subr.bf16.mxu0 %v304
    %1236 = vmatpush1.bf16.msra.mxu0 %v303
    %1237 = vmatprep.subr.bf16.mxu0 %v308
    %1238 = vmatpush1.bf16.msra.mxu0 %v307
    %1239 = vmatprep.subr.bf16.mxu0 %v312
    %1240 = vmatpush1.bf16.msra.mxu0 %v311
    %1241 = vmatprep.subr.bf16.mxu0 %v316
    %1242 = vmatpush1.bf16.msra.mxu0 %v315
    %1243 = vmatprep.subr.bf16.mxu0 %v320
    %1244 = vmatpush1.bf16.msra.mxu0 %v319
    %1245 = vmatprep.subr.bf16.mxu0 %v324
    %1246 = vmatpush1.bf16.msra.mxu0 %v323
    %1247 = vmatprep.subr.bf16.mxu0 %v328
    %1248 = vmatpush1.bf16.msra.mxu0 %v327
    %1249 = vmatprep.subr.bf16.mxu0 %v332
    %1250 = vmatpush1.bf16.msra.mxu0 %v331
    %1251 = vmatprep.subr.bf16.mxu0 0
    %1252 = vmatpush1.bf16.msra.mxu0 0
    %1253 = vmatprep.subr.bf16.mxu0 0
    %1254 = vmatpush1.bf16.msra.mxu0 0
    %1255 = vmatprep.subr.bf16.mxu0 0
    %1256 = vmatpush1.bf16.msra.mxu0 0
    %1257 = vmatprep.subr.bf16.mxu0 0
    %1258 = vmatpush1.bf16.msra.mxu0 0
    %1259 = vmatprep.subr.bf16.mxu0 0
    %1260 = vmatpush1.bf16.msra.mxu0 0
    %1261 = vmatprep.subr.bf16.mxu0 0
    %1262 = vmatpush1.bf16.msra.mxu0 0
    %1263 = vmatprep.subr.bf16.mxu0 0
    %1264 = vmatpush1.bf16.msra.mxu0 0
    %1265 = vmatprep.subr.bf16.mxu0 0
    %1266 = vmatpush1.bf16.msra.mxu0 0
    %1267 = vmatprep.mubr.bf16.mxu0 0
    %1268 = vmatmul.mubr.bf16.gmra.mrb[0].mxu0 %v1234
    %v1269 = vpop.f32.mrb[0].mxu0
    %v1270 = vadd.f32 0.0, %v1269
    %v1271 = vpop.f32.mrb[0].mxu0
    %v1272 = vadd.f32 0.0, %v1271
    %v1273 = vpop.f32.mrb[0].mxu0
    %v1274 = vpop.f32.mrb[0].mxu0
    %1275 = vdwg.mxu0
    %1276 = vmatprep.subr.bf16.mxu0 %v306
    %1277 = vmatpush1.bf16.msra.mxu0 %v305
    %1278 = vmatprep.subr.bf16.mxu0 %v310
    %1279 = vmatpush1.bf16.msra.mxu0 %v309
    %1280 = vmatprep.subr.bf16.mxu0 %v314
    %1281 = vmatpush1.bf16.msra.mxu0 %v313
    %1282 = vmatprep.subr.bf16.mxu0 %v318
    %1283 = vmatpush1.bf16.msra.mxu0 %v317
    %1284 = vmatprep.subr.bf16.mxu0 %v322
    %1285 = vmatpush1.bf16.msra.mxu0 %v321
    %1286 = vmatprep.subr.bf16.mxu0 %v326
    %1287 = vmatpush1.bf16.msra.mxu0 %v325
    %1288 = vmatprep.subr.bf16.mxu0 %v330
    %1289 = vmatpush1.bf16.msra.mxu0 %v329
    %1290 = vmatprep.subr.bf16.mxu0 %v334
    %1291 = vmatpush1.bf16.msra.mxu0 %v333
    %1292 = vmatprep.subr.bf16.mxu0 0
    %1293 = vmatpush1.bf16.msra.mxu0 0
    %1294 = vmatprep.subr.bf16.mxu0 0
    %1295 = vmatpush1.bf16.msra.mxu0 0
    %1296 = vmatprep.subr.bf16.mxu0 0
    %1297 = vmatpush1.bf16.msra.mxu0 0
    %1298 = vmatprep.subr.bf16.mxu0 0
    %1299 = vmatpush1.bf16.msra.mxu0 0
    %1300 = vmatprep.subr.bf16.mxu0 0
    %1301 = vmatpush1.bf16.msra.mxu0 0
    %1302 = vmatprep.subr.bf16.mxu0 0
    %1303 = vmatpush1.bf16.msra.mxu0 0
    %1304 = vmatprep.subr.bf16.mxu0 0
    %1305 = vmatpush1.bf16.msra.mxu0 0
    %1306 = vmatprep.subr.bf16.mxu0 0
    %1307 = vmatpush1.bf16.msra.mxu0 0
    %1308 = vmatprep.mubr.bf16.mxu0 0
    %1309 = vmatmul.mubr.bf16.gmra.mrb[0].mxu0 %v1234
    %v1310 = vpop.f32.mrb[0].mxu0
    %v1311 = vadd.f32 0.0, %v1310
    %v1312 = vpop.f32.mrb[0].mxu0
    %v1313 = vadd.f32 0.0, %v1312
    %v1314 = vpop.f32.mrb[0].mxu0
    %v1315 = vpop.f32.mrb[0].mxu0
    %1316 = vdwg.mxu0
    %v1317 = vadd.f32 %v1230, %v1270
    %v1318 = vadd.f32 %v1231, %v1272
    %v1319 = vadd.f32 %v1232, %v1311
    %v1320 = vadd.f32 %v1233, %v1313
    %s1321 = scalar_lea.vmem [#allocation7], 64
    %v1322 = vld [vmem:[%s1321] sm:$0xff]
    %v1323 = vld [vmem:[%s1321 + $0x8] sm:$0xff]
    %v1324 = vunpack.c.l.bf16 %v1322
    %v1325 = vunpack.c.h.bf16 %v1322
    %v1326 = vunpack.c.l.bf16 %v1323
    %v1327 = vunpack.c.h.bf16 %v1323
    %v1328 = vpack.c.bf16 %v1226, %v1226
    %1329 = vmatprep.subr.bf16.mxu0 %v558
    %1330 = vmatpush1.bf16.msra.mxu0 %v557
    %1331 = vmatprep.subr.bf16.mxu0 %v562
    %1332 = vmatpush1.bf16.msra.mxu0 %v561
    %1333 = vmatprep.subr.bf16.mxu0 %v566
    %1334 = vmatpush1.bf16.msra.mxu0 %v565
    %1335 = vmatprep.subr.bf16.mxu0 %v570
    %1336 = vmatpush1.bf16.msra.mxu0 %v569
    %1337 = vmatprep.subr.bf16.mxu0 %v574
    %1338 = vmatpush1.bf16.msra.mxu0 %v573
    %1339 = vmatprep.subr.bf16.mxu0 %v578
    %1340 = vmatpush1.bf16.msra.mxu0 %v577
    %1341 = vmatprep.subr.bf16.mxu0 %v582
    %1342 = vmatpush1.bf16.msra.mxu0 %v581
    %1343 = vmatprep.subr.bf16.mxu0 %v586
    %1344 = vmatpush1.bf16.msra.mxu0 %v585
    %1345 = vmatprep.subr.bf16.mxu0 0
    %1346 = vmatpush1.bf16.msra.mxu0 0
    %1347 = vmatprep.subr.bf16.mxu0 0
    %1348 = vmatpush1.bf16.msra.mxu0 0
    %1349 = vmatprep.subr.bf16.mxu0 0
    %1350 = vmatpush1.bf16.msra.mxu0 0
    %1351 = vmatprep.subr.bf16.mxu0 0
    %1352 = vmatpush1.bf16.msra.mxu0 0
    %1353 = vmatprep.subr.bf16.mxu0 0
    %1354 = vmatpush1.bf16.msra.mxu0 0
    %1355 = vmatprep.subr.bf16.mxu0 0
    %1356 = vmatpush1.bf16.msra.mxu0 0
    %1357 = vmatprep.subr.bf16.mxu0 0
    %1358 = vmatpush1.bf16.msra.mxu0 0
    %1359 = vmatprep.subr.bf16.mxu0 0
    %1360 = vmatpush1.bf16.msra.mxu0 0
    %1361 = vmatprep.mubr.bf16.mxu0 0
    %1362 = vmatmul.mubr.bf16.gmra.mrb[0].mxu0 %v1328
    %v1363 = vpop.f32.mrb[0].mxu0
    %v1364 = vadd.f32 0.0, %v1363
    %v1365 = vpop.f32.mrb[0].mxu0
    %v1366 = vadd.f32 0.0, %v1365
    %v1367 = vpop.f32.mrb[0].mxu0
    %v1368 = vpop.f32.mrb[0].mxu0
    %1369 = vdwg.mxu0
    %1370 = vmatprep.subr.bf16.mxu0 %v560
    %1371 = vmatpush1.bf16.msra.mxu0 %v559
    %1372 = vmatprep.subr.bf16.mxu0 %v564
    %1373 = vmatpush1.bf16.msra.mxu0 %v563
    %1374 = vmatprep.subr.bf16.mxu0 %v568
    %1375 = vmatpush1.bf16.msra.mxu0 %v567
    %1376 = vmatprep.subr.bf16.mxu0 %v572
    %1377 = vmatpush1.bf16.msra.mxu0 %v571
    %1378 = vmatprep.subr.bf16.mxu0 %v576
    %1379 = vmatpush1.bf16.msra.mxu0 %v575
    %1380 = vmatprep.subr.bf16.mxu0 %v580
    %1381 = vmatpush1.bf16.msra.mxu0 %v579
    %1382 = vmatprep.subr.bf16.mxu0 %v584
    %1383 = vmatpush1.bf16.msra.mxu0 %v583
    %1384 = vmatprep.subr.bf16.mxu0 %v588
    %1385 = vmatpush1.bf16.msra.mxu0 %v587
    %1386 = vmatprep.subr.bf16.mxu0 0
    %1387 = vmatpush1.bf16.msra.mxu0 0
    %1388 = vmatprep.subr.bf16.mxu0 0
    %1389 = vmatpush1.bf16.msra.mxu0 0
    %1390 = vmatprep.subr.bf16.mxu0 0
    %1391 = vmatpush1.bf16.msra.mxu0 0
    %1392 = vmatprep.subr.bf16.mxu0 0
    %1393 = vmatpush1.bf16.msra.mxu0 0
    %1394 = vmatprep.subr.bf16.mxu0 0
    %1395 = vmatpush1.bf16.msra.mxu0 0
    %1396 = vmatprep.subr.bf16.mxu0 0
    %1397 = vmatpush1.bf16.msra.mxu0 0
    %1398 = vmatprep.subr.bf16.mxu0 0
    %1399 = vmatpush1.bf16.msra.mxu0 0
    %1400 = vmatprep.subr.bf16.mxu0 0
    %1401 = vmatpush1.bf16.msra.mxu0 0
    %1402 = vmatprep.mubr.bf16.mxu0 0
    %1403 = vmatmul.mubr.bf16.gmra.mrb[0].mxu0 %v1328
    %v1404 = vpop.f32.mrb[0].mxu0
    %v1405 = vadd.f32 0.0, %v1404
    %v1406 = vpop.f32.mrb[0].mxu0
    %v1407 = vadd.f32 0.0, %v1406
    %v1408 = vpop.f32.mrb[0].mxu0
    %v1409 = vpop.f32.mrb[0].mxu0
    %1410 = vdwg.mxu0
    %v1411 = vadd.f32 %v1324, %v1364
    %v1412 = vadd.f32 %v1325, %v1366
    %v1413 = vadd.f32 %v1326, %v1405
    %v1414 = vadd.f32 %v1327, %v1407
    %v1415 = vxor.u32 %v1317, 2147483648
    %v1416 = vmul.f32 %v1415, 1.442695
    %v1417 = vpow.pop %v1416
    %v1418 = vadd.f32 %v1417, 1.0
    %v1419 = vrcp.pop %v1418
    %v1420 = vmul.f32 1.0, %v1419
    %v1421 = vxor.u32 %v1318, 2147483648
    %v1422 = vmul.f32 %v1421, 1.442695
    %v1423 = vpow.pop %v1422
    %v1424 = vadd.f32 %v1423, 1.0
    %v1425 = vrcp.pop %v1424
    %v1426 = vmul.f32 1.0, %v1425
    %v1427 = vtanh.pop %v1319
    %v1428 = vxor.u32 %v1320, 2147483648
    %v1429 = vmul.f32 %v1428, 1.442695
    %v1430 = vpow.pop %v1429
    %v1431 = vadd.f32 %v1430, 1.0
    %v1432 = vrcp.pop %v1431
    %v1433 = vmul.f32 1.0, %v1432
    %v1434 = vmul.f32 %v1426, %v1200
    %v1435 = vmul.f32 %v1420, %v1427
    %v1436 = vadd.f32 %v1434, %v1435
    %v1437 = vtanh.pop %v1436
    %v1438 = vmul.f32 %v1433, %v1437
    %v1439 = vxor.u32 %v1411, 2147483648
    %v1440 = vmul.f32 %v1439, 1.442695
    %v1441 = vpow.pop %v1440
    %v1442 = vadd.f32 %v1441, 1.0
    %v1443 = vrcp.pop %v1442
    %v1444 = vmul.f32 1.0, %v1443
    %v1445 = vxor.u32 %v1412, 2147483648
    %v1446 = vmul.f32 %v1445, 1.442695
    %v1447 = vpow.pop %v1446
    %v1448 = vadd.f32 %v1447, 1.0
    %v1449 = vrcp.pop %v1448
    %v1450 = vmul.f32 1.0, %v1449
    %v1451 = vtanh.pop %v1413
    %v1452 = vxor.u32 %v1414, 2147483648
    %v1453 = vmul.f32 %v1452, 1.442695
    %v1454 = vpow.pop %v1453
    %v1455 = vadd.f32 %v1454, 1.0
    %v1456 = vrcp.pop %v1455
    %v1457 = vmul.f32 1.0, %v1456
    %v1458 = vmul.f32 %v1450, %v1224
    %v1459 = vmul.f32 %v1444, %v1451
    %v1460 = vadd.f32 %v1458, %v1459
    %v1461 = vtanh.pop %v1460
    %v1462 = vmul.f32 %v1457, %v1461
    %s1463 = scalar_lea.vmem [#allocation6], 64
    %v1464 = vld [vmem:[%s1463] sm:$0xff]
    %v1465 = vld [vmem:[%s1463 + $0x8] sm:$0xff]
    %v1466 = vunpack.c.l.bf16 %v1464
    %v1467 = vunpack.c.h.bf16 %v1464
    %v1468 = vunpack.c.l.bf16 %v1465
    %v1469 = vunpack.c.h.bf16 %v1465
    %v1470 = vpack.c.bf16 %v1438, %v1438
    %1471 = vmatprep.subr.bf16.mxu0 %v304
    %1472 = vmatpush1.bf16.msra.mxu0 %v303
    %1473 = vmatprep.subr.bf16.mxu0 %v308
    %1474 = vmatpush1.bf16.msra.mxu0 %v307
    %1475 = vmatprep.subr.bf16.mxu0 %v312
    %1476 = vmatpush1.bf16.msra.mxu0 %v311
    %1477 = vmatprep.subr.bf16.mxu0 %v316
    %1478 = vmatpush1.bf16.msra.mxu0 %v315
    %1479 = vmatprep.subr.bf16.mxu0 %v320
    %1480 = vmatpush1.bf16.msra.mxu0 %v319
    %1481 = vmatprep.subr.bf16.mxu0 %v324
    %1482 = vmatpush1.bf16.msra.mxu0 %v323
    %1483 = vmatprep.subr.bf16.mxu0 %v328
    %1484 = vmatpush1.bf16.msra.mxu0 %v327
    %1485 = vmatprep.subr.bf16.mxu0 %v332
    %1486 = vmatpush1.bf16.msra.mxu0 %v331
    %1487 = vmatprep.subr.bf16.mxu0 0
    %1488 = vmatpush1.bf16.msra.mxu0 0
    %1489 = vmatprep.subr.bf16.mxu0 0
    %1490 = vmatpush1.bf16.msra.mxu0 0
    %1491 = vmatprep.subr.bf16.mxu0 0
    %1492 = vmatpush1.bf16.msra.mxu0 0
    %1493 = vmatprep.subr.bf16.mxu0 0
    %1494 = vmatpush1.bf16.msra.mxu0 0
    %1495 = vmatprep.subr.bf16.mxu0 0
    %1496 = vmatpush1.bf16.msra.mxu0 0
    %1497 = vmatprep.subr.bf16.mxu0 0
    %1498 = vmatpush1.bf16.msra.mxu0 0
    %1499 = vmatprep.subr.bf16.mxu0 0
    %1500 = vmatpush1.bf16.msra.mxu0 0
    %1501 = vmatprep.subr.bf16.mxu0 0
    %1502 = vmatpush1.bf16.msra.mxu0 0
    %1503 = vmatprep.mubr.bf16.mxu0 0
    %1504 = vmatmul.mubr.bf16.gmra.mrb[0].mxu0 %v1470
    %v1505 = vpop.f32.mrb[0].mxu0
    %v1506 = vadd.f32 0.0, %v1505
    %v1507 = vpop.f32.mrb[0].mxu0
    %v1508 = vadd.f32 0.0, %v1507
    %v1509 = vpop.f32.mrb[0].mxu0
    %v1510 = vpop.f32.mrb[0].mxu0
    %1511 = vdwg.mxu0
    %1512 = vmatprep.subr.bf16.mxu0 %v306
    %1513 = vmatpush1.bf16.msra.mxu0 %v305
    %1514 = vmatprep.subr.bf16.mxu0 %v310
    %1515 = vmatpush1.bf16.msra.mxu0 %v309
    %1516 = vmatprep.subr.bf16.mxu0 %v314
    %1517 = vmatpush1.bf16.msra.mxu0 %v313
    %1518 = vmatprep.subr.bf16.mxu0 %v318
    %1519 = vmatpush1.bf16.msra.mxu0 %v317
    %1520 = vmatprep.subr.bf16.mxu0 %v322
    %1521 = vmatpush1.bf16.msra.mxu0 %v321
    %1522 = vmatprep.subr.bf16.mxu0 %v326
    %1523 = vmatpush1.bf16.msra.mxu0 %v325
    %1524 = vmatprep.subr.bf16.mxu0 %v330
    %1525 = vmatpush1.bf16.msra.mxu0 %v329
    %1526 = vmatprep.subr.bf16.mxu0 %v334
    %1527 = vmatpush1.bf16.msra.mxu0 %v333
    %1528 = vmatprep.subr.bf16.mxu0 0
    %1529 = vmatpush1.bf16.msra.mxu0 0
    %1530 = vmatprep.subr.bf16.mxu0 0
    %1531 = vmatpush1.bf16.msra.mxu0 0
    %1532 = vmatprep.subr.bf16.mxu0 0
    %1533 = vmatpush1.bf16.msra.mxu0 0
    %1534 = vmatprep.subr.bf16.mxu0 0
    %1535 = vmatpush1.bf16.msra.mxu0 0
    %1536 = vmatprep.subr.bf16.mxu0 0
    %1537 = vmatpush1.bf16.msra.mxu0 0
    %1538 = vmatprep.subr.bf16.mxu0 0
    %1539 = vmatpush1.bf16.msra.mxu0 0
    %1540 = vmatprep.subr.bf16.mxu0 0
    %1541 = vmatpush1.bf16.msra.mxu0 0
    %1542 = vmatprep.subr.bf16.mxu0 0
    %1543 = vmatpush1.bf16.msra.mxu0 0
    %1544 = vmatprep.mubr.bf16.mxu0 0
    %1545 = vmatmul.mubr.bf16.gmra.mrb[0].mxu0 %v1470
    %v1546 = vpop.f32.mrb[0].mxu0
    %v1547 = vadd.f32 0.0, %v1546
    %v1548 = vpop.f32.mrb[0].mxu0
    %v1549 = vadd.f32 0.0, %v1548
    %v1550 = vpop.f32.mrb[0].mxu0
    %v1551 = vpop.f32.mrb[0].mxu0
    %1552 = vdwg.mxu0
    %v1553 = vadd.f32 %v1466, %v1506
    %v1554 = vadd.f32 %v1467, %v1508
    %v1555 = vadd.f32 %v1468, %v1547
    %v1556 = vadd.f32 %v1469, %v1549
    %s1557 = scalar_lea.vmem [#allocation7], 48
    %v1558 = vld [vmem:[%s1557] sm:$0xff]
    %v1559 = vld [vmem:[%s1557 + $0x8] sm:$0xff]
    %v1560 = vunpack.c.l.bf16 %v1558
    %v1561 = vunpack.c.h.bf16 %v1558
    %v1562 = vunpack.c.l.bf16 %v1559
    %v1563 = vunpack.c.h.bf16 %v1559
    %v1564 = vpack.c.bf16 %v1462, %v1462
    %1565 = vmatprep.subr.bf16.mxu0 %v558
    %1566 = vmatpush1.bf16.msra.mxu0 %v557
    %1567 = vmatprep.subr.bf16.mxu0 %v562
    %1568 = vmatpush1.bf16.msra.mxu0 %v561
    %1569 = vmatprep.subr.bf16.mxu0 %v566
    %1570 = vmatpush1.bf16.msra.mxu0 %v565
    %1571 = vmatprep.subr.bf16.mxu0 %v570
    %1572 = vmatpush1.bf16.msra.mxu0 %v569
    %1573 = vmatprep.subr.bf16.mxu0 %v574
    %1574 = vmatpush1.bf16.msra.mxu0 %v573
    %1575 = vmatprep.subr.bf16.mxu0 %v578
    %1576 = vmatpush1.bf16.msra.mxu0 %v577
    %1577 = vmatprep.subr.bf16.mxu0 %v582
    %1578 = vmatpush1.bf16.msra.mxu0 %v581
    %1579 = vmatprep.subr.bf16.mxu0 %v586
    %1580 = vmatpush1.bf16.msra.mxu0 %v585
    %1581 = vmatprep.subr.bf16.mxu0 0
    %1582 = vmatpush1.bf16.msra.mxu0 0
    %1583 = vmatprep.subr.bf16.mxu0 0
    %1584 = vmatpush1.bf16.msra.mxu0 0
    %1585 = vmatprep.subr.bf16.mxu0 0
    %1586 = vmatpush1.bf16.msra.mxu0 0
    %1587 = vmatprep.subr.bf16.mxu0 0
    %1588 = vmatpush1.bf16.msra.mxu0 0
    %1589 = vmatprep.subr.bf16.mxu0 0
    %1590 = vmatpush1.bf16.msra.mxu0 0
    %1591 = vmatprep.subr.bf16.mxu0 0
    %1592 = vmatpush1.bf16.msra.mxu0 0
    %1593 = vmatprep.subr.bf16.mxu0 0
    %1594 = vmatpush1.bf16.msra.mxu0 0
    %1595 = vmatprep.subr.bf16.mxu0 0
    %1596 = vmatpush1.bf16.msra.mxu0 0
    %1597 = vmatprep.mubr.bf16.mxu0 0
    %1598 = vmatmul.mubr.bf16.gmra.mrb[0].mxu0 %v1564
    %v1599 = vpop.f32.mrb[0].mxu0
    %v1600 = vadd.f32 0.0, %v1599
    %v1601 = vpop.f32.mrb[0].mxu0
    %v1602 = vadd.f32 0.0, %v1601
    %v1603 = vpop.f32.mrb[0].mxu0
    %v1604 = vpop.f32.mrb[0].mxu0
    %1605 = vdwg.mxu0
    %1606 = vmatprep.subr.bf16.mxu0 %v560
    %1607 = vmatpush1.bf16.msra.mxu0 %v559
    %1608 = vmatprep.subr.bf16.mxu0 %v564
    %1609 = vmatpush1.bf16.msra.mxu0 %v563
    %1610 = vmatprep.subr.bf16.mxu0 %v568
    %1611 = vmatpush1.bf16.msra.mxu0 %v567
    %1612 = vmatprep.subr.bf16.mxu0 %v572
    %1613 = vmatpush1.bf16.msra.mxu0 %v571
    %1614 = vmatprep.subr.bf16.mxu0 %v576
    %1615 = vmatpush1.bf16.msra.mxu0 %v575
    %1616 = vmatprep.subr.bf16.mxu0 %v580
    %1617 = vmatpush1.bf16.msra.mxu0 %v579
    %1618 = vmatprep.subr.bf16.mxu0 %v584
    %1619 = vmatpush1.bf16.msra.mxu0 %v583
    %1620 = vmatprep.subr.bf16.mxu0 %v588
    %1621 = vmatpush1.bf16.msra.mxu0 %v587
    %1622 = vmatprep.subr.bf16.mxu0 0
    %1623 = vmatpush1.bf16.msra.mxu0 0
    %1624 = vmatprep.subr.bf16.mxu0 0
    %1625 = vmatpush1.bf16.msra.mxu0 0
    %1626 = vmatprep.subr.bf16.mxu0 0
    %1627 = vmatpush1.bf16.msra.mxu0 0
    %1628 = vmatprep.subr.bf16.mxu0 0
    %1629 = vmatpush1.bf16.msra.mxu0 0
    %1630 = vmatprep.subr.bf16.mxu0 0
    %1631 = vmatpush1.bf16.msra.mxu0 0
    %1632 = vmatprep.subr.bf16.mxu0 0
    %1633 = vmatpush1.bf16.msra.mxu0 0
    %1634 = vmatprep.subr.bf16.mxu0 0
    %1635 = vmatpush1.bf16.msra.mxu0 0
    %1636 = vmatprep.subr.bf16.mxu0 0
    %1637 = vmatpush1.bf16.msra.mxu0 0
    %1638 = vmatprep.mubr.bf16.mxu0 0
    %1639 = vmatmul.mubr.bf16.gmra.mrb[0].mxu0 %v1564
    %v1640 = vpop.f32.mrb[0].mxu0
    %v1641 = vadd.f32 0.0, %v1640
    %v1642 = vpop.f32.mrb[0].mxu0
    %v1643 = vadd.f32 0.0, %v1642
    %v1644 = vpop.f32.mrb[0].mxu0
    %v1645 = vpop.f32.mrb[0].mxu0
    %1646 = vdwg.mxu0
    %v1647 = vadd.f32 %v1560, %v1600
    %v1648 = vadd.f32 %v1561, %v1602
    %v1649 = vadd.f32 %v1562, %v1641
    %v1650 = vadd.f32 %v1563, %v1643
    %v1651 = vxor.u32 %v1553, 2147483648
    %v1652 = vmul.f32 %v1651, 1.442695
    %v1653 = vpow.pop %v1652
    %v1654 = vadd.f32 %v1653, 1.0
    %v1655 = vrcp.pop %v1654
    %v1656 = vmul.f32 1.0, %v1655
    %v1657 = vxor.u32 %v1554, 2147483648
    %v1658 = vmul.f32 %v1657, 1.442695
    %v1659 = vpow.pop %v1658
    %v1660 = vadd.f32 %v1659, 1.0
    %v1661 = vrcp.pop %v1660
    %v1662 = vmul.f32 1.0, %v1661
    %v1663 = vtanh.pop %v1555
    %v1664 = vxor.u32 %v1556, 2147483648
    %v1665 = vmul.f32 %v1664, 1.442695
    %v1666 = vpow.pop %v1665
    %v1667 = vadd.f32 %v1666, 1.0
    %v1668 = vrcp.pop %v1667
    %v1669 = vmul.f32 1.0, %v1668
    %v1670 = vmul.f32 %v1662, %v1436
    %v1671 = vmul.f32 %v1656, %v1663
    %v1672 = vadd.f32 %v1670, %v1671
    %v1673 = vtanh.pop %v1672
    %v1674 = vmul.f32 %v1669, %v1673
    %v1675 = vxor.u32 %v1647, 2147483648
    %v1676 = vmul.f32 %v1675, 1.442695
    %v1677 = vpow.pop %v1676
    %v1678 = vadd.f32 %v1677, 1.0
    %v1679 = vrcp.pop %v1678
    %v1680 = vmul.f32 1.0, %v1679
    %v1681 = vxor.u32 %v1648, 2147483648
    %v1682 = vmul.f32 %v1681, 1.442695
    %v1683 = vpow.pop %v1682
    %v1684 = vadd.f32 %v1683, 1.0
    %v1685 = vrcp.pop %v1684
    %v1686 = vmul.f32 1.0, %v1685
    %v1687 = vtanh.pop %v1649
    %v1688 = vxor.u32 %v1650, 2147483648
    %v1689 = vmul.f32 %v1688, 1.442695
    %v1690 = vpow.pop %v1689
    %v1691 = vadd.f32 %v1690, 1.0
    %v1692 = vrcp.pop %v1691
    %v1693 = vmul.f32 1.0, %v1692
    %v1694 = vmul.f32 %v1686, %v1460
    %v1695 = vmul.f32 %v1680, %v1687
    %v1696 = vadd.f32 %v1694, %v1695
    %v1697 = vtanh.pop %v1696
    %v1698 = vmul.f32 %v1693, %v1697
    %s1699 = scalar_lea.vmem [#allocation6], 80
    %v1700 = vld [vmem:[%s1699] sm:$0xff]
    %v1701 = vld [vmem:[%s1699 + $0x8] sm:$0xff]
    %v1702 = vunpack.c.l.bf16 %v1700
    %v1703 = vunpack.c.h.bf16 %v1700
    %v1704 = vunpack.c.l.bf16 %v1701
    %v1705 = vunpack.c.h.bf16 %v1701
    %v1706 = vpack.c.bf16 %v1674, %v1674
    %1707 = vmatprep.subr.bf16.mxu0 %v304
    %1708 = vmatpush1.bf16.msra.mxu0 %v303
    %1709 = vmatprep.subr.bf16.mxu0 %v308
    %1710 = vmatpush1.bf16.msra.mxu0 %v307
    %1711 = vmatprep.subr.bf16.mxu0 %v312
    %1712 = vmatpush1.bf16.msra.mxu0 %v311
    %1713 = vmatprep.subr.bf16.mxu0 %v316
    %1714 = vmatpush1.bf16.msra.mxu0 %v315
    %1715 = vmatprep.subr.bf16.mxu0 %v320
    %1716 = vmatpush1.bf16.msra.mxu0 %v319
    %1717 = vmatprep.subr.bf16.mxu0 %v324
    %1718 = vmatpush1.bf16.msra.mxu0 %v323
    %1719 = vmatprep.subr.bf16.mxu0 %v328
    %1720 = vmatpush1.bf16.msra.mxu0 %v327
    %1721 = vmatprep.subr.bf16.mxu0 %v332
    %1722 = vmatpush1.bf16.msra.mxu0 %v331
    %1723 = vmatprep.subr.bf16.mxu0 0
    %1724 = vmatpush1.bf16.msra.mxu0 0
    %1725 = vmatprep.subr.bf16.mxu0 0
    %1726 = vmatpush1.bf16.msra.mxu0 0
    %1727 = vmatprep.subr.bf16.mxu0 0
    %1728 = vmatpush1.bf16.msra.mxu0 0
    %1729 = vmatprep.subr.bf16.mxu0 0
    %1730 = vmatpush1.bf16.msra.mxu0 0
    %1731 = vmatprep.subr.bf16.mxu0 0
    %1732 = vmatpush1.bf16.msra.mxu0 0
    %1733 = vmatprep.subr.bf16.mxu0 0
    %1734 = vmatpush1.bf16.msra.mxu0 0
    %1735 = vmatprep.subr.bf16.mxu0 0
    %1736 = vmatpush1.bf16.msra.mxu0 0
    %1737 = vmatprep.subr.bf16.mxu0 0
    %1738 = vmatpush1.bf16.msra.mxu0 0
    %1739 = vmatprep.mubr.bf16.mxu0 0
    %1740 = vmatmul.mubr.bf16.gmra.mrb[0].mxu0 %v1706
    %v1741 = vpop.f32.mrb[0].mxu0
    %v1742 = vadd.f32 0.0, %v1741
    %v1743 = vpop.f32.mrb[0].mxu0
    %v1744 = vadd.f32 0.0, %v1743
    %v1745 = vpop.f32.mrb[0].mxu0
    %v1746 = vpop.f32.mrb[0].mxu0
    %1747 = vdwg.mxu0
    %1748 = vmatprep.subr.bf16.mxu0 %v306
    %1749 = vmatpush1.bf16.msra.mxu0 %v305
    %1750 = vmatprep.subr.bf16.mxu0 %v310
    %1751 = vmatpush1.bf16.msra.mxu0 %v309
    %1752 = vmatprep.subr.bf16.mxu0 %v314
    %1753 = vmatpush1.bf16.msra.mxu0 %v313
    %1754 = vmatprep.subr.bf16.mxu0 %v318
    %1755 = vmatpush1.bf16.msra.mxu0 %v317
    %1756 = vmatprep.subr.bf16.mxu0 %v322
    %1757 = vmatpush1.bf16.msra.mxu0 %v321
    %1758 = vmatprep.subr.bf16.mxu0 %v326
    %1759 = vmatpush1.bf16.msra.mxu0 %v325
    %1760 = vmatprep.subr.bf16.mxu0 %v330
    %1761 = vmatpush1.bf16.msra.mxu0 %v329
    %1762 = vmatprep.subr.bf16.mxu0 %v334
    %1763 = vmatpush1.bf16.msra.mxu0 %v333
    %1764 = vmatprep.subr.bf16.mxu0 0
    %1765 = vmatpush1.bf16.msra.mxu0 0
    %1766 = vmatprep.subr.bf16.mxu0 0
    %1767 = vmatpush1.bf16.msra.mxu0 0
    %1768 = vmatprep.subr.bf16.mxu0 0
    %1769 = vmatpush1.bf16.msra.mxu0 0
    %1770 = vmatprep.subr.bf16.mxu0 0
    %1771 = vmatpush1.bf16.msra.mxu0 0
    %1772 = vmatprep.subr.bf16.mxu0 0
    %1773 = vmatpush1.bf16.msra.mxu0 0
    %1774 = vmatprep.subr.bf16.mxu0 0
    %1775 = vmatpush1.bf16.msra.mxu0 0
    %1776 = vmatprep.subr.bf16.mxu0 0
    %1777 = vmatpush1.bf16.msra.mxu0 0
    %1778 = vmatprep.subr.bf16.mxu0 0
    %1779 = vmatpush1.bf16.msra.mxu0 0
    %1780 = vmatprep.mubr.bf16.mxu0 0
    %1781 = vmatmul.mubr.bf16.gmra.mrb[0].mxu0 %v1706
    %v1782 = vpop.f32.mrb[0].mxu0
    %v1783 = vadd.f32 0.0, %v1782
    %v1784 = vpop.f32.mrb[0].mxu0
    %v1785 = vadd.f32 0.0, %v1784
    %v1786 = vpop.f32.mrb[0].mxu0
    %v1787 = vpop.f32.mrb[0].mxu0
    %1788 = vdwg.mxu0
    %v1789 = vadd.f32 %v1702, %v1742
    %v1790 = vadd.f32 %v1703, %v1744
    %v1791 = vadd.f32 %v1704, %v1783
    %v1792 = vadd.f32 %v1705, %v1785
    %s1793 = scalar_lea.vmem [#allocation7], 32
    %v1794 = vld [vmem:[%s1793] sm:$0xff]
    %v1795 = vld [vmem:[%s1793 + $0x8] sm:$0xff]
    %v1796 = vunpack.c.l.bf16 %v1794
    %v1797 = vunpack.c.h.bf16 %v1794
    %v1798 = vunpack.c.l.bf16 %v1795
    %v1799 = vunpack.c.h.bf16 %v1795
    %v1800 = vpack.c.bf16 %v1698, %v1698
    %1801 = vmatprep.subr.bf16.mxu0 %v558
    %1802 = vmatpush1.bf16.msra.mxu0 %v557
    %1803 = vmatprep.subr.bf16.mxu0 %v562
    %1804 = vmatpush1.bf16.msra.mxu0 %v561
    %1805 = vmatprep.subr.bf16.mxu0 %v566
    %1806 = vmatpush1.bf16.msra.mxu0 %v565
    %1807 = vmatprep.subr.bf16.mxu0 %v570
    %1808 = vmatpush1.bf16.msra.mxu0 %v569
    %1809 = vmatprep.subr.bf16.mxu0 %v574
    %1810 = vmatpush1.bf16.msra.mxu0 %v573
    %1811 = vmatprep.subr.bf16.mxu0 %v578
    %1812 = vmatpush1.bf16.msra.mxu0 %v577
    %1813 = vmatprep.subr.bf16.mxu0 %v582
    %1814 = vmatpush1.bf16.msra.mxu0 %v581
    %1815 = vmatprep.subr.bf16.mxu0 %v586
    %1816 = vmatpush1.bf16.msra.mxu0 %v585
    %1817 = vmatprep.subr.bf16.mxu0 0
    %1818 = vmatpush1.bf16.msra.mxu0 0
    %1819 = vmatprep.subr.bf16.mxu0 0
    %1820 = vmatpush1.bf16.msra.mxu0 0
    %1821 = vmatprep.subr.bf16.mxu0 0
    %1822 = vmatpush1.bf16.msra.mxu0 0
    %1823 = vmatprep.subr.bf16.mxu0 0
    %1824 = vmatpush1.bf16.msra.mxu0 0
    %1825 = vmatprep.subr.bf16.mxu0 0
    %1826 = vmatpush1.bf16.msra.mxu0 0
    %1827 = vmatprep.subr.bf16.mxu0 0
    %1828 = vmatpush1.bf16.msra.mxu0 0
    %1829 = vmatprep.subr.bf16.mxu0 0
    %1830 = vmatpush1.bf16.msra.mxu0 0
    %1831 = vmatprep.subr.bf16.mxu0 0
    %1832 = vmatpush1.bf16.msra.mxu0 0
    %1833 = vmatprep.mubr.bf16.mxu0 0
    %1834 = vmatmul.mubr.bf16.gmra.mrb[0].mxu0 %v1800
    %v1835 = vpop.f32.mrb[0].mxu0
    %v1836 = vadd.f32 0.0, %v1835
    %v1837 = vpop.f32.mrb[0].mxu0
    %v1838 = vadd.f32 0.0, %v1837
    %v1839 = vpop.f32.mrb[0].mxu0
    %v1840 = vpop.f32.mrb[0].mxu0
    %1841 = vdwg.mxu0
    %1842 = vmatprep.subr.bf16.mxu0 %v560
    %1843 = vmatpush1.bf16.msra.mxu0 %v559
    %1844 = vmatprep.subr.bf16.mxu0 %v564
    %1845 = vmatpush1.bf16.msra.mxu0 %v563
    %1846 = vmatprep.subr.bf16.mxu0 %v568
    %1847 = vmatpush1.bf16.msra.mxu0 %v567
    %1848 = vmatprep.subr.bf16.mxu0 %v572
    %1849 = vmatpush1.bf16.msra.mxu0 %v571
    %1850 = vmatprep.subr.bf16.mxu0 %v576
    %1851 = vmatpush1.bf16.msra.mxu0 %v575
    %1852 = vmatprep.subr.bf16.mxu0 %v580
    %1853 = vmatpush1.bf16.msra.mxu0 %v579
    %1854 = vmatprep.subr.bf16.mxu0 %v584
    %1855 = vmatpush1.bf16.msra.mxu0 %v583
    %1856 = vmatprep.subr.bf16.mxu0 %v588
    %1857 = vmatpush1.bf16.msra.mxu0 %v587
    %1858 = vmatprep.subr.bf16.mxu0 0
    %1859 = vmatpush1.bf16.msra.mxu0 0
    %1860 = vmatprep.subr.bf16.mxu0 0
    %1861 = vmatpush1.bf16.msra.mxu0 0
    %1862 = vmatprep.subr.bf16.mxu0 0
    %1863 = vmatpush1.bf16.msra.mxu0 0
    %1864 = vmatprep.subr.bf16.mxu0 0
    %1865 = vmatpush1.bf16.msra.mxu0 0
    %1866 = vmatprep.subr.bf16.mxu0 0
    %1867 = vmatpush1.bf16.msra.mxu0 0
    %1868 = vmatprep.subr.bf16.mxu0 0
    %1869 = vmatpush1.bf16.msra.mxu0 0
    %1870 = vmatprep.subr.bf16.mxu0 0
    %1871 = vmatpush1.bf16.msra.mxu0 0
    %1872 = vmatprep.subr.bf16.mxu0 0
    %1873 = vmatpush1.bf16.msra.mxu0 0
    %1874 = vmatprep.mubr.bf16.mxu0 0
    %1875 = vmatmul.mubr.bf16.gmra.mrb[0].mxu0 %v1800
    %v1876 = vpop.f32.mrb[0].mxu0
    %v1877 = vadd.f32 0.0, %v1876
    %v1878 = vpop.f32.mrb[0].mxu0
    %v1879 = vadd.f32 0.0, %v1878
    %v1880 = vpop.f32.mrb[0].mxu0
    %v1881 = vpop.f32.mrb[0].mxu0
    %1882 = vdwg.mxu0
    %v1883 = vadd.f32 %v1796, %v1836
    %v1884 = vadd.f32 %v1797, %v1838
    %v1885 = vadd.f32 %v1798, %v1877
    %v1886 = vadd.f32 %v1799, %v1879
    %v1887 = vxor.u32 %v1789, 2147483648
    %v1888 = vmul.f32 %v1887, 1.442695
    %v1889 = vpow.pop %v1888
    %v1890 = vadd.f32 %v1889, 1.0
    %v1891 = vrcp.pop %v1890
    %v1892 = vmul.f32 1.0, %v1891
    %v1893 = vxor.u32 %v1790, 2147483648
    %v1894 = vmul.f32 %v1893, 1.442695
    %v1895 = vpow.pop %v1894
    %v1896 = vadd.f32 %v1895, 1.0
    %v1897 = vrcp.pop %v1896
    %v1898 = vmul.f32 1.0, %v1897
    %v1899 = vtanh.pop %v1791
    %v1900 = vxor.u32 %v1792, 2147483648
    %v1901 = vmul.f32 %v1900, 1.442695
    %v1902 = vpow.pop %v1901
    %v1903 = vadd.f32 %v1902, 1.0
    %v1904 = vrcp.pop %v1903
    %v1905 = vmul.f32 1.0, %v1904
    %v1906 = vmul.f32 %v1898, %v1672
    %v1907 = vmul.f32 %v1892, %v1899
    %v1908 = vadd.f32 %v1906, %v1907
    %v1909 = vtanh.pop %v1908
    %v1910 = vmul.f32 %v1905, %v1909
    %v1911 = vxor.u32 %v1883, 2147483648
    %v1912 = vmul.f32 %v1911, 1.442695
    %v1913 = vpow.pop %v1912
    %v1914 = vadd.f32 %v1913, 1.0
    %v1915 = vrcp.pop %v1914
    %v1916 = vmul.f32 1.0, %v1915
    %v1917 = vxor.u32 %v1884, 2147483648
    %v1918 = vmul.f32 %v1917, 1.442695
    %v1919 = vpow.pop %v1918
    %v1920 = vadd.f32 %v1919, 1.0
    %v1921 = vrcp.pop %v1920
    %v1922 = vmul.f32 1.0, %v1921
    %v1923 = vtanh.pop %v1885
    %v1924 = vxor.u32 %v1886, 2147483648
    %v1925 = vmul.f32 %v1924, 1.442695
    %v1926 = vpow.pop %v1925
    %v1927 = vadd.f32 %v1926, 1.0
    %v1928 = vrcp.pop %v1927
    %v1929 = vmul.f32 1.0, %v1928
    %v1930 = vmul.f32 %v1922, %v1696
    %v1931 = vmul.f32 %v1916, %v1923
    %v1932 = vadd.f32 %v1930, %v1931
    %v1933 = vtanh.pop %v1932
    %v1934 = vmul.f32 %v1929, %v1933
    %s1935 = scalar_lea.vmem [#allocation6], 96
    %v1936 = vld [vmem:[%s1935] sm:$0xff]
    %v1937 = vld [vmem:[%s1935 + $0x8] sm:$0xff]
    %v1938 = vunpack.c.l.bf16 %v1936
    %v1939 = vunpack.c.h.bf16 %v1936
    %v1940 = vunpack.c.l.bf16 %v1937
    %v1941 = vunpack.c.h.bf16 %v1937
    %v1942 = vpack.c.bf16 %v1910, %v1910
    %1943 = vmatprep.subr.bf16.mxu0 %v304
    %1944 = vmatpush1.bf16.msra.mxu0 %v303
    %1945 = vmatprep.subr.bf16.mxu0 %v308
    %1946 = vmatpush1.bf16.msra.mxu0 %v307
    %1947 = vmatprep.subr.bf16.mxu0 %v312
    %1948 = vmatpush1.bf16.msra.mxu0 %v311
    %1949 = vmatprep.subr.bf16.mxu0 %v316
    %1950 = vmatpush1.bf16.msra.mxu0 %v315
    %1951 = vmatprep.subr.bf16.mxu0 %v320
    %1952 = vmatpush1.bf16.msra.mxu0 %v319
    %1953 = vmatprep.subr.bf16.mxu0 %v324
    %1954 = vmatpush1.bf16.msra.mxu0 %v323
    %1955 = vmatprep.subr.bf16.mxu0 %v328
    %1956 = vmatpush1.bf16.msra.mxu0 %v327
    %1957 = vmatprep.subr.bf16.mxu0 %v332
    %1958 = vmatpush1.bf16.msra.mxu0 %v331
    %1959 = vmatprep.subr.bf16.mxu0 0
    %1960 = vmatpush1.bf16.msra.mxu0 0
    %1961 = vmatprep.subr.bf16.mxu0 0
    %1962 = vmatpush1.bf16.msra.mxu0 0
    %1963 = vmatprep.subr.bf16.mxu0 0
    %1964 = vmatpush1.bf16.msra.mxu0 0
    %1965 = vmatprep.subr.bf16.mxu0 0
    %1966 = vmatpush1.bf16.msra.mxu0 0
    %1967 = vmatprep.subr.bf16.mxu0 0
    %1968 = vmatpush1.bf16.msra.mxu0 0
    %1969 = vmatprep.subr.bf16.mxu0 0
    %1970 = vmatpush1.bf16.msra.mxu0 0
    %1971 = vmatprep.subr.bf16.mxu0 0
    %1972 = vmatpush1.bf16.msra.mxu0 0
    %1973 = vmatprep.subr.bf16.mxu0 0
    %1974 = vmatpush1.bf16.msra.mxu0 0
    %1975 = vmatprep.mubr.bf16.mxu0 0
    %1976 = vmatmul.mubr.bf16.gmra.mrb[0].mxu0 %v1942
    %v1977 = vpop.f32.mrb[0].mxu0
    %v1978 = vadd.f32 0.0, %v1977
    %v1979 = vpop.f32.mrb[0].mxu0
    %v1980 = vadd.f32 0.0, %v1979
    %v1981 = vpop.f32.mrb[0].mxu0
    %v1982 = vpop.f32.mrb[0].mxu0
    %1983 = vdwg.mxu0
    %1984 = vmatprep.subr.bf16.mxu0 %v306
    %1985 = vmatpush1.bf16.msra.mxu0 %v305
    %1986 = vmatprep.subr.bf16.mxu0 %v310
    %1987 = vmatpush1.bf16.msra.mxu0 %v309
    %1988 = vmatprep.subr.bf16.mxu0 %v314
    %1989 = vmatpush1.bf16.msra.mxu0 %v313
    %1990 = vmatprep.subr.bf16.mxu0 %v318
    %1991 = vmatpush1.bf16.msra.mxu0 %v317
    %1992 = vmatprep.subr.bf16.mxu0 %v322
    %1993 = vmatpush1.bf16.msra.mxu0 %v321
    %1994 = vmatprep.subr.bf16.mxu0 %v326
    %1995 = vmatpush1.bf16.msra.mxu0 %v325
    %1996 = vmatprep.subr.bf16.mxu0 %v330
    %1997 = vmatpush1.bf16.msra.mxu0 %v329
    %1998 = vmatprep.subr.bf16.mxu0 %v334
    %1999 = vmatpush1.bf16.msra.mxu0 %v333
    %2000 = vmatprep.subr.bf16.mxu0 0
    %2001 = vmatpush1.bf16.msra.mxu0 0
    %2002 = vmatprep.subr.bf16.mxu0 0
    %2003 = vmatpush1.bf16.msra.mxu0 0
    %2004 = vmatprep.subr.bf16.mxu0 0
    %2005 = vmatpush1.bf16.msra.mxu0 0
    %2006 = vmatprep.subr.bf16.mxu0 0
    %2007 = vmatpush1.bf16.msra.mxu0 0
    %2008 = vmatprep.subr.bf16.mxu0 0
    %2009 = vmatpush1.bf16.msra.mxu0 0
    %2010 = vmatprep.subr.bf16.mxu0 0
    %2011 = vmatpush1.bf16.msra.mxu0 0
    %2012 = vmatprep.subr.bf16.mxu0 0
    %2013 = vmatpush1.bf16.msra.mxu0 0
    %2014 = vmatprep.subr.bf16.mxu0 0
    %2015 = vmatpush1.bf16.msra.mxu0 0
    %2016 = vmatprep.mubr.bf16.mxu0 0
    %2017 = vmatmul.mubr.bf16.gmra.mrb[0].mxu0 %v1942
    %v2018 = vpop.f32.mrb[0].mxu0
    %v2019 = vadd.f32 0.0, %v2018
    %v2020 = vpop.f32.mrb[0].mxu0
    %v2021 = vadd.f32 0.0, %v2020
    %v2022 = vpop.f32.mrb[0].mxu0
    %v2023 = vpop.f32.mrb[0].mxu0
    %2024 = vdwg.mxu0
    %v2025 = vadd.f32 %v1938, %v1978
    %v2026 = vadd.f32 %v1939, %v1980
    %v2027 = vadd.f32 %v1940, %v2019
    %v2028 = vadd.f32 %v1941, %v2021
    %s2029 = scalar_lea.vmem [#allocation7], 16
    %v2030 = vld [vmem:[%s2029] sm:$0xff]
    %v2031 = vld [vmem:[%s2029 + $0x8] sm:$0xff]
    %v2032 = vunpack.c.l.bf16 %v2030
    %v2033 = vunpack.c.h.bf16 %v2030
    %v2034 = vunpack.c.l.bf16 %v2031
    %v2035 = vunpack.c.h.bf16 %v2031
    %v2036 = vpack.c.bf16 %v1934, %v1934
    %2037 = vmatprep.subr.bf16.mxu0 %v558
    %2038 = vmatpush1.bf16.msra.mxu0 %v557
    %2039 = vmatprep.subr.bf16.mxu0 %v562
    %2040 = vmatpush1.bf16.msra.mxu0 %v561
    %2041 = vmatprep.subr.bf16.mxu0 %v566
    %2042 = vmatpush1.bf16.msra.mxu0 %v565
    %2043 = vmatprep.subr.bf16.mxu0 %v570
    %2044 = vmatpush1.bf16.msra.mxu0 %v569
    %2045 = vmatprep.subr.bf16.mxu0 %v574
    %2046 = vmatpush1.bf16.msra.mxu0 %v573
    %2047 = vmatprep.subr.bf16.mxu0 %v578
    %2048 = vmatpush1.bf16.msra.mxu0 %v577
    %2049 = vmatprep.subr.bf16.mxu0 %v582
    %2050 = vmatpush1.bf16.msra.mxu0 %v581
    %2051 = vmatprep.subr.bf16.mxu0 %v586
    %2052 = vmatpush1.bf16.msra.mxu0 %v585
    %2053 = vmatprep.subr.bf16.mxu0 0
    %2054 = vmatpush1.bf16.msra.mxu0 0
    %2055 = vmatprep.subr.bf16.mxu0 0
    %2056 = vmatpush1.bf16.msra.mxu0 0
    %2057 = vmatprep.subr.bf16.mxu0 0
    %2058 = vmatpush1.bf16.msra.mxu0 0
    %2059 = vmatprep.subr.bf16.mxu0 0
    %2060 = vmatpush1.bf16.msra.mxu0 0
    %2061 = vmatprep.subr.bf16.mxu0 0
    %2062 = vmatpush1.bf16.msra.mxu0 0
    %2063 = vmatprep.subr.bf16.mxu0 0
    %2064 = vmatpush1.bf16.msra.mxu0 0
    %2065 = vmatprep.subr.bf16.mxu0 0
    %2066 = vmatpush1.bf16.msra.mxu0 0
    %2067 = vmatprep.subr.bf16.mxu0 0
    %2068 = vmatpush1.bf16.msra.mxu0 0
    %2069 = vmatprep.mubr.bf16.mxu0 0
    %2070 = vmatmul.mubr.bf16.gmra.mrb[0].mxu0 %v2036
    %v2071 = vpop.f32.mrb[0].mxu0
    %v2072 = vadd.f32 0.0, %v2071
    %v2073 = vpop.f32.mrb[0].mxu0
    %v2074 = vadd.f32 0.0, %v2073
    %v2075 = vpop.f32.mrb[0].mxu0
    %v2076 = vpop.f32.mrb[0].mxu0
    %2077 = vdwg.mxu0
    %2078 = vmatprep.subr.bf16.mxu0 %v560
    %2079 = vmatpush1.bf16.msra.mxu0 %v559
    %2080 = vmatprep.subr.bf16.mxu0 %v564
    %2081 = vmatpush1.bf16.msra.mxu0 %v563
    %2082 = vmatprep.subr.bf16.mxu0 %v568
    %2083 = vmatpush1.bf16.msra.mxu0 %v567
    %2084 = vmatprep.subr.bf16.mxu0 %v572
    %2085 = vmatpush1.bf16.msra.mxu0 %v571
    %2086 = vmatprep.subr.bf16.mxu0 %v576
    %2087 = vmatpush1.bf16.msra.mxu0 %v575
    %2088 = vmatprep.subr.bf16.mxu0 %v580
    %2089 = vmatpush1.bf16.msra.mxu0 %v579
    %2090 = vmatprep.subr.bf16.mxu0 %v584
    %2091 = vmatpush1.bf16.msra.mxu0 %v583
    %2092 = vmatprep.subr.bf16.mxu0 %v588
    %2093 = vmatpush1.bf16.msra.mxu0 %v587
    %2094 = vmatprep.subr.bf16.mxu0 0
    %2095 = vmatpush1.bf16.msra.mxu0 0
    %2096 = vmatprep.subr.bf16.mxu0 0
    %2097 = vmatpush1.bf16.msra.mxu0 0
    %2098 = vmatprep.subr.bf16.mxu0 0
    %2099 = vmatpush1.bf16.msra.mxu0 0
    %2100 = vmatprep.subr.bf16.mxu0 0
    %2101 = vmatpush1.bf16.msra.mxu0 0
    %2102 = vmatprep.subr.bf16.mxu0 0
    %2103 = vmatpush1.bf16.msra.mxu0 0
    %2104 = vmatprep.subr.bf16.mxu0 0
    %2105 = vmatpush1.bf16.msra.mxu0 0
    %2106 = vmatprep.subr.bf16.mxu0 0
    %2107 = vmatpush1.bf16.msra.mxu0 0
    %2108 = vmatprep.subr.bf16.mxu0 0
    %2109 = vmatpush1.bf16.msra.mxu0 0
    %2110 = vmatprep.mubr.bf16.mxu0 0
    %2111 = vmatmul.mubr.bf16.gmra.mrb[0].mxu0 %v2036
    %v2112 = vpop.f32.mrb[0].mxu0
    %v2113 = vadd.f32 0.0, %v2112
    %v2114 = vpop.f32.mrb[0].mxu0
    %v2115 = vadd.f32 0.0, %v2114
    %v2116 = vpop.f32.mrb[0].mxu0
    %v2117 = vpop.f32.mrb[0].mxu0
    %2118 = vdwg.mxu0
    %v2119 = vadd.f32 %v2032, %v2072
    %v2120 = vadd.f32 %v2033, %v2074
    %v2121 = vadd.f32 %v2034, %v2113
    %v2122 = vadd.f32 %v2035, %v2115
    %v2123 = vxor.u32 %v2025, 2147483648
    %v2124 = vmul.f32 %v2123, 1.442695
    %v2125 = vpow.pop %v2124
    %v2126 = vadd.f32 %v2125, 1.0
    %v2127 = vrcp.pop %v2126
    %v2128 = vmul.f32 1.0, %v2127
    %v2129 = vxor.u32 %v2026, 2147483648
    %v2130 = vmul.f32 %v2129, 1.442695
    %v2131 = vpow.pop %v2130
    %v2132 = vadd.f32 %v2131, 1.0
    %v2133 = vrcp.pop %v2132
    %v2134 = vmul.f32 1.0, %v2133
    %v2135 = vtanh.pop %v2027
    %v2136 = vxor.u32 %v2028, 2147483648
    %v2137 = vmul.f32 %v2136, 1.442695
    %v2138 = vpow.pop %v2137
    %v2139 = vadd.f32 %v2138, 1.0
    %v2140 = vrcp.pop %v2139
    %v2141 = vmul.f32 1.0, %v2140
    %v2142 = vmul.f32 %v2134, %v1908
    %v2143 = vmul.f32 %v2128, %v2135
    %v2144 = vadd.f32 %v2142, %v2143
    %v2145 = vtanh.pop %v2144
    %v2146 = vmul.f32 %v2141, %v2145
    %v2147 = vxor.u32 %v2119, 2147483648
    %v2148 = vmul.f32 %v2147, 1.442695
    %v2149 = vpow.pop %v2148
    %v2150 = vadd.f32 %v2149, 1.0
    %v2151 = vrcp.pop %v2150
    %v2152 = vmul.f32 1.0, %v2151
    %v2153 = vxor.u32 %v2120, 2147483648
    %v2154 = vmul.f32 %v2153, 1.442695
    %v2155 = vpow.pop %v2154
    %v2156 = vadd.f32 %v2155, 1.0
    %v2157 = vrcp.pop %v2156
    %v2158 = vmul.f32 1.0, %v2157
    %v2159 = vtanh.pop %v2121
    %v2160 = vxor.u32 %v2122, 2147483648
    %v2161 = vmul.f32 %v2160, 1.442695
    %v2162 = vpow.pop %v2161
    %v2163 = vadd.f32 %v2162, 1.0
    %v2164 = vrcp.pop %v2163
    %v2165 = vmul.f32 1.0, %v2164
    %v2166 = vmul.f32 %v2158, %v1932
    %v2167 = vmul.f32 %v2152, %v2159
    %v2168 = vadd.f32 %v2166, %v2167
    %v2169 = vtanh.pop %v2168
    %v2170 = vmul.f32 %v2165, %v2169
    %s2171 = scalar_lea.vmem [#allocation6], 112
    %v2172 = vld [vmem:[%s2171] sm:$0xff]
    %v2173 = vld [vmem:[%s2171 + $0x8] sm:$0xff]
    %v2174 = vunpack.c.l.bf16 %v2172
    %v2175 = vunpack.c.h.bf16 %v2172
    %v2176 = vunpack.c.l.bf16 %v2173
    %v2177 = vunpack.c.h.bf16 %v2173
    %v2178 = vpack.c.bf16 %v2146, %v2146
    %2179 = vmatprep.subr.bf16.mxu0 %v304
    %2180 = vmatpush1.bf16.msra.mxu0 %v303
    %2181 = vmatprep.subr.bf16.mxu0 %v308
    %2182 = vmatpush1.bf16.msra.mxu0 %v307
    %2183 = vmatprep.subr.bf16.mxu0 %v312
    %2184 = vmatpush1.bf16.msra.mxu0 %v311
    %2185 = vmatprep.subr.bf16.mxu0 %v316
    %2186 = vmatpush1.bf16.msra.mxu0 %v315
    %2187 = vmatprep.subr.bf16.mxu0 %v320
    %2188 = vmatpush1.bf16.msra.mxu0 %v319
    %2189 = vmatprep.subr.bf16.mxu0 %v324
    %2190 = vmatpush1.bf16.msra.mxu0 %v323
    %2191 = vmatprep.subr.bf16.mxu0 %v328
    %2192 = vmatpush1.bf16.msra.mxu0 %v327
    %2193 = vmatprep.subr.bf16.mxu0 %v332
    %2194 = vmatpush1.bf16.msra.mxu0 %v331
    %2195 = vmatprep.subr.bf16.mxu0 0
    %2196 = vmatpush1.bf16.msra.mxu0 0
    %2197 = vmatprep.subr.bf16.mxu0 0
    %2198 = vmatpush1.bf16.msra.mxu0 0
    %2199 = vmatprep.subr.bf16.mxu0 0
    %2200 = vmatpush1.bf16.msra.mxu0 0
    %2201 = vmatprep.subr.bf16.mxu0 0
    %2202 = vmatpush1.bf16.msra.mxu0 0
    %2203 = vmatprep.subr.bf16.mxu0 0
    %2204 = vmatpush1.bf16.msra.mxu0 0
    %2205 = vmatprep.subr.bf16.mxu0 0
    %2206 = vmatpush1.bf16.msra.mxu0 0
    %2207 = vmatprep.subr.bf16.mxu0 0
    %2208 = vmatpush1.bf16.msra.mxu0 0
    %2209 = vmatprep.subr.bf16.mxu0 0
    %2210 = vmatpush1.bf16.msra.mxu0 0
    %2211 = vmatprep.mubr.bf16.mxu0 0
    %2212 = vmatmul.mubr.bf16.gmra.mrb[0].mxu0 %v2178
    %v2213 = vpop.f32.mrb[0].mxu0
    %v2214 = vadd.f32 0.0, %v2213
    %v2215 = vpop.f32.mrb[0].mxu0
    %v2216 = vadd.f32 0.0, %v2215
    %v2217 = vpop.f32.mrb[0].mxu0
    %v2218 = vpop.f32.mrb[0].mxu0
    %2219 = vdwg.mxu0
    %2220 = vmatprep.subr.bf16.mxu0 %v306
    %2221 = vmatpush1.bf16.msra.mxu0 %v305
    %2222 = vmatprep.subr.bf16.mxu0 %v310
    %2223 = vmatpush1.bf16.msra.mxu0 %v309
    %2224 = vmatprep.subr.bf16.mxu0 %v314
    %2225 = vmatpush1.bf16.msra.mxu0 %v313
    %2226 = vmatprep.subr.bf16.mxu0 %v318
    %2227 = vmatpush1.bf16.msra.mxu0 %v317
    %2228 = vmatprep.subr.bf16.mxu0 %v322
    %2229 = vmatpush1.bf16.msra.mxu0 %v321
    %2230 = vmatprep.subr.bf16.mxu0 %v326
    %2231 = vmatpush1.bf16.msra.mxu0 %v325
    %2232 = vmatprep.subr.bf16.mxu0 %v330
    %2233 = vmatpush1.bf16.msra.mxu0 %v329
    %2234 = vmatprep.subr.bf16.mxu0 %v334
    %2235 = vmatpush1.bf16.msra.mxu0 %v333
    %2236 = vmatprep.subr.bf16.mxu0 0
    %2237 = vmatpush1.bf16.msra.mxu0 0
    %2238 = vmatprep.subr.bf16.mxu0 0
    %2239 = vmatpush1.bf16.msra.mxu0 0
    %2240 = vmatprep.subr.bf16.mxu0 0
    %2241 = vmatpush1.bf16.msra.mxu0 0
    %2242 = vmatprep.subr.bf16.mxu0 0
    %2243 = vmatpush1.bf16.msra.mxu0 0
    %2244 = vmatprep.subr.bf16.mxu0 0
    %2245 = vmatpush1.bf16.msra.mxu0 0
    %2246 = vmatprep.subr.bf16.mxu0 0
    %2247 = vmatpush1.bf16.msra.mxu0 0
    %2248 = vmatprep.subr.bf16.mxu0 0
    %2249 = vmatpush1.bf16.msra.mxu0 0
    %2250 = vmatprep.subr.bf16.mxu0 0
    %2251 = vmatpush1.bf16.msra.mxu0 0
    %2252 = vmatprep.mubr.bf16.mxu0 0
    %2253 = vmatmul.mubr.bf16.gmra.mrb[0].mxu0 %v2178
    %v2254 = vpop.f32.mrb[0].mxu0
    %v2255 = vadd.f32 0.0, %v2254
    %v2256 = vpop.f32.mrb[0].mxu0
    %v2257 = vadd.f32 0.0, %v2256
    %v2258 = vpop.f32.mrb[0].mxu0
    %v2259 = vpop.f32.mrb[0].mxu0
    %2260 = vdwg.mxu0
    %v2261 = vadd.f32 %v2174, %v2214
    %v2262 = vadd.f32 %v2175, %v2216
    %v2263 = vadd.f32 %v2176, %v2255
    %v2264 = vadd.f32 %v2177, %v2257
    %v2265 = vld [vmem:[#allocation7] sm:$0xff]
    %v2266 = vld [vmem:[#allocation7 + $0x8] sm:$0xff]
    %v2267 = vunpack.c.l.bf16 %v2265
    %v2268 = vunpack.c.h.bf16 %v2265
    %v2269 = vunpack.c.l.bf16 %v2266
    %v2270 = vunpack.c.h.bf16 %v2266
    %v2271 = vpack.c.bf16 %v2170, %v2170
    %2272 = vmatprep.subr.bf16.mxu0 %v558
    %2273 = vmatpush1.bf16.msra.mxu0 %v557
    %2274 = vmatprep.subr.bf16.mxu0 %v562
    %2275 = vmatpush1.bf16.msra.mxu0 %v561
    %2276 = vmatprep.subr.bf16.mxu0 %v566
    %2277 = vmatpush1.bf16.msra.mxu0 %v565
    %2278 = vmatprep.subr.bf16.mxu0 %v570
    %2279 = vmatpush1.bf16.msra.mxu0 %v569
    %2280 = vmatprep.subr.bf16.mxu0 %v574
    %2281 = vmatpush1.bf16.msra.mxu0 %v573
    %2282 = vmatprep.subr.bf16.mxu0 %v578
    %2283 = vmatpush1.bf16.msra.mxu0 %v577
    %2284 = vmatprep.subr.bf16.mxu0 %v582
    %2285 = vmatpush1.bf16.msra.mxu0 %v581
    %2286 = vmatprep.subr.bf16.mxu0 %v586
    %2287 = vmatpush1.bf16.msra.mxu0 %v585
    %2288 = vmatprep.subr.bf16.mxu0 0
    %2289 = vmatpush1.bf16.msra.mxu0 0
    %2290 = vmatprep.subr.bf16.mxu0 0
    %2291 = vmatpush1.bf16.msra.mxu0 0
    %2292 = vmatprep.subr.bf16.mxu0 0
    %2293 = vmatpush1.bf16.msra.mxu0 0
    %2294 = vmatprep.subr.bf16.mxu0 0
    %2295 = vmatpush1.bf16.msra.mxu0 0
    %2296 = vmatprep.subr.bf16.mxu0 0
    %2297 = vmatpush1.bf16.msra.mxu0 0
    %2298 = vmatprep.subr.bf16.mxu0 0
    %2299 = vmatpush1.bf16.msra.mxu0 0
    %2300 = vmatprep.subr.bf16.mxu0 0
    %2301 = vmatpush1.bf16.msra.mxu0 0
    %2302 = vmatprep.subr.bf16.mxu0 0
    %2303 = vmatpush1.bf16.msra.mxu0 0
    %2304 = vmatprep.mubr.bf16.mxu0 0
    %2305 = vmatmul.mubr.bf16.gmra.mrb[0].mxu0 %v2271
    %v2306 = vpop.f32.mrb[0].mxu0
    %v2307 = vadd.f32 0.0, %v2306
    %v2308 = vpop.f32.mrb[0].mxu0
    %v2309 = vadd.f32 0.0, %v2308
    %v2310 = vpop.f32.mrb[0].mxu0
    %v2311 = vpop.f32.mrb[0].mxu0
    %2312 = vdwg.mxu0
    %2313 = vmatprep.subr.bf16.mxu0 %v560
    %2314 = vmatpush1.bf16.msra.mxu0 %v559
    %2315 = vmatprep.subr.bf16.mxu0 %v564
    %2316 = vmatpush1.bf16.msra.mxu0 %v563
    %2317 = vmatprep.subr.bf16.mxu0 %v568
    %2318 = vmatpush1.bf16.msra.mxu0 %v567
    %2319 = vmatprep.subr.bf16.mxu0 %v572
    %2320 = vmatpush1.bf16.msra.mxu0 %v571
    %2321 = vmatprep.subr.bf16.mxu0 %v576
    %2322 = vmatpush1.bf16.msra.mxu0 %v575
    %2323 = vmatprep.subr.bf16.mxu0 %v580
    %2324 = vmatpush1.bf16.msra.mxu0 %v579
    %2325 = vmatprep.subr.bf16.mxu0 %v584
    %2326 = vmatpush1.bf16.msra.mxu0 %v583
    %2327 = vmatprep.subr.bf16.mxu0 %v588
    %2328 = vmatpush1.bf16.msra.mxu0 %v587
    %2329 = vmatprep.subr.bf16.mxu0 0
    %2330 = vmatpush1.bf16.msra.mxu0 0
    %2331 = vmatprep.subr.bf16.mxu0 0
    %2332 = vmatpush1.bf16.msra.mxu0 0
    %2333 = vmatprep.subr.bf16.mxu0 0
    %2334 = vmatpush1.bf16.msra.mxu0 0
    %2335 = vmatprep.subr.bf16.mxu0 0
    %2336 = vmatpush1.bf16.msra.mxu0 0
    %2337 = vmatprep.subr.bf16.mxu0 0
    %2338 = vmatpush1.bf16.msra.mxu0 0
    %2339 = vmatprep.subr.bf16.mxu0 0
    %2340 = vmatpush1.bf16.msra.mxu0 0
    %2341 = vmatprep.subr.bf16.mxu0 0
    %2342 = vmatpush1.bf16.msra.mxu0 0
    %2343 = vmatprep.subr.bf16.mxu0 0
    %2344 = vmatpush1.bf16.msra.mxu0 0
    %2345 = vmatprep.mubr.bf16.mxu0 0
    %2346 = vmatmul.mubr.bf16.gmra.mrb[0].mxu0 %v2271
    %v2347 = vpop.f32.mrb[0].mxu0
    %v2348 = vadd.f32 0.0, %v2347
    %v2349 = vpop.f32.mrb[0].mxu0
    %v2350 = vadd.f32 0.0, %v2349
    %v2351 = vpop.f32.mrb[0].mxu0
    %v2352 = vpop.f32.mrb[0].mxu0
    %2353 = vdwg.mxu0
    %v2354 = vadd.f32 %v2267, %v2307
    %v2355 = vadd.f32 %v2268, %v2309
    %v2356 = vadd.f32 %v2269, %v2348
    %v2357 = vadd.f32 %v2270, %v2350
    %v2358 = vxor.u32 %v2261, 2147483648
    %v2359 = vmul.f32 %v2358, 1.442695
    %v2360 = vpow.pop %v2359
    %v2361 = vadd.f32 %v2360, 1.0
    %v2362 = vrcp.pop %v2361
    %v2363 = vmul.f32 1.0, %v2362
    %v2364 = vxor.u32 %v2262, 2147483648
    %v2365 = vmul.f32 %v2364, 1.442695
    %v2366 = vpow.pop %v2365
    %v2367 = vadd.f32 %v2366, 1.0
    %v2368 = vrcp.pop %v2367
    %v2369 = vmul.f32 1.0, %v2368
    %v2370 = vtanh.pop %v2263
    %v2371 = vxor.u32 %v2264, 2147483648
    %v2372 = vmul.f32 %v2371, 1.442695
    %v2373 = vpow.pop %v2372
    %v2374 = vadd.f32 %v2373, 1.0
    %v2375 = vrcp.pop %v2374
    %v2376 = vmul.f32 1.0, %v2375
    %v2377 = vmul.f32 %v2369, %v2144
    %v2378 = vmul.f32 %v2363, %v2370
    %v2379 = vadd.f32 %v2377, %v2378
    %v2380 = vtanh.pop %v2379
    %v2381 = vmul.f32 %v2376, %v2380
    %v2382 = vxor.u32 %v2354, 2147483648
    %v2383 = vmul.f32 %v2382, 1.442695
    %v2384 = vpow.pop %v2383
    %v2385 = vadd.f32 %v2384, 1.0
    %v2386 = vrcp.pop %v2385
    %v2387 = vmul.f32 1.0, %v2386
    %v2388 = vxor.u32 %v2355, 2147483648
    %v2389 = vmul.f32 %v2388, 1.442695
    %v2390 = vpow.pop %v2389
    %v2391 = vadd.f32 %v2390, 1.0
    %v2392 = vrcp.pop %v2391
    %v2393 = vmul.f32 1.0, %v2392
    %v2394 = vtanh.pop %v2356
    %v2395 = vxor.u32 %v2357, 2147483648
    %v2396 = vmul.f32 %v2395, 1.442695
    %v2397 = vpow.pop %v2396
    %v2398 = vadd.f32 %v2397, 1.0
    %v2399 = vrcp.pop %v2398
    %v2400 = vmul.f32 1.0, %v2399
    %v2401 = vmul.f32 %v2393, %v2168
    %v2402 = vmul.f32 %v2387, %v2394
    %v2403 = vadd.f32 %v2401, %v2402
    %v2404 = vtanh.pop %v2403
    %v2405 = vmul.f32 %v2400, %v2404
    %2406 = vst [vmem:[#allocation2] sm:$0xff] %v2381
    %2407 = vst [vmem:[#allocation3] sm:$0xff] %v2379
    %2408 = vst [vmem:[#allocation4] sm:$0xff] %v2405
    %2409 = vst [vmem:[#allocation5] sm:$0xff] %v2403
    // Predicated region
    $region68: #{bi_rnn_encode.3} parent=1 // pred_check
      %p2410 = pneg %p124
    $region69: #{bi_rnn_encode.3} parent=1 // pred_check_branch
      %2412 = sbr.rel (%p2410) target = $region71
    $region70: #{bi_rnn_encode.3} parent=1 // pred_region
      %2413 = vst [vmem:[%s4] sm:$0xff] %v2381
      %2414 = vst [vmem:[%s4 + $0x8] sm:$0xff] %v2405
    $region71: #{bi_rnn_encode.3} parent=1 // pred_fallthru
      _
    // Predicated region
    $region72: #{bi_rnn_encode.3} parent=1 // pred_check
      _
    $region73: #{bi_rnn_encode.3} parent=1 // pred_check_branch
      %2416 = sbr.rel (0) target = $region75
    $region74: #{bi_rnn_encode.3} parent=1 // pred_region
      _
    $region75: #{bi_rnn_encode.3} parent=1 // pred_fallthru
      _
    // Predicated region
    $region76: #{bi_rnn_encode.3} parent=1 // pred_check
      _
    $region77: #{bi_rnn_encode.3} parent=1 // pred_check_branch
      %2418 = sbr.rel (0) target = $region79
    $region78: #{bi_rnn_encode.3} parent=1 // pred_region
      _
    $region79: #{bi_rnn_encode.3} parent=1 // pred_fallthru
      _

</llo_original>
